<compile_context>
chip_gen: v5e
topology: v5e:2x2
jax: 0.10.0
libtpu: 0.0.40
codegen_flags: <defaults>
</compile_context>

<pallas_src>
import math

import jax
import jax.numpy as jnp
from jax.experimental import pallas as pl
from jax.experimental.pallas import tpu as pltpu

# MLP_head hidden sizes are hard-coded in the module.
L1, L2, L3, L4 = 1024, 512, 256, 128
EPS = 1e-5          # nn.BatchNorm1d default eps
NVEC = 12           # number of coalesced (gamma/beta/bias) rows


def build_fused_forward(batch, input_dim, emb_dim):
    """Returns a callable running encoder+head on a stacked (2*batch, F) input."""
    assert batch % 8 == 0, "batch must be a multiple of 8 (sublane-aligned BN split)"
    assert emb_dim <= L1, "emb_dim must be <= 1024 (vec slab width)"
    assert emb_dim % 8 == 0, "emb_dim must be a multiple of 8"

    two_b = 2 * batch
    wsw = max(L4, emb_dim)                       # small-weight slab width
    r4, r5 = 0, L3                               # static row offsets in the slab
    rh1, rh2 = L3 + L4, L3 + L4 + emb_dim
    small_rows = L3 + L4 + 2 * emb_dim

    def kernel(x_ref, w1_ref, w2_ref, w3_ref, wsm_ref, vec_ref, out_ref):

        def dot(h, w):
            # bf16 x bf16 on the MXU with f32 accumulation.
            return jnp.dot(h.astype(jnp.bfloat16), w,
                           preferred_element_type=jnp.float32)

        def bn_relu(y, g_row, b_row, width):
            # Per-slice (clean / corrupted) training-mode BatchNorm1d + ReLU,
            # with the affine folded into one scale/shift and single-pass var.
            y3 = y.reshape(2, batch, width)                      # tile-aligned split
            mu = jnp.mean(y3, axis=1, keepdims=True)             # (2,1,W)
            msq = jnp.mean(y3 * y3, axis=1, keepdims=True)       # (2,1,W)
            var = msq - mu * mu                                  # biased variance
            gamma = vec_ref[g_row:g_row + 1, :width]             # (1,W)
            beta = vec_ref[b_row:b_row + 1, :width]              # (1,W)
            scale = gamma * jax.lax.rsqrt(var + EPS)             # (2,1,W)
            shift = beta - mu * scale                            # (2,1,W)
            return jnp.maximum(y3 * scale + shift, 0.0).reshape(two_b, width)

        # ---- encoder: MLP_head(input_dim, emb, 1024, 512, 256, 128) ----
        # Biases of fc1..fc4 are omitted (cancelled exactly by BatchNorm).
        h = dot(x_ref[...], w1_ref[...])
        h = bn_relu(h, 0, 1, L1)
        h = dot(h, w2_ref[...])
        h = bn_relu(h, 2, 3, L2)
        h = dot(h, w3_ref[...])
        h = bn_relu(h, 4, 5, L3)
        h = dot(h, wsm_ref[r4:r4 + L3, :L4])                     # fc4
        h = bn_relu(h, 6, 7, L4)
        h = dot(h, wsm_ref[r5:r5 + L4, :emb_dim]) + vec_ref[8:9, :emb_dim]   # fc5

        # ---- pretraining head: Linear -> BN -> ReLU -> Linear ----
        h = dot(h, wsm_ref[rh1:rh1 + emb_dim, :emb_dim])         # bias cancelled by BN
        h = bn_relu(h, 9, 10, emb_dim)
        h = dot(h, wsm_ref[rh2:rh2 + emb_dim, :emb_dim]) + vec_ref[11:12, :emb_dim]

        out_ref[...] = h.astype(out_ref.dtype)

    # Explicit VMEM budget: inputs/outputs/weights + live-activation headroom,
    # clamped to stay within every generation's limits (v5e scoped 16 MiB
    # default, v7x 64 MiB physical).
    def nbytes(shape, dt):
        return math.prod(shape) * jnp.dtype(dt).itemsize

    est = (nbytes((two_b, input_dim), jnp.bfloat16)
           + nbytes((two_b, emb_dim), jnp.float32)
           + nbytes((input_dim, L1), jnp.bfloat16)
           + nbytes((L1, L2), jnp.bfloat16)
           + nbytes((L2, L3), jnp.bfloat16)
           + nbytes((small_rows, wsw), jnp.bfloat16)
           + nbytes((NVEC, L1), jnp.float32)
           + 3 * nbytes((two_b, L1), jnp.float32))
    vmem_limit = int(min(max(2 * est, 16 << 20), 56 << 20))

    vmem = pltpu.MemorySpace.VMEM
    return pl.pallas_call(
        kernel,
        out_shape=jax.ShapeDtypeStruct((two_b, emb_dim), jnp.float32),
        in_specs=[pl.BlockSpec(memory_space=vmem)] * 6,
        out_specs=pl.BlockSpec(memory_space=vmem),
        compiler_params=pltpu.CompilerParams(vmem_limit_bytes=vmem_limit),
    )


def init_params(key, input_dim, emb_dim):
    """Deterministic init mimicking PyTorch defaults.

    Linear: U(-1/sqrt(fan_in), 1/sqrt(fan_in)).  BatchNorm: gamma=1, beta=0.
    Weights are stored in bf16 (streamed to the MXU as-is); biases feeding a
    BatchNorm are omitted since they cannot affect the forward output.  The
    four small weights are coalesced into one slab; the per-feature vectors
    into another.
    """
    dims = [(input_dim, L1), (L1, L2), (L2, L3), (L3, L4), (L4, emb_dim),
            (emb_dim, emb_dim), (emb_dim, emb_dim)]
    keys = jax.random.split(key, len(dims))
    ws = []
    kept_biases = {}
    for i, ((din, dout), k) in enumerate(zip(dims, keys)):
        kw, kb = jax.random.split(k)
        bound = 1.0 / math.sqrt(din)
        w = jax.random.uniform(kw, (din, dout), jnp.float32, -bound, bound)
        ws.append(w.astype(jnp.bfloat16))
        if i in (4, 6):   # encoder fc5 and the head's final linear keep their bias
            kept_biases[i] = jax.random.uniform(kb, (dout,), jnp.float32,
                                                -bound, bound)

    # Coalesced small-weight slab (fc4, fc5, head-lin1, head-lin2) -> one DMA.
    wsw = max(L4, emb_dim)
    small_rows = L3 + L4 + 2 * emb_dim
    wsm = jnp.zeros((small_rows, wsw), jnp.bfloat16)
    wsm = wsm.at[0:L3, :L4].set(ws[3])
    wsm = wsm.at[L3:L3 + L4, :emb_dim].set(ws[4])
    wsm = wsm.at[L3 + L4:L3 + L4 + emb_dim, :emb_dim].set(ws[5])
    wsm = wsm.at[L3 + L4 + emb_dim:small_rows, :emb_dim].set(ws[6])

    # Coalesced per-feature vectors, padded to width L1 (=1024):
    #  rows 0/1: BN1 gamma/beta   rows 2/3: BN2   rows 4/5: BN3   rows 6/7: BN4
    #  row  8  : fc5 bias         rows 9/10: head-BN gamma/beta   row 11: head bias
    vec = jnp.zeros((NVEC, L1), jnp.float32)
    vec = vec.at[0, :L1].set(1.0)
    vec = vec.at[2, :L2].set(1.0)
    vec = vec.at[4, :L3].set(1.0)
    vec = vec.at[6, :L4].set(1.0)
    vec = vec.at[8, :emb_dim].set(kept_biases[4])
    vec = vec.at[9, :emb_dim].set(1.0)
    vec = vec.at[11, :emb_dim].set(kept_biases[6])

    return (ws[0], ws[1], ws[2], wsm, vec)


def scarf_forward(x, params, features_low, features_high, corruption_len,
                  key, fused_call):
    """SCARF_modified.forward: returns (embeddings, embeddings_corrupted)."""
    B, m = x.shape
    k_perm, k_rand = jax.random.split(key)

    # per-row random permutation -> first corruption_len indices form the mask
    # TODO(synk): uses jax.random instead of torch RNG; mask distribution
    # matches torch.randperm semantics but is not bit-identical.
    u = jax.random.uniform(k_perm, (B, m))
    ranks = jnp.argsort(jnp.argsort(u, axis=-1), axis=-1)
    corruption_mask = ranks < corruption_len

    # x_random ~ Uniform(features_low, features_high), per feature
    u2 = jax.random.uniform(k_rand, (B, m), jnp.float32)
    x_random = features_low[None, :] + u2 * (features_high - features_low)[None, :]
    x_corrupted = jnp.where(corruption_mask, x_random, x)

    # One fused pallas_call over the merged {clean, corrupted} batch (2B, m),
    # streamed to the kernel as bf16.
    x_both = jnp.concatenate([x, x_corrupted], axis=0).astype(jnp.bfloat16)
    out = fused_call(x_both, *params)                    # (2B, emb_dim) f32
    return out[:B], out[B:]


if __name__ == "__main__":
    key = jax.random.PRNGKey(0)
    k_x, k_p, k_c = jax.random.split(key, 3)

    B, input_dim, emb_dim = 8, 64, 128
    corruption_rate = 0.6
    corruption_len = int(corruption_rate * input_dim)    # = 38

    x = jax.random.normal(k_x, (B, input_dim), jnp.float32)
    features_low = -1.0 * jnp.ones((input_dim,), jnp.float32)
    features_high = 2.0 * jnp.ones((input_dim,), jnp.float32)

    params = init_params(k_p, input_dim, emb_dim)
    fused_call = build_fused_forward(B, input_dim, emb_dim)

    emb, emb_c = scarf_forward(x, params, features_low, features_high,
                               corruption_len, k_c, fused_call)
    jax.block_until_ready((emb, emb_c))

    assert emb.shape == (B, emb_dim) and emb_c.shape == (B, emb_dim)
    assert bool(jnp.all(jnp.isfinite(emb))) and bool(jnp.all(jnp.isfinite(emb_c)))
    print("KERNEL_OK")
</pallas_src>

<mosaic_0001>
module attributes {stable_mosaic.version = 11 : i64} {
  func.func @kernel(%arg0: memref<16x64xbf16, #tpu.memory_space<vmem>>, %arg1: memref<64x1024xbf16, #tpu.memory_space<vmem>>, %arg2: memref<1024x512xbf16, #tpu.memory_space<vmem>>, %arg3: memref<512x256xbf16, #tpu.memory_space<vmem>>, %arg4: memref<640x128xbf16, #tpu.memory_space<vmem>>, %arg5: memref<12x1024xf32, #tpu.memory_space<vmem>>, %arg6: memref<16x128xf32, #tpu.memory_space<vmem>>) attributes {dimension_semantics = [], scalar_prefetch = 0 : i64, scratch_operands = 0 : i64, tpu.core_type = #tpu.core_type<tc>} {
    %c0 = arith.constant 0 : index
    %c0_0 = arith.constant 0 : index
    %0 = vector.load %arg0[%c0, %c0_0] : memref<16x64xbf16, #tpu.memory_space<vmem>>, vector<16x64xbf16>
    %c0_1 = arith.constant 0 : index
    %c0_2 = arith.constant 0 : index
    %1 = vector.load %arg1[%c0_1, %c0_2] : memref<64x1024xbf16, #tpu.memory_space<vmem>>, vector<64x1024xbf16>
    %cst = arith.constant dense<0.000000e+00> : vector<16x1024xf32>
    %2 = tpu.matmul %0, %1, %cst {dimension_numbers = #tpu.dot_dimension_numbers<[1], [0], [0], [1], [0, 0, 1, 1], [], []>} : vector<16x64xbf16>, vector<64x1024xbf16>, vector<16x1024xf32> -> vector<16x1024xf32>
    %3 = vector.shape_cast %2 : vector<16x1024xf32> to vector<2x8x1024xf32>
    %cst_3 = arith.constant dense<0.000000e+00> : vector<2x1024xf32>
    %4 = vector.multi_reduction <add>, %3, %cst_3 [1] : vector<2x8x1024xf32> to vector<2x1024xf32>
    %5 = vector.shape_cast %4 : vector<2x1024xf32> to vector<2x1x1024xf32>
    %cst_4 = arith.constant 8.000000e+00 : f32
    %6 = vector.broadcast %cst_4 : f32 to vector<2x1x1024xf32>
    %7 = arith.divf %5, %6 : vector<2x1x1024xf32>
    %8 = arith.mulf %3, %3 : vector<2x8x1024xf32>
    %cst_5 = arith.constant dense<0.000000e+00> : vector<2x1024xf32>
    %9 = vector.multi_reduction <add>, %8, %cst_5 [1] : vector<2x8x1024xf32> to vector<2x1024xf32>
    %10 = vector.shape_cast %9 : vector<2x1024xf32> to vector<2x1x1024xf32>
    %cst_6 = arith.constant 8.000000e+00 : f32
    %11 = vector.broadcast %cst_6 : f32 to vector<2x1x1024xf32>
    %12 = arith.divf %10, %11 : vector<2x1x1024xf32>
    %13 = arith.mulf %7, %7 : vector<2x1x1024xf32>
    %14 = arith.subf %12, %13 : vector<2x1x1024xf32>
    %c0_7 = arith.constant 0 : index
    %c0_8 = arith.constant 0 : index
    %15 = vector.load %arg5[%c0_7, %c0_8] : memref<12x1024xf32, #tpu.memory_space<vmem>>, vector<1x1024xf32>
    %c1 = arith.constant 1 : index
    %c0_9 = arith.constant 0 : index
    %16 = vector.load %arg5[%c1, %c0_9] : memref<12x1024xf32, #tpu.memory_space<vmem>>, vector<1x1024xf32>
    %cst_10 = arith.constant 9.99999974E-6 : f32
    %17 = vector.broadcast %cst_10 : f32 to vector<2x1x1024xf32>
    %18 = arith.addf %14, %17 : vector<2x1x1024xf32>
    %19 = math.rsqrt %18 : vector<2x1x1024xf32>
    %20 = vector.shape_cast %15 : vector<1x1024xf32> to vector<1x1x1024xf32>
    %21 = vector.broadcast %20 : vector<1x1x1024xf32> to vector<2x1x1024xf32>
    %22 = arith.mulf %21, %19 : vector<2x1x1024xf32>
    %23 = arith.mulf %7, %22 : vector<2x1x1024xf32>
    %24 = vector.shape_cast %16 : vector<1x1024xf32> to vector<1x1x1024xf32>
    %25 = vector.broadcast %24 : vector<1x1x1024xf32> to vector<2x1x1024xf32>
    %26 = arith.subf %25, %23 : vector<2x1x1024xf32>
    %27 = vector.broadcast %22 : vector<2x1x1024xf32> to vector<2x8x1024xf32>
    %28 = arith.mulf %3, %27 : vector<2x8x1024xf32>
    %29 = vector.broadcast %26 : vector<2x1x1024xf32> to vector<2x8x1024xf32>
    %30 = arith.addf %28, %29 : vector<2x8x1024xf32>
    %cst_11 = arith.constant 0.000000e+00 : f32
    %31 = vector.broadcast %cst_11 : f32 to vector<2x8x1024xf32>
    %32 = arith.maximumf %30, %31 : vector<2x8x1024xf32>
    %33 = vector.shape_cast %32 : vector<2x8x1024xf32> to vector<16x1024xf32>
    %c0_12 = arith.constant 0 : index
    %c0_13 = arith.constant 0 : index
    %34 = vector.load %arg2[%c0_12, %c0_13] : memref<1024x512xbf16, #tpu.memory_space<vmem>>, vector<1024x512xbf16>
    %35 = arith.truncf %33 : vector<16x1024xf32> to vector<16x1024xbf16>
    %cst_14 = arith.constant dense<0.000000e+00> : vector<16x512xf32>
    %36 = tpu.matmul %35, %34, %cst_14 {dimension_numbers = #tpu.dot_dimension_numbers<[1], [0], [0], [1], [0, 0, 1, 1], [], []>} : vector<16x1024xbf16>, vector<1024x512xbf16>, vector<16x512xf32> -> vector<16x512xf32>
    %37 = vector.shape_cast %36 : vector<16x512xf32> to vector<2x8x512xf32>
    %cst_15 = arith.constant dense<0.000000e+00> : vector<2x512xf32>
    %38 = vector.multi_reduction <add>, %37, %cst_15 [1] : vector<2x8x512xf32> to vector<2x512xf32>
    %39 = vector.shape_cast %38 : vector<2x512xf32> to vector<2x1x512xf32>
    %cst_16 = arith.constant 8.000000e+00 : f32
    %40 = vector.broadcast %cst_16 : f32 to vector<2x1x512xf32>
    %41 = arith.divf %39, %40 : vector<2x1x512xf32>
    %42 = arith.mulf %37, %37 : vector<2x8x512xf32>
    %cst_17 = arith.constant dense<0.000000e+00> : vector<2x512xf32>
    %43 = vector.multi_reduction <add>, %42, %cst_17 [1] : vector<2x8x512xf32> to vector<2x512xf32>
    %44 = vector.shape_cast %43 : vector<2x512xf32> to vector<2x1x512xf32>
    %cst_18 = arith.constant 8.000000e+00 : f32
    %45 = vector.broadcast %cst_18 : f32 to vector<2x1x512xf32>
    %46 = arith.divf %44, %45 : vector<2x1x512xf32>
    %47 = arith.mulf %41, %41 : vector<2x1x512xf32>
    %48 = arith.subf %46, %47 : vector<2x1x512xf32>
    %c2 = arith.constant 2 : index
    %c0_19 = arith.constant 0 : index
    %49 = vector.load %arg5[%c2, %c0_19] : memref<12x1024xf32, #tpu.memory_space<vmem>>, vector<1x512xf32>
    %c3 = arith.constant 3 : index
    %c0_20 = arith.constant 0 : index
    %50 = vector.load %arg5[%c3, %c0_20] : memref<12x1024xf32, #tpu.memory_space<vmem>>, vector<1x512xf32>
    %cst_21 = arith.constant 9.99999974E-6 : f32
    %51 = vector.broadcast %cst_21 : f32 to vector<2x1x512xf32>
    %52 = arith.addf %48, %51 : vector<2x1x512xf32>
    %53 = math.rsqrt %52 : vector<2x1x512xf32>
    %54 = vector.shape_cast %49 : vector<1x512xf32> to vector<1x1x512xf32>
    %55 = vector.broadcast %54 : vector<1x1x512xf32> to vector<2x1x512xf32>
    %56 = arith.mulf %55, %53 : vector<2x1x512xf32>
    %57 = arith.mulf %41, %56 : vector<2x1x512xf32>
    %58 = vector.shape_cast %50 : vector<1x512xf32> to vector<1x1x512xf32>
    %59 = vector.broadcast %58 : vector<1x1x512xf32> to vector<2x1x512xf32>
    %60 = arith.subf %59, %57 : vector<2x1x512xf32>
    %61 = vector.broadcast %56 : vector<2x1x512xf32> to vector<2x8x512xf32>
    %62 = arith.mulf %37, %61 : vector<2x8x512xf32>
    %63 = vector.broadcast %60 : vector<2x1x512xf32> to vector<2x8x512xf32>
    %64 = arith.addf %62, %63 : vector<2x8x512xf32>
    %cst_22 = arith.constant 0.000000e+00 : f32
    %65 = vector.broadcast %cst_22 : f32 to vector<2x8x512xf32>
    %66 = arith.maximumf %64, %65 : vector<2x8x512xf32>
    %67 = vector.shape_cast %66 : vector<2x8x512xf32> to vector<16x512xf32>
    %c0_23 = arith.constant 0 : index
    %c0_24 = arith.constant 0 : index
    %68 = vector.load %arg3[%c0_23, %c0_24] : memref<512x256xbf16, #tpu.memory_space<vmem>>, vector<512x256xbf16>
    %69 = arith.truncf %67 : vector<16x512xf32> to vector<16x512xbf16>
    %cst_25 = arith.constant dense<0.000000e+00> : vector<16x256xf32>
    %70 = tpu.matmul %69, %68, %cst_25 {dimension_numbers = #tpu.dot_dimension_numbers<[1], [0], [0], [1], [0, 0, 1, 1], [], []>} : vector<16x512xbf16>, vector<512x256xbf16>, vector<16x256xf32> -> vector<16x256xf32>
    %71 = vector.shape_cast %70 : vector<16x256xf32> to vector<2x8x256xf32>
    %cst_26 = arith.constant dense<0.000000e+00> : vector<2x256xf32>
    %72 = vector.multi_reduction <add>, %71, %cst_26 [1] : vector<2x8x256xf32> to vector<2x256xf32>
    %73 = vector.shape_cast %72 : vector<2x256xf32> to vector<2x1x256xf32>
    %cst_27 = arith.constant 8.000000e+00 : f32
    %74 = vector.broadcast %cst_27 : f32 to vector<2x1x256xf32>
    %75 = arith.divf %73, %74 : vector<2x1x256xf32>
    %76 = arith.mulf %71, %71 : vector<2x8x256xf32>
    %cst_28 = arith.constant dense<0.000000e+00> : vector<2x256xf32>
    %77 = vector.multi_reduction <add>, %76, %cst_28 [1] : vector<2x8x256xf32> to vector<2x256xf32>
    %78 = vector.shape_cast %77 : vector<2x256xf32> to vector<2x1x256xf32>
    %cst_29 = arith.constant 8.000000e+00 : f32
    %79 = vector.broadcast %cst_29 : f32 to vector<2x1x256xf32>
    %80 = arith.divf %78, %79 : vector<2x1x256xf32>
    %81 = arith.mulf %75, %75 : vector<2x1x256xf32>
    %82 = arith.subf %80, %81 : vector<2x1x256xf32>
    %c4 = arith.constant 4 : index
    %c0_30 = arith.constant 0 : index
    %83 = vector.load %arg5[%c4, %c0_30] : memref<12x1024xf32, #tpu.memory_space<vmem>>, vector<1x256xf32>
    %c5 = arith.constant 5 : index
    %c0_31 = arith.constant 0 : index
    %84 = vector.load %arg5[%c5, %c0_31] : memref<12x1024xf32, #tpu.memory_space<vmem>>, vector<1x256xf32>
    %cst_32 = arith.constant 9.99999974E-6 : f32
    %85 = vector.broadcast %cst_32 : f32 to vector<2x1x256xf32>
    %86 = arith.addf %82, %85 : vector<2x1x256xf32>
    %87 = math.rsqrt %86 : vector<2x1x256xf32>
    %88 = vector.shape_cast %83 : vector<1x256xf32> to vector<1x1x256xf32>
    %89 = vector.broadcast %88 : vector<1x1x256xf32> to vector<2x1x256xf32>
    %90 = arith.mulf %89, %87 : vector<2x1x256xf32>
    %91 = arith.mulf %75, %90 : vector<2x1x256xf32>
    %92 = vector.shape_cast %84 : vector<1x256xf32> to vector<1x1x256xf32>
    %93 = vector.broadcast %92 : vector<1x1x256xf32> to vector<2x1x256xf32>
    %94 = arith.subf %93, %91 : vector<2x1x256xf32>
    %95 = vector.broadcast %90 : vector<2x1x256xf32> to vector<2x8x256xf32>
    %96 = arith.mulf %71, %95 : vector<2x8x256xf32>
    %97 = vector.broadcast %94 : vector<2x1x256xf32> to vector<2x8x256xf32>
    %98 = arith.addf %96, %97 : vector<2x8x256xf32>
    %cst_33 = arith.constant 0.000000e+00 : f32
    %99 = vector.broadcast %cst_33 : f32 to vector<2x8x256xf32>
    %100 = arith.maximumf %98, %99 : vector<2x8x256xf32>
    %101 = vector.shape_cast %100 : vector<2x8x256xf32> to vector<16x256xf32>
    %c0_34 = arith.constant 0 : index
    %c0_35 = arith.constant 0 : index
    %102 = vector.load %arg4[%c0_34, %c0_35] : memref<640x128xbf16, #tpu.memory_space<vmem>>, vector<256x128xbf16>
    %103 = arith.truncf %101 : vector<16x256xf32> to vector<16x256xbf16>
    %cst_36 = arith.constant dense<0.000000e+00> : vector<16x128xf32>
    %104 = tpu.matmul %103, %102, %cst_36 {dimension_numbers = #tpu.dot_dimension_numbers<[1], [0], [0], [1], [0, 0, 1, 1], [], []>} : vector<16x256xbf16>, vector<256x128xbf16>, vector<16x128xf32> -> vector<16x128xf32>
    %105 = vector.shape_cast %104 : vector<16x128xf32> to vector<2x8x128xf32>
    %cst_37 = arith.constant dense<0.000000e+00> : vector<2x128xf32>
    %106 = vector.multi_reduction <add>, %105, %cst_37 [1] : vector<2x8x128xf32> to vector<2x128xf32>
    %107 = vector.shape_cast %106 : vector<2x128xf32> to vector<2x1x128xf32>
    %cst_38 = arith.constant 8.000000e+00 : f32
    %108 = vector.broadcast %cst_38 : f32 to vector<2x1x128xf32>
    %109 = arith.divf %107, %108 : vector<2x1x128xf32>
    %110 = arith.mulf %105, %105 : vector<2x8x128xf32>
    %cst_39 = arith.constant dense<0.000000e+00> : vector<2x128xf32>
    %111 = vector.multi_reduction <add>, %110, %cst_39 [1] : vector<2x8x128xf32> to vector<2x128xf32>
    %112 = vector.shape_cast %111 : vector<2x128xf32> to vector<2x1x128xf32>
    %cst_40 = arith.constant 8.000000e+00 : f32
    %113 = vector.broadcast %cst_40 : f32 to vector<2x1x128xf32>
    %114 = arith.divf %112, %113 : vector<2x1x128xf32>
    %115 = arith.mulf %109, %109 : vector<2x1x128xf32>
    %116 = arith.subf %114, %115 : vector<2x1x128xf32>
    %c6 = arith.constant 6 : index
    %c0_41 = arith.constant 0 : index
    %117 = vector.load %arg5[%c6, %c0_41] : memref<12x1024xf32, #tpu.memory_space<vmem>>, vector<1x128xf32>
    %c7 = arith.constant 7 : index
    %c0_42 = arith.constant 0 : index
    %118 = vector.load %arg5[%c7, %c0_42] : memref<12x1024xf32, #tpu.memory_space<vmem>>, vector<1x128xf32>
    %cst_43 = arith.constant 9.99999974E-6 : f32
    %119 = vector.broadcast %cst_43 : f32 to vector<2x1x128xf32>
    %120 = arith.addf %116, %119 : vector<2x1x128xf32>
    %121 = math.rsqrt %120 : vector<2x1x128xf32>
    %122 = vector.shape_cast %117 : vector<1x128xf32> to vector<1x1x128xf32>
    %123 = vector.broadcast %122 : vector<1x1x128xf32> to vector<2x1x128xf32>
    %124 = arith.mulf %123, %121 : vector<2x1x128xf32>
    %125 = arith.mulf %109, %124 : vector<2x1x128xf32>
    %126 = vector.shape_cast %118 : vector<1x128xf32> to vector<1x1x128xf32>
    %127 = vector.broadcast %126 : vector<1x1x128xf32> to vector<2x1x128xf32>
    %128 = arith.subf %127, %125 : vector<2x1x128xf32>
    %129 = vector.broadcast %124 : vector<2x1x128xf32> to vector<2x8x128xf32>
    %130 = arith.mulf %105, %129 : vector<2x8x128xf32>
    %131 = vector.broadcast %128 : vector<2x1x128xf32> to vector<2x8x128xf32>
    %132 = arith.addf %130, %131 : vector<2x8x128xf32>
    %cst_44 = arith.constant 0.000000e+00 : f32
    %133 = vector.broadcast %cst_44 : f32 to vector<2x8x128xf32>
    %134 = arith.maximumf %132, %133 : vector<2x8x128xf32>
    %135 = vector.shape_cast %134 : vector<2x8x128xf32> to vector<16x128xf32>
    %c256 = arith.constant 256 : index
    %c0_45 = arith.constant 0 : index
    %136 = vector.load %arg4[%c256, %c0_45] : memref<640x128xbf16, #tpu.memory_space<vmem>>, vector<128x128xbf16>
    %137 = arith.truncf %135 : vector<16x128xf32> to vector<16x128xbf16>
    %cst_46 = arith.constant dense<0.000000e+00> : vector<16x128xf32>
    %138 = tpu.matmul %137, %136, %cst_46 {dimension_numbers = #tpu.dot_dimension_numbers<[1], [0], [0], [1], [0, 0, 1, 1], [], []>} : vector<16x128xbf16>, vector<128x128xbf16>, vector<16x128xf32> -> vector<16x128xf32>
    %c8 = arith.constant 8 : index
    %c0_47 = arith.constant 0 : index
    %139 = vector.load %arg5[%c8, %c0_47] : memref<12x1024xf32, #tpu.memory_space<vmem>>, vector<1x128xf32>
    %140 = vector.broadcast %139 : vector<1x128xf32> to vector<16x128xf32>
    %141 = arith.addf %138, %140 : vector<16x128xf32>
    %c384 = arith.constant 384 : index
    %c0_48 = arith.constant 0 : index
    %142 = vector.load %arg4[%c384, %c0_48] : memref<640x128xbf16, #tpu.memory_space<vmem>>, vector<128x128xbf16>
    %143 = arith.truncf %141 : vector<16x128xf32> to vector<16x128xbf16>
    %cst_49 = arith.constant dense<0.000000e+00> : vector<16x128xf32>
    %144 = tpu.matmul %143, %142, %cst_49 {dimension_numbers = #tpu.dot_dimension_numbers<[1], [0], [0], [1], [0, 0, 1, 1], [], []>} : vector<16x128xbf16>, vector<128x128xbf16>, vector<16x128xf32> -> vector<16x128xf32>
    %145 = vector.shape_cast %144 : vector<16x128xf32> to vector<2x8x128xf32>
    %cst_50 = arith.constant dense<0.000000e+00> : vector<2x128xf32>
    %146 = vector.multi_reduction <add>, %145, %cst_50 [1] : vector<2x8x128xf32> to vector<2x128xf32>
    %147 = vector.shape_cast %146 : vector<2x128xf32> to vector<2x1x128xf32>
    %cst_51 = arith.constant 8.000000e+00 : f32
    %148 = vector.broadcast %cst_51 : f32 to vector<2x1x128xf32>
    %149 = arith.divf %147, %148 : vector<2x1x128xf32>
    %150 = arith.mulf %145, %145 : vector<2x8x128xf32>
    %cst_52 = arith.constant dense<0.000000e+00> : vector<2x128xf32>
    %151 = vector.multi_reduction <add>, %150, %cst_52 [1] : vector<2x8x128xf32> to vector<2x128xf32>
    %152 = vector.shape_cast %151 : vector<2x128xf32> to vector<2x1x128xf32>
    %cst_53 = arith.constant 8.000000e+00 : f32
    %153 = vector.broadcast %cst_53 : f32 to vector<2x1x128xf32>
    %154 = arith.divf %152, %153 : vector<2x1x128xf32>
    %155 = arith.mulf %149, %149 : vector<2x1x128xf32>
    %156 = arith.subf %154, %155 : vector<2x1x128xf32>
    %c9 = arith.constant 9 : index
    %c0_54 = arith.constant 0 : index
    %157 = vector.load %arg5[%c9, %c0_54] : memref<12x1024xf32, #tpu.memory_space<vmem>>, vector<1x128xf32>
    %c10 = arith.constant 10 : index
    %c0_55 = arith.constant 0 : index
    %158 = vector.load %arg5[%c10, %c0_55] : memref<12x1024xf32, #tpu.memory_space<vmem>>, vector<1x128xf32>
    %cst_56 = arith.constant 9.99999974E-6 : f32
    %159 = vector.broadcast %cst_56 : f32 to vector<2x1x128xf32>
    %160 = arith.addf %156, %159 : vector<2x1x128xf32>
    %161 = math.rsqrt %160 : vector<2x1x128xf32>
    %162 = vector.shape_cast %157 : vector<1x128xf32> to vector<1x1x128xf32>
    %163 = vector.broadcast %162 : vector<1x1x128xf32> to vector<2x1x128xf32>
    %164 = arith.mulf %163, %161 : vector<2x1x128xf32>
    %165 = arith.mulf %149, %164 : vector<2x1x128xf32>
    %166 = vector.shape_cast %158 : vector<1x128xf32> to vector<1x1x128xf32>
    %167 = vector.broadcast %166 : vector<1x1x128xf32> to vector<2x1x128xf32>
    %168 = arith.subf %167, %165 : vector<2x1x128xf32>
    %169 = vector.broadcast %164 : vector<2x1x128xf32> to vector<2x8x128xf32>
    %170 = arith.mulf %145, %169 : vector<2x8x128xf32>
    %171 = vector.broadcast %168 : vector<2x1x128xf32> to vector<2x8x128xf32>
    %172 = arith.addf %170, %171 : vector<2x8x128xf32>
    %cst_57 = arith.constant 0.000000e+00 : f32
    %173 = vector.broadcast %cst_57 : f32 to vector<2x8x128xf32>
    %174 = arith.maximumf %172, %173 : vector<2x8x128xf32>
    %175 = vector.shape_cast %174 : vector<2x8x128xf32> to vector<16x128xf32>
    %c512 = arith.constant 512 : index
    %c0_58 = arith.constant 0 : index
    %176 = vector.load %arg4[%c512, %c0_58] : memref<640x128xbf16, #tpu.memory_space<vmem>>, vector<128x128xbf16>
    %177 = arith.truncf %175 : vector<16x128xf32> to vector<16x128xbf16>
    %cst_59 = arith.constant dense<0.000000e+00> : vector<16x128xf32>
    %178 = tpu.matmul %177, %176, %cst_59 {dimension_numbers = #tpu.dot_dimension_numbers<[1], [0], [0], [1], [0, 0, 1, 1], [], []>} : vector<16x128xbf16>, vector<128x128xbf16>, vector<16x128xf32> -> vector<16x128xf32>
    %c11 = arith.constant 11 : index
    %c0_60 = arith.constant 0 : index
    %179 = vector.load %arg5[%c11, %c0_60] : memref<12x1024xf32, #tpu.memory_space<vmem>>, vector<1x128xf32>
    %180 = vector.broadcast %179 : vector<1x128xf32> to vector<16x128xf32>
    %181 = arith.addf %178, %180 : vector<16x128xf32>
    %c0_61 = arith.constant 0 : index
    %c0_62 = arith.constant 0 : index
    %182 = vector.load %arg6[%c0_61, %c0_62] : memref<16x128xf32, #tpu.memory_space<vmem>>, vector<16x128xf32>
    tpu.vector_store %arg6[%c0_61, %c0_62], %181 {strides = array<i32>} : memref<16x128xf32, #tpu.memory_space<vmem>>, vector<16x128xf32>,
    return
  }
}

</mosaic_0001>

<llo_original>
// kernel: tpu_custom_call.1
$region0: #{tpu_custom_call.1}
  #allocation0 [shape = 'u32[]', space=smem, size = 0x4, offset = 0x4, fixed_abs, tag = 'smem constant byte address 0x4 - core index']
  #allocation1 [shape = 'u32[72,128]{1,0:T(1,128)}', space=vmem, size = 0x9000, scoped, tag = 'internal scratch']
  %s0 = inlined_call_operand.hbm [shape: bf16[16,64], index: 0, kind: input, shape index: {}]
  %s1 = inlined_call_operand.hbm [shape: bf16[64,1024], index: 1, kind: input, shape index: {}]
  %s2 = inlined_call_operand.hbm [shape: bf16[1024,512], index: 2, kind: input, shape index: {}]
  %s3 = inlined_call_operand.hbm [shape: bf16[512,256], index: 3, kind: input, shape index: {}]
  %s4 = inlined_call_operand.hbm [shape: bf16[640,128], index: 4, kind: input, shape index: {}]
  %s5 = inlined_call_operand.hbm [shape: f32[12,1024], index: 5, kind: input, shape index: {}]
  %s6 = inlined_call_operand.hbm [shape: f32[16,128], index: 6, kind: output, shape index: {}]
  %s7 = sld [smem:[#allocation0]]
  $region58: #{tpu_custom_call.1} parent=0
    _
  %s9 = ssub.s32 1, %s7
  %s10 = scalar_select 0, %s9, %s7
  $region1: #{tpu_custom_call.1} parent=0
    #allocation2 [shape = 'u8[4096]{0}', space=vmem, size = 0x1000, scoped, tag = 'input window, operand 0, single buffered']
    #allocation3 [shape = 's32[1]{0}', space=sflag, size = 0x4, scoped, tag = 'scoped memory for tpu_custom_call.1']
    #allocation4 [shape = 's32[1]{0}', space=sflag, size = 0x4, scoped, tag = 'scoped memory for tpu_custom_call.1']
    #allocation5 [shape = 'u8[131072]{0}', space=vmem, size = 0x20000, scoped, tag = 'input window, operand 1, single buffered']
    #allocation6 [shape = 's32[1]{0}', space=sflag, size = 0x4, scoped, tag = 'scoped memory for tpu_custom_call.1']
    #allocation7 [shape = 'u8[1048576]{0}', space=vmem, size = 0x100000, scoped, tag = 'input window, operand 2, single buffered']
    #allocation8 [shape = 'u8[262144]{0}', space=vmem, size = 0x40000, scoped, tag = 'input window, operand 3, single buffered']
    #allocation9 [shape = 's32[1]{0}', space=sflag, size = 0x4, scoped, tag = 'scoped memory for tpu_custom_call.1']
    #allocation10 [shape = 'u8[163840]{0}', space=vmem, size = 0x28000, scoped, tag = 'input window, operand 4, single buffered']
    #allocation11 [shape = 'u8[65536]{0}', space=vmem, size = 0x10000, scoped, tag = 'input window, operand 5, single buffered']
    #allocation12 [shape = 's32[1]{0}', space=sflag, size = 0x4, scoped, tag = 'scoped memory for tpu_custom_call.1']
    #allocation13 [shape = 'u8[8192]{0}', space=vmem, size = 0x2000, scoped, tag = 'output window, operand 0, single buffered']
    %11 = vsyncpa [#allocation3], 0
    %12 = vsyncpa [#allocation6], 0
    %13 = vsyncpa [#allocation9], 0
    %14 = vsyncpa [#allocation12], 0
    %15 = vsyncpa [#allocation4], 0
    // Predicated region
    $region2: #{tpu_custom_call.1} parent=1 // pred_check
      _
    $region3: #{tpu_custom_call.1} parent=1 // pred_check_branch
      %17 = sbr.rel (0) target = $region5
    $region4: #{tpu_custom_call.1} parent=1 // pred_region
      %19 = vsyncadd [#allocation3], 0
      %s20 = sshll.u32 %s0, 4
      %s21 = int_to_ptr.hbm [resolvable:$true] %s20
      %s22 = sshll.u32 [#allocation2], 4
      %s23 = int_to_ptr.vmem [resolvable:$true] %s22
      %28 = dma.hbm_to_vmem [thread:$0]  %s21, 128, %s23, [#allocation3], 64, 64, 4
    $region5: #{tpu_custom_call.1} parent=1 // pred_fallthru
      _
    // Predicated region
    $region6: #{tpu_custom_call.1} parent=1 // pred_check
      _
    $region7: #{tpu_custom_call.1} parent=1 // pred_check_branch
      %30 = sbr.rel (0) target = $region9
    $region8: #{tpu_custom_call.1} parent=1 // pred_region
      %32 = vsyncadd [#allocation6], 0
      %s33 = sshll.u32 %s1, 4
      %s34 = int_to_ptr.hbm [resolvable:$true] %s33
      %s35 = sshll.u32 [#allocation5], 4
      %s36 = int_to_ptr.vmem [resolvable:$true] %s35
      %41 = dma.hbm_to_vmem [thread:$0]  %s34, 4096, %s36, [#allocation6], 512, 512, 32
    $region9: #{tpu_custom_call.1} parent=1 // pred_fallthru
      _
    // Predicated region
    $region10: #{tpu_custom_call.1} parent=1 // pred_check
      _
    $region11: #{tpu_custom_call.1} parent=1 // pred_check_branch
      %43 = sbr.rel (0) target = $region13
    $region12: #{tpu_custom_call.1} parent=1 // pred_region
      %45 = vsyncadd [#allocation6], 0
      %s46 = sshll.u32 %s2, 4
      %s47 = int_to_ptr.hbm [resolvable:$true] %s46
      %s48 = sshll.u32 [#allocation7], 4
      %s49 = int_to_ptr.vmem [resolvable:$true] %s48
      %54 = dma.hbm_to_vmem [thread:$0]  %s47, 32768, %s49, [#allocation6], 256, 256, 16
    $region13: #{tpu_custom_call.1} parent=1 // pred_fallthru
      _
    // Predicated region
    $region14: #{tpu_custom_call.1} parent=1 // pred_check
      _
    $region15: #{tpu_custom_call.1} parent=1 // pred_check_branch
      %56 = sbr.rel (0) target = $region17
    $region16: #{tpu_custom_call.1} parent=1 // pred_region
      %58 = vsyncadd [#allocation9], 0
      %s59 = sshll.u32 %s3, 4
      %s60 = int_to_ptr.hbm [resolvable:$true] %s59
      %s61 = sshll.u32 [#allocation8], 4
      %s62 = int_to_ptr.vmem [resolvable:$true] %s61
      %67 = dma.hbm_to_vmem [thread:$0]  %s60, 8192, %s62, [#allocation9], 128, 128, 8
    $region17: #{tpu_custom_call.1} parent=1 // pred_fallthru
      _
    // Predicated region
    $region18: #{tpu_custom_call.1} parent=1 // pred_check
      _
    $region19: #{tpu_custom_call.1} parent=1 // pred_check_branch
      %69 = sbr.rel (0) target = $region21
    $region20: #{tpu_custom_call.1} parent=1 // pred_region
      %71 = vsyncadd [#allocation9], 0
      %s72 = sshll.u32 %s4, 4
      %s73 = int_to_ptr.hbm [resolvable:$true] %s72
      %s74 = sshll.u32 [#allocation10], 4
      %s75 = int_to_ptr.vmem [resolvable:$true] %s74
      %80 = dma.hbm_to_vmem [thread:$0]  %s73, 5120, %s75, [#allocation9], 64, 64, 4
    $region21: #{tpu_custom_call.1} parent=1 // pred_fallthru
      _
    // Predicated region
    $region22: #{tpu_custom_call.1} parent=1 // pred_check
      _
    $region23: #{tpu_custom_call.1} parent=1 // pred_check_branch
      %82 = sbr.rel (0) target = $region25
    $region24: #{tpu_custom_call.1} parent=1 // pred_region
      %84 = vsyncadd [#allocation12], 0
      %s85 = sshll.u32 %s5, 4
      %s86 = int_to_ptr.hbm [resolvable:$true] %s85
      %s87 = sshll.u32 [#allocation11], 4
      %s88 = int_to_ptr.vmem [resolvable:$true] %s87
      %93 = dma.hbm_to_vmem [thread:$0]  %s86, 2048, %s88, [#allocation12], 1024, 1024, 64
    $region25: #{tpu_custom_call.1} parent=1 // pred_fallthru
      _
    // Predicated region
    $region26: #{tpu_custom_call.1} parent=1 // pred_check
      _
    $region27: #{tpu_custom_call.1} parent=1 // pred_check_branch
      %95 = sbr.rel (0) target = $region29
    $region28: #{tpu_custom_call.1} parent=1 // pred_region
      %97 = dma.done [#allocation3], 128
    $region29: #{tpu_custom_call.1} parent=1 // pred_fallthru
      _
    // Predicated region
    $region30: #{tpu_custom_call.1} parent=1 // pred_check
      _
    $region31: #{tpu_custom_call.1} parent=1 // pred_check_branch
      %99 = sbr.rel (0) target = $region33
    $region32: #{tpu_custom_call.1} parent=1 // pred_region
      %101 = dma.done [#allocation6], 4096
    $region33: #{tpu_custom_call.1} parent=1 // pred_fallthru
      _
    // Predicated region
    $region34: #{tpu_custom_call.1} parent=1 // pred_check
      _
    $region35: #{tpu_custom_call.1} parent=1 // pred_check_branch
      %103 = sbr.rel (0) target = $region37
    $region36: #{tpu_custom_call.1} parent=1 // pred_region
      %105 = dma.done [#allocation6], 32768
    $region37: #{tpu_custom_call.1} parent=1 // pred_fallthru
      _
    // Predicated region
    $region38: #{tpu_custom_call.1} parent=1 // pred_check
      _
    $region39: #{tpu_custom_call.1} parent=1 // pred_check_branch
      %107 = sbr.rel (0) target = $region41
    $region40: #{tpu_custom_call.1} parent=1 // pred_region
      %109 = dma.done [#allocation9], 8192
    $region41: #{tpu_custom_call.1} parent=1 // pred_fallthru
      _
    // Predicated region
    $region42: #{tpu_custom_call.1} parent=1 // pred_check
      _
    $region43: #{tpu_custom_call.1} parent=1 // pred_check_branch
      %111 = sbr.rel (0) target = $region45
    $region44: #{tpu_custom_call.1} parent=1 // pred_region
      %113 = dma.done [#allocation9], 5120
    $region45: #{tpu_custom_call.1} parent=1 // pred_fallthru
      _
    // Predicated region
    $region46: #{tpu_custom_call.1} parent=1 // pred_check
      _
    $region47: #{tpu_custom_call.1} parent=1 // pred_check_branch
      %115 = sbr.rel (0) target = $region49
    $region48: #{tpu_custom_call.1} parent=1 // pred_region
      %117 = dma.done [#allocation12], 2048
    $region49: #{tpu_custom_call.1} parent=1 // pred_fallthru
      _
    %v119 = vld [vmem:[#allocation2] sm:$0xf]
    %v120 = vld [vmem:[#allocation2 + $0x4] sm:$0xf]
    %v121 = vld [vmem:[#allocation5] sm:$0xff]
    %v122 = vld [vmem:[#allocation5 + $0x8] sm:$0xff]
    %v123 = vld [vmem:[#allocation5 + $0x10] sm:$0xff]
    %v124 = vld [vmem:[#allocation5 + $0x18] sm:$0xff]
    %v125 = vld [vmem:[#allocation5 + $0x20] sm:$0xff]
    %v126 = vld [vmem:[#allocation5 + $0x28] sm:$0xff]
    %v127 = vld [vmem:[#allocation5 + $0x30] sm:$0xff]
    %v128 = vld [vmem:[#allocation5 + $0x38] sm:$0xff]
    %v129 = vld [vmem:[#allocation5 + $0x40] sm:$0xff]
    %v130 = vld [vmem:[#allocation5 + $0x48] sm:$0xff]
    %v131 = vld [vmem:[#allocation5 + $0x50] sm:$0xff]
    %v132 = vld [vmem:[#allocation5 + $0x58] sm:$0xff]
    %v133 = vld [vmem:[#allocation5 + $0x60] sm:$0xff]
    %v134 = vld [vmem:[#allocation5 + $0x68] sm:$0xff]
    %v135 = vld [vmem:[#allocation5 + $0x70] sm:$0xff]
    %v136 = vld [vmem:[#allocation5 + $0x78] sm:$0xff]
    %v137 = vld [vmem:[#allocation5 + $0x80] sm:$0xff]
    %v138 = vld [vmem:[#allocation5 + $0x88] sm:$0xff]
    %v139 = vld [vmem:[#allocation5 + $0x90] sm:$0xff]
    %v140 = vld [vmem:[#allocation5 + $0x98] sm:$0xff]
    %v141 = vld [vmem:[#allocation5 + $0xa0] sm:$0xff]
    %v142 = vld [vmem:[#allocation5 + $0xa8] sm:$0xff]
    %v143 = vld [vmem:[#allocation5 + $0xb0] sm:$0xff]
    %v144 = vld [vmem:[#allocation5 + $0xb8] sm:$0xff]
    %v145 = vld [vmem:[#allocation5 + $0xc0] sm:$0xff]
    %v146 = vld [vmem:[#allocation5 + $0xc8] sm:$0xff]
    %v147 = vld [vmem:[#allocation5 + $0xd0] sm:$0xff]
    %v148 = vld [vmem:[#allocation5 + $0xd8] sm:$0xff]
    %v149 = vld [vmem:[#allocation5 + $0xe0] sm:$0xff]
    %v150 = vld [vmem:[#allocation5 + $0xe8] sm:$0xff]
    %v151 = vld [vmem:[#allocation5 + $0xf0] sm:$0xff]
    %v152 = vld [vmem:[#allocation5 + $0xf8] sm:$0xff]
    %v155 = vunpack.c.l.b16 %v119
    %v156 = vunpack.c.l.b16 %v120
    %v157 = vpack.c.b16 %v156, %v155
    %v190 = vunpack.c.l.b16 %v121
    %v191 = vunpack.c.h.b16 %v121
    %v192 = vunpack.c.l.b16 %v122
    %v193 = vunpack.c.h.b16 %v122
    %v194 = vunpack.c.l.b16 %v123
    %v195 = vunpack.c.h.b16 %v123
    %v196 = vunpack.c.l.b16 %v124
    %v197 = vunpack.c.h.b16 %v124
    %v198 = vunpack.c.l.b16 %v125
    %v199 = vunpack.c.h.b16 %v125
    %v200 = vunpack.c.l.b16 %v126
    %v201 = vunpack.c.h.b16 %v126
    %v202 = vunpack.c.l.b16 %v127
    %v203 = vunpack.c.h.b16 %v127
    %v204 = vunpack.c.l.b16 %v128
    %v205 = vunpack.c.h.b16 %v128
    %v206 = vunpack.c.l.b16 %v129
    %v207 = vunpack.c.h.b16 %v129
    %v208 = vunpack.c.l.b16 %v130
    %v209 = vunpack.c.h.b16 %v130
    %v210 = vunpack.c.l.b16 %v131
    %v211 = vunpack.c.h.b16 %v131
    %v212 = vunpack.c.l.b16 %v132
    %v213 = vunpack.c.h.b16 %v132
    %v214 = vunpack.c.l.b16 %v133
    %v215 = vunpack.c.h.b16 %v133
    %v216 = vunpack.c.l.b16 %v134
    %v217 = vunpack.c.h.b16 %v134
    %v218 = vunpack.c.l.b16 %v135
    %v219 = vunpack.c.h.b16 %v135
    %v220 = vunpack.c.l.b16 %v136
    %v221 = vunpack.c.h.b16 %v136
    %v222 = vunpack.c.l.b16 %v137
    %v223 = vunpack.c.h.b16 %v137
    %v224 = vunpack.c.l.b16 %v138
    %v225 = vunpack.c.h.b16 %v138
    %v226 = vunpack.c.l.b16 %v139
    %v227 = vunpack.c.h.b16 %v139
    %v228 = vunpack.c.l.b16 %v140
    %v229 = vunpack.c.h.b16 %v140
    %v230 = vunpack.c.l.b16 %v141
    %v231 = vunpack.c.h.b16 %v141
    %v232 = vunpack.c.l.b16 %v142
    %v233 = vunpack.c.h.b16 %v142
    %v234 = vunpack.c.l.b16 %v143
    %v235 = vunpack.c.h.b16 %v143
    %v236 = vunpack.c.l.b16 %v144
    %v237 = vunpack.c.h.b16 %v144
    %v238 = vunpack.c.l.b16 %v145
    %v239 = vunpack.c.h.b16 %v145
    %v240 = vunpack.c.l.b16 %v146
    %v241 = vunpack.c.h.b16 %v146
    %v242 = vunpack.c.l.b16 %v147
    %v243 = vunpack.c.h.b16 %v147
    %v244 = vunpack.c.l.b16 %v148
    %v245 = vunpack.c.h.b16 %v148
    %v246 = vunpack.c.l.b16 %v149
    %v247 = vunpack.c.h.b16 %v149
    %v248 = vunpack.c.l.b16 %v150
    %v249 = vunpack.c.h.b16 %v150
    %v250 = vunpack.c.l.b16 %v151
    %v251 = vunpack.c.h.b16 %v151
    %v252 = vunpack.c.l.b16 %v152
    %v253 = vunpack.c.h.b16 %v152
    %v254 = vpack.c.b16 %v198, %v190
    %v255 = vpack.c.b16 %v199, %v191
    %v256 = vpack.c.b16 %v200, %v192
    %v257 = vpack.c.b16 %v201, %v193
    %v258 = vpack.c.b16 %v202, %v194
    %v259 = vpack.c.b16 %v203, %v195
    %v260 = vpack.c.b16 %v204, %v196
    %v261 = vpack.c.b16 %v205, %v197
    %v262 = vpack.c.b16 %v214, %v206
    %v263 = vpack.c.b16 %v215, %v207
    %v264 = vpack.c.b16 %v216, %v208
    %v265 = vpack.c.b16 %v217, %v209
    %v266 = vpack.c.b16 %v218, %v210
    %v267 = vpack.c.b16 %v219, %v211
    %v268 = vpack.c.b16 %v220, %v212
    %v269 = vpack.c.b16 %v221, %v213
    %v270 = vpack.c.b16 %v230, %v222
    %v271 = vpack.c.b16 %v231, %v223
    %v272 = vpack.c.b16 %v232, %v224
    %v273 = vpack.c.b16 %v233, %v225
    %v274 = vpack.c.b16 %v234, %v226
    %v275 = vpack.c.b16 %v235, %v227
    %v276 = vpack.c.b16 %v236, %v228
    %v277 = vpack.c.b16 %v237, %v229
    %v278 = vpack.c.b16 %v246, %v238
    %v279 = vpack.c.b16 %v247, %v239
    %v280 = vpack.c.b16 %v248, %v240
    %v281 = vpack.c.b16 %v249, %v241
    %v282 = vpack.c.b16 %v250, %v242
    %v283 = vpack.c.b16 %v251, %v243
    %v284 = vpack.c.b16 %v252, %v244
    %v285 = vpack.c.b16 %v253, %v245
    %vm318 = vcmask 523264
    %v320 = vsel %vm318, %v157, 0
    %322 = vmatpush.bf16.msra.mxu0 0
    %323 = vmatpush.bf16.msra.mxu0 0
    %324 = vmatpush.bf16.msra.mxu0 0
    %325 = vmatpush.bf16.msra.mxu0 0
    %326 = vmatpush.bf16.msra.mxu0 %v278
    %327 = vmatpush.bf16.msra.mxu0 %v270
    %328 = vmatpush.bf16.msra.mxu0 %v262
    %329 = vmatpush.bf16.msra.mxu0 %v254
    %330 = vmatmul.bf16.gmra.mxu0 %v320
    %v331 = vpop.f32.mrf.mxu0
    %v332 = vadd.f32 0.0, %v331
    %v333 = vpop.f32.mrf.mxu0
    %v334 = vadd.f32 0.0, %v333
    %335 = vdwg.mxu0
    %336 = vmatpush.bf16.msra.mxu0 0
    %337 = vmatpush.bf16.msra.mxu0 0
    %338 = vmatpush.bf16.msra.mxu0 0
    %339 = vmatpush.bf16.msra.mxu0 0
    %340 = vmatpush.bf16.msra.mxu0 %v279
    %341 = vmatpush.bf16.msra.mxu0 %v271
    %342 = vmatpush.bf16.msra.mxu0 %v263
    %343 = vmatpush.bf16.msra.mxu0 %v255
    %344 = vmatmul.bf16.gmra.mxu0 %v320
    %v345 = vpop.f32.mrf.mxu0
    %v346 = vadd.f32 0.0, %v345
    %v347 = vpop.f32.mrf.mxu0
    %v348 = vadd.f32 0.0, %v347
    %349 = vdwg.mxu0
    %350 = vmatpush.bf16.msra.mxu0 0
    %351 = vmatpush.bf16.msra.mxu0 0
    %352 = vmatpush.bf16.msra.mxu0 0
    %353 = vmatpush.bf16.msra.mxu0 0
    %354 = vmatpush.bf16.msra.mxu0 %v280
    %355 = vmatpush.bf16.msra.mxu0 %v272
    %356 = vmatpush.bf16.msra.mxu0 %v264
    %357 = vmatpush.bf16.msra.mxu0 %v256
    %358 = vmatmul.bf16.gmra.mxu0 %v320
    %v359 = vpop.f32.mrf.mxu0
    %v360 = vadd.f32 0.0, %v359
    %v361 = vpop.f32.mrf.mxu0
    %v362 = vadd.f32 0.0, %v361
    %363 = vdwg.mxu0
    %364 = vmatpush.bf16.msra.mxu0 0
    %365 = vmatpush.bf16.msra.mxu0 0
    %366 = vmatpush.bf16.msra.mxu0 0
    %367 = vmatpush.bf16.msra.mxu0 0
    %368 = vmatpush.bf16.msra.mxu0 %v281
    %369 = vmatpush.bf16.msra.mxu0 %v273
    %370 = vmatpush.bf16.msra.mxu0 %v265
    %371 = vmatpush.bf16.msra.mxu0 %v257
    %372 = vmatmul.bf16.gmra.mxu0 %v320
    %v373 = vpop.f32.mrf.mxu0
    %v374 = vadd.f32 0.0, %v373
    %v375 = vpop.f32.mrf.mxu0
    %v376 = vadd.f32 0.0, %v375
    %377 = vdwg.mxu0
    %378 = vmatpush.bf16.msra.mxu0 0
    %379 = vmatpush.bf16.msra.mxu0 0
    %380 = vmatpush.bf16.msra.mxu0 0
    %381 = vmatpush.bf16.msra.mxu0 0
    %382 = vmatpush.bf16.msra.mxu0 %v282
    %383 = vmatpush.bf16.msra.mxu0 %v274
    %384 = vmatpush.bf16.msra.mxu0 %v266
    %385 = vmatpush.bf16.msra.mxu0 %v258
    %386 = vmatmul.bf16.gmra.mxu0 %v320
    %v387 = vpop.f32.mrf.mxu0
    %v388 = vadd.f32 0.0, %v387
    %v389 = vpop.f32.mrf.mxu0
    %v390 = vadd.f32 0.0, %v389
    %391 = vdwg.mxu0
    %392 = vmatpush.bf16.msra.mxu0 0
    %393 = vmatpush.bf16.msra.mxu0 0
    %394 = vmatpush.bf16.msra.mxu0 0
    %395 = vmatpush.bf16.msra.mxu0 0
    %396 = vmatpush.bf16.msra.mxu0 %v283
    %397 = vmatpush.bf16.msra.mxu0 %v275
    %398 = vmatpush.bf16.msra.mxu0 %v267
    %399 = vmatpush.bf16.msra.mxu0 %v259
    %400 = vmatmul.bf16.gmra.mxu0 %v320
    %v401 = vpop.f32.mrf.mxu0
    %v402 = vadd.f32 0.0, %v401
    %v403 = vpop.f32.mrf.mxu0
    %v404 = vadd.f32 0.0, %v403
    %405 = vdwg.mxu0
    %406 = vmatpush.bf16.msra.mxu0 0
    %407 = vmatpush.bf16.msra.mxu0 0
    %408 = vmatpush.bf16.msra.mxu0 0
    %409 = vmatpush.bf16.msra.mxu0 0
    %410 = vmatpush.bf16.msra.mxu0 %v284
    %411 = vmatpush.bf16.msra.mxu0 %v276
    %412 = vmatpush.bf16.msra.mxu0 %v268
    %413 = vmatpush.bf16.msra.mxu0 %v260
    %414 = vmatmul.bf16.gmra.mxu0 %v320
    %v415 = vpop.f32.mrf.mxu0
    %v416 = vadd.f32 0.0, %v415
    %v417 = vpop.f32.mrf.mxu0
    %v418 = vadd.f32 0.0, %v417
    %419 = vdwg.mxu0
    %420 = vmatpush.bf16.msra.mxu0 0
    %421 = vmatpush.bf16.msra.mxu0 0
    %422 = vmatpush.bf16.msra.mxu0 0
    %423 = vmatpush.bf16.msra.mxu0 0
    %424 = vmatpush.bf16.msra.mxu0 %v285
    %425 = vmatpush.bf16.msra.mxu0 %v277
    %426 = vmatpush.bf16.msra.mxu0 %v269
    %427 = vmatpush.bf16.msra.mxu0 %v261
    %428 = vmatmul.bf16.gmra.mxu0 %v320
    %v429 = vpop.f32.mrf.mxu0
    %v430 = vadd.f32 0.0, %v429
    %v431 = vpop.f32.mrf.mxu0
    %v432 = vadd.f32 0.0, %v431
    %433 = vdwg.mxu0
    %v434 = vrot.slane %v332, 4
    %v435 = vadd.f32 %v332, %v434
    %v436 = vrot.slane %v435, 2
    %v437 = vadd.f32 %v435, %v436
    %v438 = vrot.slane %v437, 1
    %v439 = vadd.f32 %v437, %v438
    %v440 = vrot.slane %v346, 4
    %v441 = vadd.f32 %v346, %v440
    %v442 = vrot.slane %v441, 2
    %v443 = vadd.f32 %v441, %v442
    %v444 = vrot.slane %v443, 1
    %v445 = vadd.f32 %v443, %v444
    %v446 = vrot.slane %v360, 4
    %v447 = vadd.f32 %v360, %v446
    %v448 = vrot.slane %v447, 2
    %v449 = vadd.f32 %v447, %v448
    %v450 = vrot.slane %v449, 1
    %v451 = vadd.f32 %v449, %v450
    %v452 = vrot.slane %v374, 4
    %v453 = vadd.f32 %v374, %v452
    %v454 = vrot.slane %v453, 2
    %v455 = vadd.f32 %v453, %v454
    %v456 = vrot.slane %v455, 1
    %v457 = vadd.f32 %v455, %v456
    %v458 = vrot.slane %v388, 4
    %v459 = vadd.f32 %v388, %v458
    %v460 = vrot.slane %v459, 2
    %v461 = vadd.f32 %v459, %v460
    %v462 = vrot.slane %v461, 1
    %v463 = vadd.f32 %v461, %v462
    %v464 = vrot.slane %v402, 4
    %v465 = vadd.f32 %v402, %v464
    %v466 = vrot.slane %v465, 2
    %v467 = vadd.f32 %v465, %v466
    %v468 = vrot.slane %v467, 1
    %v469 = vadd.f32 %v467, %v468
    %v470 = vrot.slane %v416, 4
    %v471 = vadd.f32 %v416, %v470
    %v472 = vrot.slane %v471, 2
    %v473 = vadd.f32 %v471, %v472
    %v474 = vrot.slane %v473, 1
    %v475 = vadd.f32 %v473, %v474
    %v476 = vrot.slane %v430, 4
    %v477 = vadd.f32 %v430, %v476
    %v478 = vrot.slane %v477, 2
    %v479 = vadd.f32 %v477, %v478
    %v480 = vrot.slane %v479, 1
    %v481 = vadd.f32 %v479, %v480
    %v482 = vrot.slane %v334, 4
    %v483 = vadd.f32 %v334, %v482
    %v484 = vrot.slane %v483, 2
    %v485 = vadd.f32 %v483, %v484
    %v486 = vrot.slane %v485, 1
    %v487 = vadd.f32 %v485, %v486
    %v488 = vrot.slane %v348, 4
    %v489 = vadd.f32 %v348, %v488
    %v490 = vrot.slane %v489, 2
    %v491 = vadd.f32 %v489, %v490
    %v492 = vrot.slane %v491, 1
    %v493 = vadd.f32 %v491, %v492
    %v494 = vrot.slane %v362, 4
    %v495 = vadd.f32 %v362, %v494
    %v496 = vrot.slane %v495, 2
    %v497 = vadd.f32 %v495, %v496
    %v498 = vrot.slane %v497, 1
    %v499 = vadd.f32 %v497, %v498
    %v500 = vrot.slane %v376, 4
    %v501 = vadd.f32 %v376, %v500
    %v502 = vrot.slane %v501, 2
    %v503 = vadd.f32 %v501, %v502
    %v504 = vrot.slane %v503, 1
    %v505 = vadd.f32 %v503, %v504
    %v506 = vrot.slane %v390, 4
    %v507 = vadd.f32 %v390, %v506
    %v508 = vrot.slane %v507, 2
    %v509 = vadd.f32 %v507, %v508
    %v510 = vrot.slane %v509, 1
    %v511 = vadd.f32 %v509, %v510
    %v512 = vrot.slane %v404, 4
    %v513 = vadd.f32 %v404, %v512
    %v514 = vrot.slane %v513, 2
    %v515 = vadd.f32 %v513, %v514
    %v516 = vrot.slane %v515, 1
    %v517 = vadd.f32 %v515, %v516
    %v518 = vrot.slane %v418, 4
    %v519 = vadd.f32 %v418, %v518
    %v520 = vrot.slane %v519, 2
    %v521 = vadd.f32 %v519, %v520
    %v522 = vrot.slane %v521, 1
    %v523 = vadd.f32 %v521, %v522
    %v524 = vrot.slane %v432, 4
    %v525 = vadd.f32 %v432, %v524
    %v526 = vrot.slane %v525, 2
    %v527 = vadd.f32 %v525, %v526
    %v528 = vrot.slane %v527, 1
    %v529 = vadd.f32 %v527, %v528
    %v530 = vrcp.pop 8.0
    %v531 = vmul.f32 8.0, %v530
    %v532 = vsub.f32 1.0, %v531
    %v533 = vmul.f32 %v530, %v532
    %v534 = vadd.f32 %v530, %v533
    %vm535 = vweird.f32 %v530
    %v536 = vsel %vm535, %v530, %v534
    %v537 = vmul.f32 %v439, %v536
    %v538 = vmul.f32 %v445, %v536
    %v539 = vmul.f32 %v451, %v536
    %v540 = vmul.f32 %v457, %v536
    %v541 = vmul.f32 %v463, %v536
    %v542 = vmul.f32 %v469, %v536
    %v543 = vmul.f32 %v475, %v536
    %v544 = vmul.f32 %v481, %v536
    %v545 = vmul.f32 %v487, %v536
    %v546 = vmul.f32 %v493, %v536
    %v547 = vmul.f32 %v499, %v536
    %v548 = vmul.f32 %v505, %v536
    %v549 = vmul.f32 %v511, %v536
    %v550 = vmul.f32 %v517, %v536
    %v551 = vmul.f32 %v523, %v536
    %v552 = vmul.f32 %v529, %v536
    %v553 = vmul.f32 %v332, %v332
    %v554 = vmul.f32 %v346, %v346
    %v555 = vmul.f32 %v360, %v360
    %v556 = vmul.f32 %v374, %v374
    %v557 = vmul.f32 %v388, %v388
    %v558 = vmul.f32 %v402, %v402
    %v559 = vmul.f32 %v416, %v416
    %v560 = vmul.f32 %v430, %v430
    %v561 = vmul.f32 %v334, %v334
    %v562 = vmul.f32 %v348, %v348
    %v563 = vmul.f32 %v362, %v362
    %v564 = vmul.f32 %v376, %v376
    %v565 = vmul.f32 %v390, %v390
    %v566 = vmul.f32 %v404, %v404
    %v567 = vmul.f32 %v418, %v418
    %v568 = vmul.f32 %v432, %v432
    %v569 = vrot.slane %v553, 4
    %v570 = vadd.f32 %v553, %v569
    %v571 = vrot.slane %v570, 2
    %v572 = vadd.f32 %v570, %v571
    %v573 = vrot.slane %v572, 1
    %v574 = vadd.f32 %v572, %v573
    %v575 = vrot.slane %v554, 4
    %v576 = vadd.f32 %v554, %v575
    %v577 = vrot.slane %v576, 2
    %v578 = vadd.f32 %v576, %v577
    %v579 = vrot.slane %v578, 1
    %v580 = vadd.f32 %v578, %v579
    %v581 = vrot.slane %v555, 4
    %v582 = vadd.f32 %v555, %v581
    %v583 = vrot.slane %v582, 2
    %v584 = vadd.f32 %v582, %v583
    %v585 = vrot.slane %v584, 1
    %v586 = vadd.f32 %v584, %v585
    %v587 = vrot.slane %v556, 4
    %v588 = vadd.f32 %v556, %v587
    %v589 = vrot.slane %v588, 2
    %v590 = vadd.f32 %v588, %v589
    %v591 = vrot.slane %v590, 1
    %v592 = vadd.f32 %v590, %v591
    %v593 = vrot.slane %v557, 4
    %v594 = vadd.f32 %v557, %v593
    %v595 = vrot.slane %v594, 2
    %v596 = vadd.f32 %v594, %v595
    %v597 = vrot.slane %v596, 1
    %v598 = vadd.f32 %v596, %v597
    %v599 = vrot.slane %v558, 4
    %v600 = vadd.f32 %v558, %v599
    %v601 = vrot.slane %v600, 2
    %v602 = vadd.f32 %v600, %v601
    %v603 = vrot.slane %v602, 1
    %v604 = vadd.f32 %v602, %v603
    %v605 = vrot.slane %v559, 4
    %v606 = vadd.f32 %v559, %v605
    %v607 = vrot.slane %v606, 2
    %v608 = vadd.f32 %v606, %v607
    %v609 = vrot.slane %v608, 1
    %v610 = vadd.f32 %v608, %v609
    %v611 = vrot.slane %v560, 4
    %v612 = vadd.f32 %v560, %v611
    %v613 = vrot.slane %v612, 2
    %v614 = vadd.f32 %v612, %v613
    %v615 = vrot.slane %v614, 1
    %v616 = vadd.f32 %v614, %v615
    %v617 = vrot.slane %v561, 4
    %v618 = vadd.f32 %v561, %v617
    %v619 = vrot.slane %v618, 2
    %v620 = vadd.f32 %v618, %v619
    %v621 = vrot.slane %v620, 1
    %v622 = vadd.f32 %v620, %v621
    %v623 = vrot.slane %v562, 4
    %v624 = vadd.f32 %v562, %v623
    %v625 = vrot.slane %v624, 2
    %v626 = vadd.f32 %v624, %v625
    %v627 = vrot.slane %v626, 1
    %v628 = vadd.f32 %v626, %v627
    %v629 = vrot.slane %v563, 4
    %v630 = vadd.f32 %v563, %v629
    %v631 = vrot.slane %v630, 2
    %v632 = vadd.f32 %v630, %v631
    %v633 = vrot.slane %v632, 1
    %v634 = vadd.f32 %v632, %v633
    %v635 = vrot.slane %v564, 4
    %v636 = vadd.f32 %v564, %v635
    %v637 = vrot.slane %v636, 2
    %v638 = vadd.f32 %v636, %v637
    %v639 = vrot.slane %v638, 1
    %v640 = vadd.f32 %v638, %v639
    %v641 = vrot.slane %v565, 4
    %v642 = vadd.f32 %v565, %v641
    %v643 = vrot.slane %v642, 2
    %v644 = vadd.f32 %v642, %v643
    %v645 = vrot.slane %v644, 1
    %v646 = vadd.f32 %v644, %v645
    %v647 = vrot.slane %v566, 4
    %v648 = vadd.f32 %v566, %v647
    %v649 = vrot.slane %v648, 2
    %v650 = vadd.f32 %v648, %v649
    %v651 = vrot.slane %v650, 1
    %v652 = vadd.f32 %v650, %v651
    %v653 = vrot.slane %v567, 4
    %v654 = vadd.f32 %v567, %v653
    %v655 = vrot.slane %v654, 2
    %v656 = vadd.f32 %v654, %v655
    %v657 = vrot.slane %v656, 1
    %v658 = vadd.f32 %v656, %v657
    %v659 = vrot.slane %v568, 4
    %v660 = vadd.f32 %v568, %v659
    %v661 = vrot.slane %v660, 2
    %v662 = vadd.f32 %v660, %v661
    %v663 = vrot.slane %v662, 1
    %v664 = vadd.f32 %v662, %v663
    %v665 = vmul.f32 %v574, %v536
    %v666 = vmul.f32 %v580, %v536
    %v667 = vmul.f32 %v586, %v536
    %v668 = vmul.f32 %v592, %v536
    %v669 = vmul.f32 %v598, %v536
    %v670 = vmul.f32 %v604, %v536
    %v671 = vmul.f32 %v610, %v536
    %v672 = vmul.f32 %v616, %v536
    %v673 = vmul.f32 %v622, %v536
    %v674 = vmul.f32 %v628, %v536
    %v675 = vmul.f32 %v634, %v536
    %v676 = vmul.f32 %v640, %v536
    %v677 = vmul.f32 %v646, %v536
    %v678 = vmul.f32 %v652, %v536
    %v679 = vmul.f32 %v658, %v536
    %v680 = vmul.f32 %v664, %v536
    %v681 = vmul.f32 %v537, %v537
    %v682 = vmul.f32 %v538, %v538
    %v683 = vmul.f32 %v539, %v539
    %v684 = vmul.f32 %v540, %v540
    %v685 = vmul.f32 %v541, %v541
    %v686 = vmul.f32 %v542, %v542
    %v687 = vmul.f32 %v543, %v543
    %v688 = vmul.f32 %v544, %v544
    %v689 = vmul.f32 %v545, %v545
    %v690 = vmul.f32 %v546, %v546
    %v691 = vmul.f32 %v547, %v547
    %v692 = vmul.f32 %v548, %v548
    %v693 = vmul.f32 %v549, %v549
    %v694 = vmul.f32 %v550, %v550
    %v695 = vmul.f32 %v551, %v551
    %v696 = vmul.f32 %v552, %v552
    %v697 = vsub.f32 %v665, %v681
    %v698 = vsub.f32 %v666, %v682
    %v699 = vsub.f32 %v667, %v683
    %v700 = vsub.f32 %v668, %v684
    %v701 = vsub.f32 %v669, %v685
    %v702 = vsub.f32 %v670, %v686
    %v703 = vsub.f32 %v671, %v687
    %v704 = vsub.f32 %v672, %v688
    %v705 = vsub.f32 %v673, %v689
    %v706 = vsub.f32 %v674, %v690
    %v707 = vsub.f32 %v675, %v691
    %v708 = vsub.f32 %v676, %v692
    %v709 = vsub.f32 %v677, %v693
    %v710 = vsub.f32 %v678, %v694
    %v711 = vsub.f32 %v679, %v695
    %v712 = vsub.f32 %v680, %v696
    %v713 = vld [vmem:[#allocation11] ss:$8 sm:$0xf]
    %v714 = vld [vmem:[#allocation11] ss:$8 sm:$0xf0]
    %v715 = vor.u32 %v713, %v714
    %s716 = scalar_lea.vmem [#allocation11], 1
    %v717 = vld [vmem:[%s716] ss:$8 sm:$0xf]
    %v718 = vld [vmem:[%s716] ss:$8 sm:$0xf0]
    %v719 = vor.u32 %v717, %v718
    %v720 = vadd.f32 %v697, 1e-05
    %v721 = vadd.f32 %v698, 1e-05
    %v722 = vadd.f32 %v699, 1e-05
    %v723 = vadd.f32 %v700, 1e-05
    %v724 = vadd.f32 %v701, 1e-05
    %v725 = vadd.f32 %v702, 1e-05
    %v726 = vadd.f32 %v703, 1e-05
    %v727 = vadd.f32 %v704, 1e-05
    %v728 = vadd.f32 %v705, 1e-05
    %v729 = vadd.f32 %v706, 1e-05
    %v730 = vadd.f32 %v707, 1e-05
    %v731 = vadd.f32 %v708, 1e-05
    %v732 = vadd.f32 %v709, 1e-05
    %v733 = vadd.f32 %v710, 1e-05
    %v734 = vadd.f32 %v711, 1e-05
    %v735 = vadd.f32 %v712, 1e-05
    %v736 = vrsqrt.pop %v720
    %v737 = vmul.f32 %v736, %v720
    %v738 = vmul.f32 %v737, %v736
    %v739 = vmul.f32 0.5, %v738
    %v740 = vsub.f32 1.5, %v739
    %v741 = vmul.f32 %v736, %v740
    %vm742 = vweird.f32 %v720
    %vm743 = vweird.f32 %v736
    %vm744 = vmor %vm742, %vm743
    %v745 = vsel %vm744, %v736, %v741
    %v746 = vrsqrt.pop %v721
    %v747 = vmul.f32 %v746, %v721
    %v748 = vmul.f32 %v747, %v746
    %v749 = vmul.f32 0.5, %v748
    %v750 = vsub.f32 1.5, %v749
    %v751 = vmul.f32 %v746, %v750
    %vm752 = vweird.f32 %v721
    %vm753 = vweird.f32 %v746
    %vm754 = vmor %vm752, %vm753
    %v755 = vsel %vm754, %v746, %v751
    %v756 = vrsqrt.pop %v722
    %v757 = vmul.f32 %v756, %v722
    %v758 = vmul.f32 %v757, %v756
    %v759 = vmul.f32 0.5, %v758
    %v760 = vsub.f32 1.5, %v759
    %v761 = vmul.f32 %v756, %v760
    %vm762 = vweird.f32 %v722
    %vm763 = vweird.f32 %v756
    %vm764 = vmor %vm762, %vm763
    %v765 = vsel %vm764, %v756, %v761
    %v766 = vrsqrt.pop %v723
    %v767 = vmul.f32 %v766, %v723
    %v768 = vmul.f32 %v767, %v766
    %v769 = vmul.f32 0.5, %v768
    %v770 = vsub.f32 1.5, %v769
    %v771 = vmul.f32 %v766, %v770
    %vm772 = vweird.f32 %v723
    %vm773 = vweird.f32 %v766
    %vm774 = vmor %vm772, %vm773
    %v775 = vsel %vm774, %v766, %v771
    %v776 = vrsqrt.pop %v724
    %v777 = vmul.f32 %v776, %v724
    %v778 = vmul.f32 %v777, %v776
    %v779 = vmul.f32 0.5, %v778
    %v780 = vsub.f32 1.5, %v779
    %v781 = vmul.f32 %v776, %v780
    %vm782 = vweird.f32 %v724
    %vm783 = vweird.f32 %v776
    %vm784 = vmor %vm782, %vm783
    %v785 = vsel %vm784, %v776, %v781
    %v786 = vrsqrt.pop %v725
    %v787 = vmul.f32 %v786, %v725
    %v788 = vmul.f32 %v787, %v786
    %v789 = vmul.f32 0.5, %v788
    %v790 = vsub.f32 1.5, %v789
    %v791 = vmul.f32 %v786, %v790
    %vm792 = vweird.f32 %v725
    %vm793 = vweird.f32 %v786
    %vm794 = vmor %vm792, %vm793
    %v795 = vsel %vm794, %v786, %v791
    %v796 = vrsqrt.pop %v726
    %v797 = vmul.f32 %v796, %v726
    %v798 = vmul.f32 %v797, %v796
    %v799 = vmul.f32 0.5, %v798
    %v800 = vsub.f32 1.5, %v799
    %v801 = vmul.f32 %v796, %v800
    %vm802 = vweird.f32 %v726
    %vm803 = vweird.f32 %v796
    %vm804 = vmor %vm802, %vm803
    %v805 = vsel %vm804, %v796, %v801
    %v806 = vrsqrt.pop %v727
    %v807 = vmul.f32 %v806, %v727
    %v808 = vmul.f32 %v807, %v806
    %v809 = vmul.f32 0.5, %v808
    %v810 = vsub.f32 1.5, %v809
    %v811 = vmul.f32 %v806, %v810
    %vm812 = vweird.f32 %v727
    %vm813 = vweird.f32 %v806
    %vm814 = vmor %vm812, %vm813
    %v815 = vsel %vm814, %v806, %v811
    %v816 = vrsqrt.pop %v728
    %v817 = vmul.f32 %v816, %v728
    %v818 = vmul.f32 %v817, %v816
    %v819 = vmul.f32 0.5, %v818
    %v820 = vsub.f32 1.5, %v819
    %v821 = vmul.f32 %v816, %v820
    %vm822 = vweird.f32 %v728
    %vm823 = vweird.f32 %v816
    %vm824 = vmor %vm822, %vm823
    %v825 = vsel %vm824, %v816, %v821
    %v826 = vrsqrt.pop %v729
    %v827 = vmul.f32 %v826, %v729
    %v828 = vmul.f32 %v827, %v826
    %v829 = vmul.f32 0.5, %v828
    %v830 = vsub.f32 1.5, %v829
    %v831 = vmul.f32 %v826, %v830
    %vm832 = vweird.f32 %v729
    %vm833 = vweird.f32 %v826
    %vm834 = vmor %vm832, %vm833
    %v835 = vsel %vm834, %v826, %v831
    %v836 = vrsqrt.pop %v730
    %v837 = vmul.f32 %v836, %v730
    %v838 = vmul.f32 %v837, %v836
    %v839 = vmul.f32 0.5, %v838
    %v840 = vsub.f32 1.5, %v839
    %v841 = vmul.f32 %v836, %v840
    %vm842 = vweird.f32 %v730
    %vm843 = vweird.f32 %v836
    %vm844 = vmor %vm842, %vm843
    %v845 = vsel %vm844, %v836, %v841
    %v846 = vrsqrt.pop %v731
    %v847 = vmul.f32 %v846, %v731
    %v848 = vmul.f32 %v847, %v846
    %v849 = vmul.f32 0.5, %v848
    %v850 = vsub.f32 1.5, %v849
    %v851 = vmul.f32 %v846, %v850
    %vm852 = vweird.f32 %v731
    %vm853 = vweird.f32 %v846
    %vm854 = vmor %vm852, %vm853
    %v855 = vsel %vm854, %v846, %v851
    %v856 = vrsqrt.pop %v732
    %v857 = vmul.f32 %v856, %v732
    %v858 = vmul.f32 %v857, %v856
    %v859 = vmul.f32 0.5, %v858
    %v860 = vsub.f32 1.5, %v859
    %v861 = vmul.f32 %v856, %v860
    %vm862 = vweird.f32 %v732
    %vm863 = vweird.f32 %v856
    %vm864 = vmor %vm862, %vm863
    %v865 = vsel %vm864, %v856, %v861
    %v866 = vrsqrt.pop %v733
    %v867 = vmul.f32 %v866, %v733
    %v868 = vmul.f32 %v867, %v866
    %v869 = vmul.f32 0.5, %v868
    %v870 = vsub.f32 1.5, %v869
    %v871 = vmul.f32 %v866, %v870
    %vm872 = vweird.f32 %v733
    %vm873 = vweird.f32 %v866
    %vm874 = vmor %vm872, %vm873
    %v875 = vsel %vm874, %v866, %v871
    %v876 = vrsqrt.pop %v734
    %v877 = vmul.f32 %v876, %v734
    %v878 = vmul.f32 %v877, %v876
    %v879 = vmul.f32 0.5, %v878
    %v880 = vsub.f32 1.5, %v879
    %v881 = vmul.f32 %v876, %v880
    %vm882 = vweird.f32 %v734
    %vm883 = vweird.f32 %v876
    %vm884 = vmor %vm882, %vm883
    %v885 = vsel %vm884, %v876, %v881
    %v886 = vrsqrt.pop %v735
    %v887 = vmul.f32 %v886, %v735
    %v888 = vmul.f32 %v887, %v886
    %v889 = vmul.f32 0.5, %v888
    %v890 = vsub.f32 1.5, %v889
    %v891 = vmul.f32 %v886, %v890
    %vm892 = vweird.f32 %v735
    %vm893 = vweird.f32 %v886
    %vm894 = vmor %vm892, %vm893
    %v895 = vsel %vm894, %v886, %v891
    %v912 = vrot.slane %v755, 7
    %v913 = vrot.slane %v765, 6
    %v914 = vrot.slane %v775, 5
    %v915 = vrot.slane %v785, 4
    %v916 = vrot.slane %v795, 3
    %v917 = vrot.slane %v805, 2
    %v918 = vrot.slane %v815, 1
    %v919 = vrot.slane %v835, 7
    %v920 = vrot.slane %v845, 6
    %v921 = vrot.slane %v855, 5
    %v922 = vrot.slane %v865, 4
    %v923 = vrot.slane %v875, 3
    %v924 = vrot.slane %v885, 2
    %v925 = vrot.slane %v895, 1
    %vm926 = vcmask 1040384
    %v927 = vsel %vm926, %v745, %v912
    %vm928 = vcmask 1042434
    %v929 = vsel %vm928, %v913, %v914
    %vm930 = vcmask 1041408
    %v931 = vsel %vm930, %v927, %v929
    %vm932 = vcmask 1044484
    %v933 = vsel %vm932, %v915, %v916
    %vm934 = vcmask 1046534
    %v935 = vsel %vm934, %v917, %v918
    %vm936 = vcmask 1045508
    %v937 = vsel %vm936, %v933, %v935
    %vm938 = vcmask 1043456
    %v939 = vsel %vm938, %v931, %v937
    %v940 = vsel %vm926, %v825, %v919
    %v941 = vsel %vm928, %v920, %v921
    %v942 = vsel %vm930, %v940, %v941
    %v943 = vsel %vm932, %v922, %v923
    %v944 = vsel %vm934, %v924, %v925
    %v945 = vsel %vm936, %v943, %v944
    %v946 = vsel %vm938, %v942, %v945
    %v949 = vmul.f32 %v715, %v939
    %v950 = vmul.f32 %v715, %v946
    %v953 = vperm.slane %v949, 0
    %v954 = vperm.slane %v949, 1
    %v955 = vperm.slane %v949, 2
    %v956 = vperm.slane %v949, 3
    %v957 = vperm.slane %v949, 4
    %v958 = vperm.slane %v949, 5
    %v959 = vperm.slane %v949, 6
    %v960 = vperm.slane %v949, 7
    %v961 = vperm.slane %v950, 0
    %v962 = vperm.slane %v950, 1
    %v963 = vperm.slane %v950, 2
    %v964 = vperm.slane %v950, 3
    %v965 = vperm.slane %v950, 4
    %v966 = vperm.slane %v950, 5
    %v967 = vperm.slane %v950, 6
    %v968 = vperm.slane %v950, 7
    %v985 = vmul.f32 %v537, %v953
    %v986 = vmul.f32 %v538, %v954
    %v987 = vmul.f32 %v539, %v955
    %v988 = vmul.f32 %v540, %v956
    %v989 = vmul.f32 %v541, %v957
    %v990 = vmul.f32 %v542, %v958
    %v991 = vmul.f32 %v543, %v959
    %v992 = vmul.f32 %v544, %v960
    %v993 = vmul.f32 %v545, %v961
    %v994 = vmul.f32 %v546, %v962
    %v995 = vmul.f32 %v547, %v963
    %v996 = vmul.f32 %v548, %v964
    %v997 = vmul.f32 %v549, %v965
    %v998 = vmul.f32 %v550, %v966
    %v999 = vmul.f32 %v551, %v967
    %v1000 = vmul.f32 %v552, %v968
    %v1017 = vrot.slane %v986, 7
    %v1018 = vrot.slane %v987, 6
    %v1019 = vrot.slane %v988, 5
    %v1020 = vrot.slane %v989, 4
    %v1021 = vrot.slane %v990, 3
    %v1022 = vrot.slane %v991, 2
    %v1023 = vrot.slane %v992, 1
    %v1024 = vrot.slane %v994, 7
    %v1025 = vrot.slane %v995, 6
    %v1026 = vrot.slane %v996, 5
    %v1027 = vrot.slane %v997, 4
    %v1028 = vrot.slane %v998, 3
    %v1029 = vrot.slane %v999, 2
    %v1030 = vrot.slane %v1000, 1
    %v1031 = vsel %vm926, %v985, %v1017
    %v1032 = vsel %vm928, %v1018, %v1019
    %v1033 = vsel %vm930, %v1031, %v1032
    %v1034 = vsel %vm932, %v1020, %v1021
    %v1035 = vsel %vm934, %v1022, %v1023
    %v1036 = vsel %vm936, %v1034, %v1035
    %v1037 = vsel %vm938, %v1033, %v1036
    %v1038 = vsel %vm926, %v993, %v1024
    %v1039 = vsel %vm928, %v1025, %v1026
    %v1040 = vsel %vm930, %v1038, %v1039
    %v1041 = vsel %vm932, %v1027, %v1028
    %v1042 = vsel %vm934, %v1029, %v1030
    %v1043 = vsel %vm936, %v1041, %v1042
    %v1044 = vsel %vm938, %v1040, %v1043
    %v1047 = vsub.f32 %v719, %v1037
    %v1048 = vsub.f32 %v719, %v1044
    %v1049 = vmul.f32 %v332, %v953
    %v1050 = vmul.f32 %v346, %v954
    %v1051 = vmul.f32 %v360, %v955
    %v1052 = vmul.f32 %v374, %v956
    %v1053 = vmul.f32 %v388, %v957
    %v1054 = vmul.f32 %v402, %v958
    %v1055 = vmul.f32 %v416, %v959
    %v1056 = vmul.f32 %v430, %v960
    %v1057 = vmul.f32 %v334, %v961
    %v1058 = vmul.f32 %v348, %v962
    %v1059 = vmul.f32 %v362, %v963
    %v1060 = vmul.f32 %v376, %v964
    %v1061 = vmul.f32 %v390, %v965
    %v1062 = vmul.f32 %v404, %v966
    %v1063 = vmul.f32 %v418, %v967
    %v1064 = vmul.f32 %v432, %v968
    %v1067 = vperm.slane %v1047, 0
    %v1068 = vperm.slane %v1047, 1
    %v1069 = vperm.slane %v1047, 2
    %v1070 = vperm.slane %v1047, 3
    %v1071 = vperm.slane %v1047, 4
    %v1072 = vperm.slane %v1047, 5
    %v1073 = vperm.slane %v1047, 6
    %v1074 = vperm.slane %v1047, 7
    %v1075 = vperm.slane %v1048, 0
    %v1076 = vperm.slane %v1048, 1
    %v1077 = vperm.slane %v1048, 2
    %v1078 = vperm.slane %v1048, 3
    %v1079 = vperm.slane %v1048, 4
    %v1080 = vperm.slane %v1048, 5
    %v1081 = vperm.slane %v1048, 6
    %v1082 = vperm.slane %v1048, 7
    %v1099 = vadd.f32 %v1049, %v1067
    %v1100 = vadd.f32 %v1050, %v1068
    %v1101 = vadd.f32 %v1051, %v1069
    %v1102 = vadd.f32 %v1052, %v1070
    %v1103 = vadd.f32 %v1053, %v1071
    %v1104 = vadd.f32 %v1054, %v1072
    %v1105 = vadd.f32 %v1055, %v1073
    %v1106 = vadd.f32 %v1056, %v1074
    %v1107 = vadd.f32 %v1057, %v1075
    %v1108 = vadd.f32 %v1058, %v1076
    %v1109 = vadd.f32 %v1059, %v1077
    %v1110 = vadd.f32 %v1060, %v1078
    %v1111 = vadd.f32 %v1061, %v1079
    %v1112 = vadd.f32 %v1062, %v1080
    %v1113 = vadd.f32 %v1063, %v1081
    %v1114 = vadd.f32 %v1064, %v1082
    %v1115 = vmax.f32 %v1099, 0.0
    %v1116 = vmax.f32 %v1100, 0.0
    %v1117 = vmax.f32 %v1101, 0.0
    %v1118 = vmax.f32 %v1102, 0.0
    %v1119 = vmax.f32 %v1103, 0.0
    %v1120 = vmax.f32 %v1104, 0.0
    %v1121 = vmax.f32 %v1105, 0.0
    %v1122 = vmax.f32 %v1106, 0.0
    %v1123 = vmax.f32 %v1107, 0.0
    %v1124 = vmax.f32 %v1108, 0.0
    %v1125 = vmax.f32 %v1109, 0.0
    %v1126 = vmax.f32 %v1110, 0.0
    %v1127 = vmax.f32 %v1111, 0.0
    %v1128 = vmax.f32 %v1112, 0.0
    %v1129 = vmax.f32 %v1113, 0.0
    %v1130 = vmax.f32 %v1114, 0.0
    %v1131 = vld [vmem:[#allocation7] sm:$0xff]
    %v1132 = vld [vmem:[#allocation7 + $0x8] sm:$0xff]
    %v1133 = vld [vmem:[#allocation7 + $0x10] sm:$0xff]
    %v1134 = vld [vmem:[#allocation7 + $0x18] sm:$0xff]
    %v1135 = vld [vmem:[#allocation7 + $0x20] sm:$0xff]
    %v1136 = vld [vmem:[#allocation7 + $0x28] sm:$0xff]
    %v1137 = vld [vmem:[#allocation7 + $0x30] sm:$0xff]
    %v1138 = vld [vmem:[#allocation7 + $0x38] sm:$0xff]
    %v1139 = vld [vmem:[#allocation7 + $0x40] sm:$0xff]
    %v1140 = vld [vmem:[#allocation7 + $0x48] sm:$0xff]
    %v1141 = vld [vmem:[#allocation7 + $0x50] sm:$0xff]
    %v1142 = vld [vmem:[#allocation7 + $0x58] sm:$0xff]
    %v1143 = vld [vmem:[#allocation7 + $0x60] sm:$0xff]
    %v1144 = vld [vmem:[#allocation7 + $0x68] sm:$0xff]
    %v1145 = vld [vmem:[#allocation7 + $0x70] sm:$0xff]
    %v1146 = vld [vmem:[#allocation7 + $0x78] sm:$0xff]
    %v1147 = vld [vmem:[#allocation7 + $0x80] sm:$0xff]
    %v1148 = vld [vmem:[#allocation7 + $0x88] sm:$0xff]
    %v1149 = vld [vmem:[#allocation7 + $0x90] sm:$0xff]
    %v1150 = vld [vmem:[#allocation7 + $0x98] sm:$0xff]
    %v1151 = vld [vmem:[#allocation7 + $0xa0] sm:$0xff]
    %v1152 = vld [vmem:[#allocation7 + $0xa8] sm:$0xff]
    %v1153 = vld [vmem:[#allocation7 + $0xb0] sm:$0xff]
    %v1154 = vld [vmem:[#allocation7 + $0xb8] sm:$0xff]
    %v1155 = vld [vmem:[#allocation7 + $0xc0] sm:$0xff]
    %v1156 = vld [vmem:[#allocation7 + $0xc8] sm:$0xff]
    %v1157 = vld [vmem:[#allocation7 + $0xd0] sm:$0xff]
    %v1158 = vld [vmem:[#allocation7 + $0xd8] sm:$0xff]
    %v1159 = vld [vmem:[#allocation7 + $0xe0] sm:$0xff]
    %v1160 = vld [vmem:[#allocation7 + $0xe8] sm:$0xff]
    %v1161 = vld [vmem:[#allocation7 + $0xf0] sm:$0xff]
    %v1162 = vld [vmem:[#allocation7 + $0xf8] sm:$0xff]
    %v1163 = vld [vmem:[#allocation7 + $0x100] sm:$0xff]
    %v1164 = vld [vmem:[#allocation7 + $0x108] sm:$0xff]
    %v1165 = vld [vmem:[#allocation7 + $0x110] sm:$0xff]
    %v1166 = vld [vmem:[#allocation7 + $0x118] sm:$0xff]
    %v1167 = vld [vmem:[#allocation7 + $0x120] sm:$0xff]
    %v1168 = vld [vmem:[#allocation7 + $0x128] sm:$0xff]
    %v1169 = vld [vmem:[#allocation7 + $0x130] sm:$0xff]
    %v1170 = vld [vmem:[#allocation7 + $0x138] sm:$0xff]
    %v1171 = vld [vmem:[#allocation7 + $0x140] sm:$0xff]
    %v1172 = vld [vmem:[#allocation7 + $0x148] sm:$0xff]
    %v1173 = vld [vmem:[#allocation7 + $0x150] sm:$0xff]
    %v1174 = vld [vmem:[#allocation7 + $0x158] sm:$0xff]
    %v1175 = vld [vmem:[#allocation7 + $0x160] sm:$0xff]
    %v1176 = vld [vmem:[#allocation7 + $0x168] sm:$0xff]
    %v1177 = vld [vmem:[#allocation7 + $0x170] sm:$0xff]
    %v1178 = vld [vmem:[#allocation7 + $0x178] sm:$0xff]
    %v1179 = vld [vmem:[#allocation7 + $0x180] sm:$0xff]
    %v1180 = vld [vmem:[#allocation7 + $0x188] sm:$0xff]
    %v1181 = vld [vmem:[#allocation7 + $0x190] sm:$0xff]
    %v1182 = vld [vmem:[#allocation7 + $0x198] sm:$0xff]
    %v1183 = vld [vmem:[#allocation7 + $0x1a0] sm:$0xff]
    %v1184 = vld [vmem:[#allocation7 + $0x1a8] sm:$0xff]
    %v1185 = vld [vmem:[#allocation7 + $0x1b0] sm:$0xff]
    %v1186 = vld [vmem:[#allocation7 + $0x1b8] sm:$0xff]
    %v1187 = vld [vmem:[#allocation7 + $0x1c0] sm:$0xff]
    %v1188 = vld [vmem:[#allocation7 + $0x1c8] sm:$0xff]
    %v1189 = vld [vmem:[#allocation7 + $0x1d0] sm:$0xff]
    %v1190 = vld [vmem:[#allocation7 + $0x1d8] sm:$0xff]
    %v1191 = vld [vmem:[#allocation7 + $0x1e0] sm:$0xff]
    %v1192 = vld [vmem:[#allocation7 + $0x1e8] sm:$0xff]
    %v1193 = vld [vmem:[#allocation7 + $0x1f0] sm:$0xff]
    %v1194 = vld [vmem:[#allocation7 + $0x1f8] sm:$0xff]
    %v1195 = vld [vmem:[#allocation7 + $0x200] sm:$0xff]
    %v1196 = vld [vmem:[#allocation7 + $0x208] sm:$0xff]
    %v1197 = vld [vmem:[#allocation7 + $0x210] sm:$0xff]
    %v1198 = vld [vmem:[#allocation7 + $0x218] sm:$0xff]
    %v1199 = vld [vmem:[#allocation7 + $0x220] sm:$0xff]
    %v1200 = vld [vmem:[#allocation7 + $0x228] sm:$0xff]
    %v1201 = vld [vmem:[#allocation7 + $0x230] sm:$0xff]
    %v1202 = vld [vmem:[#allocation7 + $0x238] sm:$0xff]
    %v1203 = vld [vmem:[#allocation7 + $0x240] sm:$0xff]
    %v1204 = vld [vmem:[#allocation7 + $0x248] sm:$0xff]
    %v1205 = vld [vmem:[#allocation7 + $0x250] sm:$0xff]
    %v1206 = vld [vmem:[#allocation7 + $0x258] sm:$0xff]
    %v1207 = vld [vmem:[#allocation7 + $0x260] sm:$0xff]
    %v1208 = vld [vmem:[#allocation7 + $0x268] sm:$0xff]
    %v1209 = vld [vmem:[#allocation7 + $0x270] sm:$0xff]
    %v1210 = vld [vmem:[#allocation7 + $0x278] sm:$0xff]
    %v1211 = vld [vmem:[#allocation7 + $0x280] sm:$0xff]
    %v1212 = vld [vmem:[#allocation7 + $0x288] sm:$0xff]
    %v1213 = vld [vmem:[#allocation7 + $0x290] sm:$0xff]
    %v1214 = vld [vmem:[#allocation7 + $0x298] sm:$0xff]
    %v1215 = vld [vmem:[#allocation7 + $0x2a0] sm:$0xff]
    %v1216 = vld [vmem:[#allocation7 + $0x2a8] sm:$0xff]
    %v1217 = vld [vmem:[#allocation7 + $0x2b0] sm:$0xff]
    %v1218 = vld [vmem:[#allocation7 + $0x2b8] sm:$0xff]
    %v1219 = vld [vmem:[#allocation7 + $0x2c0] sm:$0xff]
    %v1220 = vld [vmem:[#allocation7 + $0x2c8] sm:$0xff]
    %v1221 = vld [vmem:[#allocation7 + $0x2d0] sm:$0xff]
    %v1222 = vld [vmem:[#allocation7 + $0x2d8] sm:$0xff]
    %v1223 = vld [vmem:[#allocation7 + $0x2e0] sm:$0xff]
    %v1224 = vld [vmem:[#allocation7 + $0x2e8] sm:$0xff]
    %v1225 = vld [vmem:[#allocation7 + $0x2f0] sm:$0xff]
    %v1226 = vld [vmem:[#allocation7 + $0x2f8] sm:$0xff]
    %v1227 = vld [vmem:[#allocation7 + $0x300] sm:$0xff]
    %v1228 = vld [vmem:[#allocation7 + $0x308] sm:$0xff]
    %v1229 = vld [vmem:[#allocation7 + $0x310] sm:$0xff]
    %v1230 = vld [vmem:[#allocation7 + $0x318] sm:$0xff]
    %v1231 = vld [vmem:[#allocation7 + $0x320] sm:$0xff]
    %v1232 = vld [vmem:[#allocation7 + $0x328] sm:$0xff]
    %v1233 = vld [vmem:[#allocation7 + $0x330] sm:$0xff]
    %v1234 = vld [vmem:[#allocation7 + $0x338] sm:$0xff]
    %v1235 = vld [vmem:[#allocation7 + $0x340] sm:$0xff]
    %v1236 = vld [vmem:[#allocation7 + $0x348] sm:$0xff]
    %v1237 = vld [vmem:[#allocation7 + $0x350] sm:$0xff]
    %v1238 = vld [vmem:[#allocation7 + $0x358] sm:$0xff]
    %v1239 = vld [vmem:[#allocation7 + $0x360] sm:$0xff]
    %v1240 = vld [vmem:[#allocation7 + $0x368] sm:$0xff]
    %v1241 = vld [vmem:[#allocation7 + $0x370] sm:$0xff]
    %v1242 = vld [vmem:[#allocation7 + $0x378] sm:$0xff]
    %v1243 = vld [vmem:[#allocation7 + $0x380] sm:$0xff]
    %v1244 = vld [vmem:[#allocation7 + $0x388] sm:$0xff]
    %v1245 = vld [vmem:[#allocation7 + $0x390] sm:$0xff]
    %v1246 = vld [vmem:[#allocation7 + $0x398] sm:$0xff]
    %v1247 = vld [vmem:[#allocation7 + $0x3a0] sm:$0xff]
    %v1248 = vld [vmem:[#allocation7 + $0x3a8] sm:$0xff]
    %v1249 = vld [vmem:[#allocation7 + $0x3b0] sm:$0xff]
    %v1250 = vld [vmem:[#allocation7 + $0x3b8] sm:$0xff]
    %v1251 = vld [vmem:[#allocation7 + $0x3c0] sm:$0xff]
    %v1252 = vld [vmem:[#allocation7 + $0x3c8] sm:$0xff]
    %v1253 = vld [vmem:[#allocation7 + $0x3d0] sm:$0xff]
    %v1254 = vld [vmem:[#allocation7 + $0x3d8] sm:$0xff]
    %v1255 = vld [vmem:[#allocation7 + $0x3e0] sm:$0xff]
    %v1256 = vld [vmem:[#allocation7 + $0x3e8] sm:$0xff]
    %v1257 = vld [vmem:[#allocation7 + $0x3f0] sm:$0xff]
    %v1258 = vld [vmem:[#allocation7 + $0x3f8] sm:$0xff]
    %v1259 = vld [vmem:[#allocation7 + $0x400] sm:$0xff]
    %v1260 = vld [vmem:[#allocation7 + $0x408] sm:$0xff]
    %v1261 = vld [vmem:[#allocation7 + $0x410] sm:$0xff]
    %v1262 = vld [vmem:[#allocation7 + $0x418] sm:$0xff]
    %v1263 = vld [vmem:[#allocation7 + $0x420] sm:$0xff]
    %v1264 = vld [vmem:[#allocation7 + $0x428] sm:$0xff]
    %v1265 = vld [vmem:[#allocation7 + $0x430] sm:$0xff]
    %v1266 = vld [vmem:[#allocation7 + $0x438] sm:$0xff]
    %v1267 = vld [vmem:[#allocation7 + $0x440] sm:$0xff]
    %v1268 = vld [vmem:[#allocation7 + $0x448] sm:$0xff]
    %v1269 = vld [vmem:[#allocation7 + $0x450] sm:$0xff]
    %v1270 = vld [vmem:[#allocation7 + $0x458] sm:$0xff]
    %v1271 = vld [vmem:[#allocation7 + $0x460] sm:$0xff]
    %v1272 = vld [vmem:[#allocation7 + $0x468] sm:$0xff]
    %v1273 = vld [vmem:[#allocation7 + $0x470] sm:$0xff]
    %v1274 = vld [vmem:[#allocation7 + $0x478] sm:$0xff]
    %v1275 = vld [vmem:[#allocation7 + $0x480] sm:$0xff]
    %v1276 = vld [vmem:[#allocation7 + $0x488] sm:$0xff]
    %v1277 = vld [vmem:[#allocation7 + $0x490] sm:$0xff]
    %v1278 = vld [vmem:[#allocation7 + $0x498] sm:$0xff]
    %v1279 = vld [vmem:[#allocation7 + $0x4a0] sm:$0xff]
    %v1280 = vld [vmem:[#allocation7 + $0x4a8] sm:$0xff]
    %v1281 = vld [vmem:[#allocation7 + $0x4b0] sm:$0xff]
    %v1282 = vld [vmem:[#allocation7 + $0x4b8] sm:$0xff]
    %v1283 = vld [vmem:[#allocation7 + $0x4c0] sm:$0xff]
    %v1284 = vld [vmem:[#allocation7 + $0x4c8] sm:$0xff]
    %v1285 = vld [vmem:[#allocation7 + $0x4d0] sm:$0xff]
    %v1286 = vld [vmem:[#allocation7 + $0x4d8] sm:$0xff]
    %v1287 = vld [vmem:[#allocation7 + $0x4e0] sm:$0xff]
    %v1288 = vld [vmem:[#allocation7 + $0x4e8] sm:$0xff]
    %v1289 = vld [vmem:[#allocation7 + $0x4f0] sm:$0xff]
    %v1290 = vld [vmem:[#allocation7 + $0x4f8] sm:$0xff]
    %v1291 = vld [vmem:[#allocation7 + $0x500] sm:$0xff]
    %v1292 = vld [vmem:[#allocation7 + $0x508] sm:$0xff]
    %v1293 = vld [vmem:[#allocation7 + $0x510] sm:$0xff]
    %v1294 = vld [vmem:[#allocation7 + $0x518] sm:$0xff]
    %v1295 = vld [vmem:[#allocation7 + $0x520] sm:$0xff]
    %v1296 = vld [vmem:[#allocation7 + $0x528] sm:$0xff]
    %v1297 = vld [vmem:[#allocation7 + $0x530] sm:$0xff]
    %v1298 = vld [vmem:[#allocation7 + $0x538] sm:$0xff]
    %v1299 = vld [vmem:[#allocation7 + $0x540] sm:$0xff]
    %v1300 = vld [vmem:[#allocation7 + $0x548] sm:$0xff]
    %v1301 = vld [vmem:[#allocation7 + $0x550] sm:$0xff]
    %v1302 = vld [vmem:[#allocation7 + $0x558] sm:$0xff]
    %v1303 = vld [vmem:[#allocation7 + $0x560] sm:$0xff]
    %v1304 = vld [vmem:[#allocation7 + $0x568] sm:$0xff]
    %v1305 = vld [vmem:[#allocation7 + $0x570] sm:$0xff]
    %v1306 = vld [vmem:[#allocation7 + $0x578] sm:$0xff]
    %v1307 = vld [vmem:[#allocation7 + $0x580] sm:$0xff]
    %v1308 = vld [vmem:[#allocation7 + $0x588] sm:$0xff]
    %v1309 = vld [vmem:[#allocation7 + $0x590] sm:$0xff]
    %v1310 = vld [vmem:[#allocation7 + $0x598] sm:$0xff]
    %v1311 = vld [vmem:[#allocation7 + $0x5a0] sm:$0xff]
    %v1312 = vld [vmem:[#allocation7 + $0x5a8] sm:$0xff]
    %v1313 = vld [vmem:[#allocation7 + $0x5b0] sm:$0xff]
    %v1314 = vld [vmem:[#allocation7 + $0x5b8] sm:$0xff]
    %v1315 = vld [vmem:[#allocation7 + $0x5c0] sm:$0xff]
    %v1316 = vld [vmem:[#allocation7 + $0x5c8] sm:$0xff]
    %v1317 = vld [vmem:[#allocation7 + $0x5d0] sm:$0xff]
    %v1318 = vld [vmem:[#allocation7 + $0x5d8] sm:$0xff]
    %v1319 = vld [vmem:[#allocation7 + $0x5e0] sm:$0xff]
    %v1320 = vld [vmem:[#allocation7 + $0x5e8] sm:$0xff]
    %v1321 = vld [vmem:[#allocation7 + $0x5f0] sm:$0xff]
    %v1322 = vld [vmem:[#allocation7 + $0x5f8] sm:$0xff]
    %v1323 = vld [vmem:[#allocation7 + $0x600] sm:$0xff]
    %v1324 = vld [vmem:[#allocation7 + $0x608] sm:$0xff]
    %v1325 = vld [vmem:[#allocation7 + $0x610] sm:$0xff]
    %v1326 = vld [vmem:[#allocation7 + $0x618] sm:$0xff]
    %v1327 = vld [vmem:[#allocation7 + $0x620] sm:$0xff]
    %v1328 = vld [vmem:[#allocation7 + $0x628] sm:$0xff]
    %v1329 = vld [vmem:[#allocation7 + $0x630] sm:$0xff]
    %v1330 = vld [vmem:[#allocation7 + $0x638] sm:$0xff]
    %v1331 = vld [vmem:[#allocation7 + $0x640] sm:$0xff]
    %v1332 = vld [vmem:[#allocation7 + $0x648] sm:$0xff]
    %v1333 = vld [vmem:[#allocation7 + $0x650] sm:$0xff]
    %v1334 = vld [vmem:[#allocation7 + $0x658] sm:$0xff]
    %v1335 = vld [vmem:[#allocation7 + $0x660] sm:$0xff]
    %v1336 = vld [vmem:[#allocation7 + $0x668] sm:$0xff]
    %v1337 = vld [vmem:[#allocation7 + $0x670] sm:$0xff]
    %v1338 = vld [vmem:[#allocation7 + $0x678] sm:$0xff]
    %v1339 = vld [vmem:[#allocation7 + $0x680] sm:$0xff]
    %v1340 = vld [vmem:[#allocation7 + $0x688] sm:$0xff]
    %v1341 = vld [vmem:[#allocation7 + $0x690] sm:$0xff]
    %v1342 = vld [vmem:[#allocation7 + $0x698] sm:$0xff]
    %v1343 = vld [vmem:[#allocation7 + $0x6a0] sm:$0xff]
    %v1344 = vld [vmem:[#allocation7 + $0x6a8] sm:$0xff]
    %v1345 = vld [vmem:[#allocation7 + $0x6b0] sm:$0xff]
    %v1346 = vld [vmem:[#allocation7 + $0x6b8] sm:$0xff]
    %v1347 = vld [vmem:[#allocation7 + $0x6c0] sm:$0xff]
    %v1348 = vld [vmem:[#allocation7 + $0x6c8] sm:$0xff]
    %v1349 = vld [vmem:[#allocation7 + $0x6d0] sm:$0xff]
    %v1350 = vld [vmem:[#allocation7 + $0x6d8] sm:$0xff]
    %v1351 = vld [vmem:[#allocation7 + $0x6e0] sm:$0xff]
    %v1352 = vld [vmem:[#allocation7 + $0x6e8] sm:$0xff]
    %v1353 = vld [vmem:[#allocation7 + $0x6f0] sm:$0xff]
    %v1354 = vld [vmem:[#allocation7 + $0x6f8] sm:$0xff]
    %v1355 = vld [vmem:[#allocation7 + $0x700] sm:$0xff]
    %v1356 = vld [vmem:[#allocation7 + $0x708] sm:$0xff]
    %v1357 = vld [vmem:[#allocation7 + $0x710] sm:$0xff]
    %v1358 = vld [vmem:[#allocation7 + $0x718] sm:$0xff]
    %v1359 = vld [vmem:[#allocation7 + $0x720] sm:$0xff]
    %v1360 = vld [vmem:[#allocation7 + $0x728] sm:$0xff]
    %v1361 = vld [vmem:[#allocation7 + $0x730] sm:$0xff]
    %v1362 = vld [vmem:[#allocation7 + $0x738] sm:$0xff]
    %v1363 = vld [vmem:[#allocation7 + $0x740] sm:$0xff]
    %v1364 = vld [vmem:[#allocation7 + $0x748] sm:$0xff]
    %v1365 = vld [vmem:[#allocation7 + $0x750] sm:$0xff]
    %v1366 = vld [vmem:[#allocation7 + $0x758] sm:$0xff]
    %v1367 = vld [vmem:[#allocation7 + $0x760] sm:$0xff]
    %v1368 = vld [vmem:[#allocation7 + $0x768] sm:$0xff]
    %v1369 = vld [vmem:[#allocation7 + $0x770] sm:$0xff]
    %v1370 = vld [vmem:[#allocation7 + $0x778] sm:$0xff]
    %v1371 = vld [vmem:[#allocation7 + $0x780] sm:$0xff]
    %v1372 = vld [vmem:[#allocation7 + $0x788] sm:$0xff]
    %v1373 = vld [vmem:[#allocation7 + $0x790] sm:$0xff]
    %v1374 = vld [vmem:[#allocation7 + $0x798] sm:$0xff]
    %v1375 = vld [vmem:[#allocation7 + $0x7a0] sm:$0xff]
    %v1376 = vld [vmem:[#allocation7 + $0x7a8] sm:$0xff]
    %v1377 = vld [vmem:[#allocation7 + $0x7b0] sm:$0xff]
    %v1378 = vld [vmem:[#allocation7 + $0x7b8] sm:$0xff]
    %v1379 = vld [vmem:[#allocation7 + $0x7c0] sm:$0xff]
    %v1380 = vld [vmem:[#allocation7 + $0x7c8] sm:$0xff]
    %v1381 = vld [vmem:[#allocation7 + $0x7d0] sm:$0xff]
    %v1382 = vld [vmem:[#allocation7 + $0x7d8] sm:$0xff]
    %v1383 = vld [vmem:[#allocation7 + $0x7e0] sm:$0xff]
    %v1384 = vld [vmem:[#allocation7 + $0x7e8] sm:$0xff]
    %v1385 = vld [vmem:[#allocation7 + $0x7f0] sm:$0xff]
    %v1386 = vld [vmem:[#allocation7 + $0x7f8] sm:$0xff]
    %v1387 = vpack.c.bf16 %v1123, %v1115
    %v1388 = vpack.c.bf16 %v1124, %v1116
    %v1389 = vpack.c.bf16 %v1125, %v1117
    %v1390 = vpack.c.bf16 %v1126, %v1118
    %v1391 = vpack.c.bf16 %v1127, %v1119
    %v1392 = vpack.c.bf16 %v1128, %v1120
    %v1393 = vpack.c.bf16 %v1129, %v1121
    %v1394 = vpack.c.bf16 %v1130, %v1122
    %v1651 = vunpack.c.l.b16 %v1131
    %v1652 = vunpack.c.h.b16 %v1131
    %v1653 = vunpack.c.l.b16 %v1132
    %v1654 = vunpack.c.h.b16 %v1132
    %v1655 = vunpack.c.l.b16 %v1133
    %v1656 = vunpack.c.h.b16 %v1133
    %v1657 = vunpack.c.l.b16 %v1134
    %v1658 = vunpack.c.h.b16 %v1134
    %v1659 = vunpack.c.l.b16 %v1135
    %v1660 = vunpack.c.h.b16 %v1135
    %v1661 = vunpack.c.l.b16 %v1136
    %v1662 = vunpack.c.h.b16 %v1136
    %v1663 = vunpack.c.l.b16 %v1137
    %v1664 = vunpack.c.h.b16 %v1137
    %v1665 = vunpack.c.l.b16 %v1138
    %v1666 = vunpack.c.h.b16 %v1138
    %v1667 = vunpack.c.l.b16 %v1139
    %v1668 = vunpack.c.h.b16 %v1139
    %v1669 = vunpack.c.l.b16 %v1140
    %v1670 = vunpack.c.h.b16 %v1140
    %v1671 = vunpack.c.l.b16 %v1141
    %v1672 = vunpack.c.h.b16 %v1141
    %v1673 = vunpack.c.l.b16 %v1142
    %v1674 = vunpack.c.h.b16 %v1142
    %v1675 = vunpack.c.l.b16 %v1143
    %v1676 = vunpack.c.h.b16 %v1143
    %v1677 = vunpack.c.l.b16 %v1144
    %v1678 = vunpack.c.h.b16 %v1144
    %v1679 = vunpack.c.l.b16 %v1145
    %v1680 = vunpack.c.h.b16 %v1145
    %v1681 = vunpack.c.l.b16 %v1146
    %v1682 = vunpack.c.h.b16 %v1146
    %v1683 = vunpack.c.l.b16 %v1147
    %v1684 = vunpack.c.h.b16 %v1147
    %v1685 = vunpack.c.l.b16 %v1148
    %v1686 = vunpack.c.h.b16 %v1148
    %v1687 = vunpack.c.l.b16 %v1149
    %v1688 = vunpack.c.h.b16 %v1149
    %v1689 = vunpack.c.l.b16 %v1150
    %v1690 = vunpack.c.h.b16 %v1150
    %v1691 = vunpack.c.l.b16 %v1151
    %v1692 = vunpack.c.h.b16 %v1151
    %v1693 = vunpack.c.l.b16 %v1152
    %v1694 = vunpack.c.h.b16 %v1152
    %v1695 = vunpack.c.l.b16 %v1153
    %v1696 = vunpack.c.h.b16 %v1153
    %v1697 = vunpack.c.l.b16 %v1154
    %v1698 = vunpack.c.h.b16 %v1154
    %v1699 = vunpack.c.l.b16 %v1155
    %v1700 = vunpack.c.h.b16 %v1155
    %v1701 = vunpack.c.l.b16 %v1156
    %v1702 = vunpack.c.h.b16 %v1156
    %v1703 = vunpack.c.l.b16 %v1157
    %v1704 = vunpack.c.h.b16 %v1157
    %v1705 = vunpack.c.l.b16 %v1158
    %v1706 = vunpack.c.h.b16 %v1158
    %v1707 = vunpack.c.l.b16 %v1159
    %v1708 = vunpack.c.h.b16 %v1159
    %v1709 = vunpack.c.l.b16 %v1160
    %v1710 = vunpack.c.h.b16 %v1160
    %v1711 = vunpack.c.l.b16 %v1161
    %v1712 = vunpack.c.h.b16 %v1161
    %v1713 = vunpack.c.l.b16 %v1162
    %v1714 = vunpack.c.h.b16 %v1162
    %v1715 = vunpack.c.l.b16 %v1163
    %v1716 = vunpack.c.h.b16 %v1163
    %v1717 = vunpack.c.l.b16 %v1164
    %v1718 = vunpack.c.h.b16 %v1164
    %v1719 = vunpack.c.l.b16 %v1165
    %v1720 = vunpack.c.h.b16 %v1165
    %v1721 = vunpack.c.l.b16 %v1166
    %v1722 = vunpack.c.h.b16 %v1166
    %v1723 = vunpack.c.l.b16 %v1167
    %v1724 = vunpack.c.h.b16 %v1167
    %v1725 = vunpack.c.l.b16 %v1168
    %v1726 = vunpack.c.h.b16 %v1168
    %v1727 = vunpack.c.l.b16 %v1169
    %v1728 = vunpack.c.h.b16 %v1169
    %v1729 = vunpack.c.l.b16 %v1170
    %v1730 = vunpack.c.h.b16 %v1170
    %v1731 = vunpack.c.l.b16 %v1171
    %v1732 = vunpack.c.h.b16 %v1171
    %v1733 = vunpack.c.l.b16 %v1172
    %v1734 = vunpack.c.h.b16 %v1172
    %v1735 = vunpack.c.l.b16 %v1173
    %v1736 = vunpack.c.h.b16 %v1173
    %v1737 = vunpack.c.l.b16 %v1174
    %v1738 = vunpack.c.h.b16 %v1174
    %v1739 = vunpack.c.l.b16 %v1175
    %v1740 = vunpack.c.h.b16 %v1175
    %v1741 = vunpack.c.l.b16 %v1176
    %v1742 = vunpack.c.h.b16 %v1176
    %v1743 = vunpack.c.l.b16 %v1177
    %v1744 = vunpack.c.h.b16 %v1177
    %v1745 = vunpack.c.l.b16 %v1178
    %v1746 = vunpack.c.h.b16 %v1178
    %v1747 = vunpack.c.l.b16 %v1179
    %v1748 = vunpack.c.h.b16 %v1179
    %v1749 = vunpack.c.l.b16 %v1180
    %v1750 = vunpack.c.h.b16 %v1180
    %v1751 = vunpack.c.l.b16 %v1181
    %v1752 = vunpack.c.h.b16 %v1181
    %v1753 = vunpack.c.l.b16 %v1182
    %v1754 = vunpack.c.h.b16 %v1182
    %v1755 = vunpack.c.l.b16 %v1183
    %v1756 = vunpack.c.h.b16 %v1183
    %v1757 = vunpack.c.l.b16 %v1184
    %v1758 = vunpack.c.h.b16 %v1184
    %v1759 = vunpack.c.l.b16 %v1185
    %v1760 = vunpack.c.h.b16 %v1185
    %v1761 = vunpack.c.l.b16 %v1186
    %v1762 = vunpack.c.h.b16 %v1186
    %v1763 = vunpack.c.l.b16 %v1187
    %v1764 = vunpack.c.h.b16 %v1187
    %v1765 = vunpack.c.l.b16 %v1188
    %v1766 = vunpack.c.h.b16 %v1188
    %v1767 = vunpack.c.l.b16 %v1189
    %v1768 = vunpack.c.h.b16 %v1189
    %v1769 = vunpack.c.l.b16 %v1190
    %v1770 = vunpack.c.h.b16 %v1190
    %v1771 = vunpack.c.l.b16 %v1191
    %v1772 = vunpack.c.h.b16 %v1191
    %v1773 = vunpack.c.l.b16 %v1192
    %v1774 = vunpack.c.h.b16 %v1192
    %v1775 = vunpack.c.l.b16 %v1193
    %v1776 = vunpack.c.h.b16 %v1193
    %v1777 = vunpack.c.l.b16 %v1194
    %v1778 = vunpack.c.h.b16 %v1194
    %v1779 = vunpack.c.l.b16 %v1195
    %v1780 = vunpack.c.h.b16 %v1195
    %v1781 = vunpack.c.l.b16 %v1196
    %v1782 = vunpack.c.h.b16 %v1196
    %v1783 = vunpack.c.l.b16 %v1197
    %v1784 = vunpack.c.h.b16 %v1197
    %v1785 = vunpack.c.l.b16 %v1198
    %v1786 = vunpack.c.h.b16 %v1198
    %v1787 = vunpack.c.l.b16 %v1199
    %v1788 = vunpack.c.h.b16 %v1199
    %v1789 = vunpack.c.l.b16 %v1200
    %v1790 = vunpack.c.h.b16 %v1200
    %v1791 = vunpack.c.l.b16 %v1201
    %v1792 = vunpack.c.h.b16 %v1201
    %v1793 = vunpack.c.l.b16 %v1202
    %v1794 = vunpack.c.h.b16 %v1202
    %v1795 = vunpack.c.l.b16 %v1203
    %v1796 = vunpack.c.h.b16 %v1203
    %v1797 = vunpack.c.l.b16 %v1204
    %v1798 = vunpack.c.h.b16 %v1204
    %v1799 = vunpack.c.l.b16 %v1205
    %v1800 = vunpack.c.h.b16 %v1205
    %v1801 = vunpack.c.l.b16 %v1206
    %v1802 = vunpack.c.h.b16 %v1206
    %v1803 = vunpack.c.l.b16 %v1207
    %v1804 = vunpack.c.h.b16 %v1207
    %v1805 = vunpack.c.l.b16 %v1208
    %v1806 = vunpack.c.h.b16 %v1208
    %v1807 = vunpack.c.l.b16 %v1209
    %v1808 = vunpack.c.h.b16 %v1209
    %v1809 = vunpack.c.l.b16 %v1210
    %v1810 = vunpack.c.h.b16 %v1210
    %v1811 = vunpack.c.l.b16 %v1211
    %v1812 = vunpack.c.h.b16 %v1211
    %v1813 = vunpack.c.l.b16 %v1212
    %v1814 = vunpack.c.h.b16 %v1212
    %v1815 = vunpack.c.l.b16 %v1213
    %v1816 = vunpack.c.h.b16 %v1213
    %v1817 = vunpack.c.l.b16 %v1214
    %v1818 = vunpack.c.h.b16 %v1214
    %v1819 = vunpack.c.l.b16 %v1215
    %v1820 = vunpack.c.h.b16 %v1215
    %v1821 = vunpack.c.l.b16 %v1216
    %v1822 = vunpack.c.h.b16 %v1216
    %v1823 = vunpack.c.l.b16 %v1217
    %v1824 = vunpack.c.h.b16 %v1217
    %v1825 = vunpack.c.l.b16 %v1218
    %v1826 = vunpack.c.h.b16 %v1218
    %v1827 = vunpack.c.l.b16 %v1219
    %v1828 = vunpack.c.h.b16 %v1219
    %v1829 = vunpack.c.l.b16 %v1220
    %v1830 = vunpack.c.h.b16 %v1220
    %v1831 = vunpack.c.l.b16 %v1221
    %v1832 = vunpack.c.h.b16 %v1221
    %v1833 = vunpack.c.l.b16 %v1222
    %v1834 = vunpack.c.h.b16 %v1222
    %v1835 = vunpack.c.l.b16 %v1223
    %v1836 = vunpack.c.h.b16 %v1223
    %v1837 = vunpack.c.l.b16 %v1224
    %v1838 = vunpack.c.h.b16 %v1224
    %v1839 = vunpack.c.l.b16 %v1225
    %v1840 = vunpack.c.h.b16 %v1225
    %v1841 = vunpack.c.l.b16 %v1226
    %v1842 = vunpack.c.h.b16 %v1226
    %v1843 = vunpack.c.l.b16 %v1227
    %v1844 = vunpack.c.h.b16 %v1227
    %v1845 = vunpack.c.l.b16 %v1228
    %v1846 = vunpack.c.h.b16 %v1228
    %v1847 = vunpack.c.l.b16 %v1229
    %v1848 = vunpack.c.h.b16 %v1229
    %v1849 = vunpack.c.l.b16 %v1230
    %v1850 = vunpack.c.h.b16 %v1230
    %v1851 = vunpack.c.l.b16 %v1231
    %v1852 = vunpack.c.h.b16 %v1231
    %v1853 = vunpack.c.l.b16 %v1232
    %v1854 = vunpack.c.h.b16 %v1232
    %v1855 = vunpack.c.l.b16 %v1233
    %v1856 = vunpack.c.h.b16 %v1233
    %v1857 = vunpack.c.l.b16 %v1234
    %v1858 = vunpack.c.h.b16 %v1234
    %v1859 = vunpack.c.l.b16 %v1235
    %v1860 = vunpack.c.h.b16 %v1235
    %v1861 = vunpack.c.l.b16 %v1236
    %v1862 = vunpack.c.h.b16 %v1236
    %v1863 = vunpack.c.l.b16 %v1237
    %v1864 = vunpack.c.h.b16 %v1237
    %v1865 = vunpack.c.l.b16 %v1238
    %v1866 = vunpack.c.h.b16 %v1238
    %v1867 = vunpack.c.l.b16 %v1239
    %v1868 = vunpack.c.h.b16 %v1239
    %v1869 = vunpack.c.l.b16 %v1240
    %v1870 = vunpack.c.h.b16 %v1240
    %v1871 = vunpack.c.l.b16 %v1241
    %v1872 = vunpack.c.h.b16 %v1241
    %v1873 = vunpack.c.l.b16 %v1242
    %v1874 = vunpack.c.h.b16 %v1242
    %v1875 = vunpack.c.l.b16 %v1243
    %v1876 = vunpack.c.h.b16 %v1243
    %v1877 = vunpack.c.l.b16 %v1244
    %v1878 = vunpack.c.h.b16 %v1244
    %v1879 = vunpack.c.l.b16 %v1245
    %v1880 = vunpack.c.h.b16 %v1245
    %v1881 = vunpack.c.l.b16 %v1246
    %v1882 = vunpack.c.h.b16 %v1246
    %v1883 = vunpack.c.l.b16 %v1247
    %v1884 = vunpack.c.h.b16 %v1247
    %v1885 = vunpack.c.l.b16 %v1248
    %v1886 = vunpack.c.h.b16 %v1248
    %v1887 = vunpack.c.l.b16 %v1249
    %v1888 = vunpack.c.h.b16 %v1249
    %v1889 = vunpack.c.l.b16 %v1250
    %v1890 = vunpack.c.h.b16 %v1250
    %v1891 = vunpack.c.l.b16 %v1251
    %v1892 = vunpack.c.h.b16 %v1251
    %v1893 = vunpack.c.l.b16 %v1252
    %v1894 = vunpack.c.h.b16 %v1252
    %v1895 = vunpack.c.l.b16 %v1253
    %v1896 = vunpack.c.h.b16 %v1253
    %v1897 = vunpack.c.l.b16 %v1254
    %v1898 = vunpack.c.h.b16 %v1254
    %v1899 = vunpack.c.l.b16 %v1255
    %v1900 = vunpack.c.h.b16 %v1255
    %v1901 = vunpack.c.l.b16 %v1256
    %v1902 = vunpack.c.h.b16 %v1256
    %v1903 = vunpack.c.l.b16 %v1257
    %v1904 = vunpack.c.h.b16 %v1257
    %v1905 = vunpack.c.l.b16 %v1258
    %v1906 = vunpack.c.h.b16 %v1258
    %v1907 = vunpack.c.l.b16 %v1259
    %v1908 = vunpack.c.h.b16 %v1259
    %v1909 = vunpack.c.l.b16 %v1260
    %v1910 = vunpack.c.h.b16 %v1260
    %v1911 = vunpack.c.l.b16 %v1261
    %v1912 = vunpack.c.h.b16 %v1261
    %v1913 = vunpack.c.l.b16 %v1262
    %v1914 = vunpack.c.h.b16 %v1262
    %v1915 = vunpack.c.l.b16 %v1263
    %v1916 = vunpack.c.h.b16 %v1263
    %v1917 = vunpack.c.l.b16 %v1264
    %v1918 = vunpack.c.h.b16 %v1264
    %v1919 = vunpack.c.l.b16 %v1265
    %v1920 = vunpack.c.h.b16 %v1265
    %v1921 = vunpack.c.l.b16 %v1266
    %v1922 = vunpack.c.h.b16 %v1266
    %v1923 = vunpack.c.l.b16 %v1267
    %v1924 = vunpack.c.h.b16 %v1267
    %v1925 = vunpack.c.l.b16 %v1268
    %v1926 = vunpack.c.h.b16 %v1268
    %v1927 = vunpack.c.l.b16 %v1269
    %v1928 = vunpack.c.h.b16 %v1269
    %v1929 = vunpack.c.l.b16 %v1270
    %v1930 = vunpack.c.h.b16 %v1270
    %v1931 = vunpack.c.l.b16 %v1271
    %v1932 = vunpack.c.h.b16 %v1271
    %v1933 = vunpack.c.l.b16 %v1272
    %v1934 = vunpack.c.h.b16 %v1272
    %v1935 = vunpack.c.l.b16 %v1273
    %v1936 = vunpack.c.h.b16 %v1273
    %v1937 = vunpack.c.l.b16 %v1274
    %v1938 = vunpack.c.h.b16 %v1274
    %v1939 = vunpack.c.l.b16 %v1275
    %v1940 = vunpack.c.h.b16 %v1275
    %v1941 = vunpack.c.l.b16 %v1276
    %v1942 = vunpack.c.h.b16 %v1276
    %v1943 = vunpack.c.l.b16 %v1277
    %v1944 = vunpack.c.h.b16 %v1277
    %v1945 = vunpack.c.l.b16 %v1278
    %v1946 = vunpack.c.h.b16 %v1278
    %v1947 = vunpack.c.l.b16 %v1279
    %v1948 = vunpack.c.h.b16 %v1279
    %v1949 = vunpack.c.l.b16 %v1280
    %v1950 = vunpack.c.h.b16 %v1280
    %v1951 = vunpack.c.l.b16 %v1281
    %v1952 = vunpack.c.h.b16 %v1281
    %v1953 = vunpack.c.l.b16 %v1282
    %v1954 = vunpack.c.h.b16 %v1282
    %v1955 = vunpack.c.l.b16 %v1283
    %v1956 = vunpack.c.h.b16 %v1283
    %v1957 = vunpack.c.l.b16 %v1284
    %v1958 = vunpack.c.h.b16 %v1284
    %v1959 = vunpack.c.l.b16 %v1285
    %v1960 = vunpack.c.h.b16 %v1285
    %v1961 = vunpack.c.l.b16 %v1286
    %v1962 = vunpack.c.h.b16 %v1286
    %v1963 = vunpack.c.l.b16 %v1287
    %v1964 = vunpack.c.h.b16 %v1287
    %v1965 = vunpack.c.l.b16 %v1288
    %v1966 = vunpack.c.h.b16 %v1288
    %v1967 = vunpack.c.l.b16 %v1289
    %v1968 = vunpack.c.h.b16 %v1289
    %v1969 = vunpack.c.l.b16 %v1290
    %v1970 = vunpack.c.h.b16 %v1290
    %v1971 = vunpack.c.l.b16 %v1291
    %v1972 = vunpack.c.h.b16 %v1291
    %v1973 = vunpack.c.l.b16 %v1292
    %v1974 = vunpack.c.h.b16 %v1292
    %v1975 = vunpack.c.l.b16 %v1293
    %v1976 = vunpack.c.h.b16 %v1293
    %v1977 = vunpack.c.l.b16 %v1294
    %v1978 = vunpack.c.h.b16 %v1294
    %v1979 = vunpack.c.l.b16 %v1295
    %v1980 = vunpack.c.h.b16 %v1295
    %v1981 = vunpack.c.l.b16 %v1296
    %v1982 = vunpack.c.h.b16 %v1296
    %v1983 = vunpack.c.l.b16 %v1297
    %v1984 = vunpack.c.h.b16 %v1297
    %v1985 = vunpack.c.l.b16 %v1298
    %v1986 = vunpack.c.h.b16 %v1298
    %v1987 = vunpack.c.l.b16 %v1299
    %v1988 = vunpack.c.h.b16 %v1299
    %v1989 = vunpack.c.l.b16 %v1300
    %v1990 = vunpack.c.h.b16 %v1300
    %v1991 = vunpack.c.l.b16 %v1301
    %v1992 = vunpack.c.h.b16 %v1301
    %v1993 = vunpack.c.l.b16 %v1302
    %v1994 = vunpack.c.h.b16 %v1302
    %v1995 = vunpack.c.l.b16 %v1303
    %v1996 = vunpack.c.h.b16 %v1303
    %v1997 = vunpack.c.l.b16 %v1304
    %v1998 = vunpack.c.h.b16 %v1304
    %v1999 = vunpack.c.l.b16 %v1305
    %v2000 = vunpack.c.h.b16 %v1305
    %v2001 = vunpack.c.l.b16 %v1306
    %v2002 = vunpack.c.h.b16 %v1306
    %v2003 = vunpack.c.l.b16 %v1307
    %v2004 = vunpack.c.h.b16 %v1307
    %v2005 = vunpack.c.l.b16 %v1308
    %v2006 = vunpack.c.h.b16 %v1308
    %v2007 = vunpack.c.l.b16 %v1309
    %v2008 = vunpack.c.h.b16 %v1309
    %v2009 = vunpack.c.l.b16 %v1310
    %v2010 = vunpack.c.h.b16 %v1310
    %v2011 = vunpack.c.l.b16 %v1311
    %v2012 = vunpack.c.h.b16 %v1311
    %v2013 = vunpack.c.l.b16 %v1312
    %v2014 = vunpack.c.h.b16 %v1312
    %v2015 = vunpack.c.l.b16 %v1313
    %v2016 = vunpack.c.h.b16 %v1313
    %v2017 = vunpack.c.l.b16 %v1314
    %v2018 = vunpack.c.h.b16 %v1314
    %v2019 = vunpack.c.l.b16 %v1315
    %v2020 = vunpack.c.h.b16 %v1315
    %v2021 = vunpack.c.l.b16 %v1316
    %v2022 = vunpack.c.h.b16 %v1316
    %v2023 = vunpack.c.l.b16 %v1317
    %v2024 = vunpack.c.h.b16 %v1317
    %v2025 = vunpack.c.l.b16 %v1318
    %v2026 = vunpack.c.h.b16 %v1318
    %v2027 = vunpack.c.l.b16 %v1319
    %v2028 = vunpack.c.h.b16 %v1319
    %v2029 = vunpack.c.l.b16 %v1320
    %v2030 = vunpack.c.h.b16 %v1320
    %v2031 = vunpack.c.l.b16 %v1321
    %v2032 = vunpack.c.h.b16 %v1321
    %v2033 = vunpack.c.l.b16 %v1322
    %v2034 = vunpack.c.h.b16 %v1322
    %v2035 = vunpack.c.l.b16 %v1323
    %v2036 = vunpack.c.h.b16 %v1323
    %v2037 = vunpack.c.l.b16 %v1324
    %v2038 = vunpack.c.h.b16 %v1324
    %v2039 = vunpack.c.l.b16 %v1325
    %v2040 = vunpack.c.h.b16 %v1325
    %v2041 = vunpack.c.l.b16 %v1326
    %v2042 = vunpack.c.h.b16 %v1326
    %v2043 = vunpack.c.l.b16 %v1327
    %v2044 = vunpack.c.h.b16 %v1327
    %v2045 = vunpack.c.l.b16 %v1328
    %v2046 = vunpack.c.h.b16 %v1328
    %v2047 = vunpack.c.l.b16 %v1329
    %v2048 = vunpack.c.h.b16 %v1329
    %v2049 = vunpack.c.l.b16 %v1330
    %v2050 = vunpack.c.h.b16 %v1330
    %v2051 = vunpack.c.l.b16 %v1331
    %v2052 = vunpack.c.h.b16 %v1331
    %v2053 = vunpack.c.l.b16 %v1332
    %v2054 = vunpack.c.h.b16 %v1332
    %v2055 = vunpack.c.l.b16 %v1333
    %v2056 = vunpack.c.h.b16 %v1333
    %v2057 = vunpack.c.l.b16 %v1334
    %v2058 = vunpack.c.h.b16 %v1334
    %v2059 = vunpack.c.l.b16 %v1335
    %v2060 = vunpack.c.h.b16 %v1335
    %v2061 = vunpack.c.l.b16 %v1336
    %v2062 = vunpack.c.h.b16 %v1336
    %v2063 = vunpack.c.l.b16 %v1337
    %v2064 = vunpack.c.h.b16 %v1337
    %v2065 = vunpack.c.l.b16 %v1338
    %v2066 = vunpack.c.h.b16 %v1338
    %v2067 = vunpack.c.l.b16 %v1339
    %v2068 = vunpack.c.h.b16 %v1339
    %v2069 = vunpack.c.l.b16 %v1340
    %v2070 = vunpack.c.h.b16 %v1340
    %v2071 = vunpack.c.l.b16 %v1341
    %v2072 = vunpack.c.h.b16 %v1341
    %v2073 = vunpack.c.l.b16 %v1342
    %v2074 = vunpack.c.h.b16 %v1342
    %v2075 = vunpack.c.l.b16 %v1343
    %v2076 = vunpack.c.h.b16 %v1343
    %v2077 = vunpack.c.l.b16 %v1344
    %v2078 = vunpack.c.h.b16 %v1344
    %v2079 = vunpack.c.l.b16 %v1345
    %v2080 = vunpack.c.h.b16 %v1345
    %v2081 = vunpack.c.l.b16 %v1346
    %v2082 = vunpack.c.h.b16 %v1346
    %v2083 = vunpack.c.l.b16 %v1347
    %v2084 = vunpack.c.h.b16 %v1347
    %v2085 = vunpack.c.l.b16 %v1348
    %v2086 = vunpack.c.h.b16 %v1348
    %v2087 = vunpack.c.l.b16 %v1349
    %v2088 = vunpack.c.h.b16 %v1349
    %v2089 = vunpack.c.l.b16 %v1350
    %v2090 = vunpack.c.h.b16 %v1350
    %v2091 = vunpack.c.l.b16 %v1351
    %v2092 = vunpack.c.h.b16 %v1351
    %v2093 = vunpack.c.l.b16 %v1352
    %v2094 = vunpack.c.h.b16 %v1352
    %v2095 = vunpack.c.l.b16 %v1353
    %v2096 = vunpack.c.h.b16 %v1353
    %v2097 = vunpack.c.l.b16 %v1354
    %v2098 = vunpack.c.h.b16 %v1354
    %v2099 = vunpack.c.l.b16 %v1355
    %v2100 = vunpack.c.h.b16 %v1355
    %v2101 = vunpack.c.l.b16 %v1356
    %v2102 = vunpack.c.h.b16 %v1356
    %v2103 = vunpack.c.l.b16 %v1357
    %v2104 = vunpack.c.h.b16 %v1357
    %v2105 = vunpack.c.l.b16 %v1358
    %v2106 = vunpack.c.h.b16 %v1358
    %v2107 = vunpack.c.l.b16 %v1359
    %v2108 = vunpack.c.h.b16 %v1359
    %v2109 = vunpack.c.l.b16 %v1360
    %v2110 = vunpack.c.h.b16 %v1360
    %v2111 = vunpack.c.l.b16 %v1361
    %v2112 = vunpack.c.h.b16 %v1361
    %v2113 = vunpack.c.l.b16 %v1362
    %v2114 = vunpack.c.h.b16 %v1362
    %v2115 = vunpack.c.l.b16 %v1363
    %v2116 = vunpack.c.h.b16 %v1363
    %v2117 = vunpack.c.l.b16 %v1364
    %v2118 = vunpack.c.h.b16 %v1364
    %v2119 = vunpack.c.l.b16 %v1365
    %v2120 = vunpack.c.h.b16 %v1365
    %v2121 = vunpack.c.l.b16 %v1366
    %v2122 = vunpack.c.h.b16 %v1366
    %v2123 = vunpack.c.l.b16 %v1367
    %v2124 = vunpack.c.h.b16 %v1367
    %v2125 = vunpack.c.l.b16 %v1368
    %v2126 = vunpack.c.h.b16 %v1368
    %v2127 = vunpack.c.l.b16 %v1369
    %v2128 = vunpack.c.h.b16 %v1369
    %v2129 = vunpack.c.l.b16 %v1370
    %v2130 = vunpack.c.h.b16 %v1370
    %v2131 = vunpack.c.l.b16 %v1371
    %v2132 = vunpack.c.h.b16 %v1371
    %v2133 = vunpack.c.l.b16 %v1372
    %v2134 = vunpack.c.h.b16 %v1372
    %v2135 = vunpack.c.l.b16 %v1373
    %v2136 = vunpack.c.h.b16 %v1373
    %v2137 = vunpack.c.l.b16 %v1374
    %v2138 = vunpack.c.h.b16 %v1374
    %v2139 = vunpack.c.l.b16 %v1375
    %v2140 = vunpack.c.h.b16 %v1375
    %v2141 = vunpack.c.l.b16 %v1376
    %v2142 = vunpack.c.h.b16 %v1376
    %v2143 = vunpack.c.l.b16 %v1377
    %v2144 = vunpack.c.h.b16 %v1377
    %v2145 = vunpack.c.l.b16 %v1378
    %v2146 = vunpack.c.h.b16 %v1378
    %v2147 = vunpack.c.l.b16 %v1379
    %v2148 = vunpack.c.h.b16 %v1379
    %v2149 = vunpack.c.l.b16 %v1380
    %v2150 = vunpack.c.h.b16 %v1380
    %v2151 = vunpack.c.l.b16 %v1381
    %v2152 = vunpack.c.h.b16 %v1381
    %v2153 = vunpack.c.l.b16 %v1382
    %v2154 = vunpack.c.h.b16 %v1382
    %v2155 = vunpack.c.l.b16 %v1383
    %v2156 = vunpack.c.h.b16 %v1383
    %v2157 = vunpack.c.l.b16 %v1384
    %v2158 = vunpack.c.h.b16 %v1384
    %v2159 = vunpack.c.l.b16 %v1385
    %v2160 = vunpack.c.h.b16 %v1385
    %v2161 = vunpack.c.l.b16 %v1386
    %v2162 = vunpack.c.h.b16 %v1386
    %v2163 = vpack.c.b16 %v1655, %v1651
    %v2164 = vpack.c.b16 %v1656, %v1652
    %v2165 = vpack.c.b16 %v1657, %v1653
    %v2166 = vpack.c.b16 %v1658, %v1654
    %v2167 = vpack.c.b16 %v1663, %v1659
    %v2168 = vpack.c.b16 %v1664, %v1660
    %v2169 = vpack.c.b16 %v1665, %v1661
    %v2170 = vpack.c.b16 %v1666, %v1662
    %v2171 = vpack.c.b16 %v1671, %v1667
    %v2172 = vpack.c.b16 %v1672, %v1668
    %v2173 = vpack.c.b16 %v1673, %v1669
    %v2174 = vpack.c.b16 %v1674, %v1670
    %v2175 = vpack.c.b16 %v1679, %v1675
    %v2176 = vpack.c.b16 %v1680, %v1676
    %v2177 = vpack.c.b16 %v1681, %v1677
    %v2178 = vpack.c.b16 %v1682, %v1678
    %v2179 = vpack.c.b16 %v1687, %v1683
    %v2180 = vpack.c.b16 %v1688, %v1684
    %v2181 = vpack.c.b16 %v1689, %v1685
    %v2182 = vpack.c.b16 %v1690, %v1686
    %v2183 = vpack.c.b16 %v1695, %v1691
    %v2184 = vpack.c.b16 %v1696, %v1692
    %v2185 = vpack.c.b16 %v1697, %v1693
    %v2186 = vpack.c.b16 %v1698, %v1694
    %v2187 = vpack.c.b16 %v1703, %v1699
    %v2188 = vpack.c.b16 %v1704, %v1700
    %v2189 = vpack.c.b16 %v1705, %v1701
    %v2190 = vpack.c.b16 %v1706, %v1702
    %v2191 = vpack.c.b16 %v1711, %v1707
    %v2192 = vpack.c.b16 %v1712, %v1708
    %v2193 = vpack.c.b16 %v1713, %v1709
    %v2194 = vpack.c.b16 %v1714, %v1710
    %v2195 = vpack.c.b16 %v1719, %v1715
    %v2196 = vpack.c.b16 %v1720, %v1716
    %v2197 = vpack.c.b16 %v1721, %v1717
    %v2198 = vpack.c.b16 %v1722, %v1718
    %v2199 = vpack.c.b16 %v1727, %v1723
    %v2200 = vpack.c.b16 %v1728, %v1724
    %v2201 = vpack.c.b16 %v1729, %v1725
    %v2202 = vpack.c.b16 %v1730, %v1726
    %v2203 = vpack.c.b16 %v1735, %v1731
    %v2204 = vpack.c.b16 %v1736, %v1732
    %v2205 = vpack.c.b16 %v1737, %v1733
    %v2206 = vpack.c.b16 %v1738, %v1734
    %v2207 = vpack.c.b16 %v1743, %v1739
    %v2208 = vpack.c.b16 %v1744, %v1740
    %v2209 = vpack.c.b16 %v1745, %v1741
    %v2210 = vpack.c.b16 %v1746, %v1742
    %v2211 = vpack.c.b16 %v1751, %v1747
    %v2212 = vpack.c.b16 %v1752, %v1748
    %v2213 = vpack.c.b16 %v1753, %v1749
    %v2214 = vpack.c.b16 %v1754, %v1750
    %v2215 = vpack.c.b16 %v1759, %v1755
    %v2216 = vpack.c.b16 %v1760, %v1756
    %v2217 = vpack.c.b16 %v1761, %v1757
    %v2218 = vpack.c.b16 %v1762, %v1758
    %v2219 = vpack.c.b16 %v1767, %v1763
    %v2220 = vpack.c.b16 %v1768, %v1764
    %v2221 = vpack.c.b16 %v1769, %v1765
    %v2222 = vpack.c.b16 %v1770, %v1766
    %v2223 = vpack.c.b16 %v1775, %v1771
    %v2224 = vpack.c.b16 %v1776, %v1772
    %v2225 = vpack.c.b16 %v1777, %v1773
    %v2226 = vpack.c.b16 %v1778, %v1774
    %v2227 = vpack.c.b16 %v1783, %v1779
    %v2228 = vpack.c.b16 %v1784, %v1780
    %v2229 = vpack.c.b16 %v1785, %v1781
    %v2230 = vpack.c.b16 %v1786, %v1782
    %v2231 = vpack.c.b16 %v1791, %v1787
    %v2232 = vpack.c.b16 %v1792, %v1788
    %v2233 = vpack.c.b16 %v1793, %v1789
    %v2234 = vpack.c.b16 %v1794, %v1790
    %v2235 = vpack.c.b16 %v1799, %v1795
    %v2236 = vpack.c.b16 %v1800, %v1796
    %v2237 = vpack.c.b16 %v1801, %v1797
    %v2238 = vpack.c.b16 %v1802, %v1798
    %v2239 = vpack.c.b16 %v1807, %v1803
    %v2240 = vpack.c.b16 %v1808, %v1804
    %v2241 = vpack.c.b16 %v1809, %v1805
    %v2242 = vpack.c.b16 %v1810, %v1806
    %v2243 = vpack.c.b16 %v1815, %v1811
    %v2244 = vpack.c.b16 %v1816, %v1812
    %v2245 = vpack.c.b16 %v1817, %v1813
    %v2246 = vpack.c.b16 %v1818, %v1814
    %v2247 = vpack.c.b16 %v1823, %v1819
    %v2248 = vpack.c.b16 %v1824, %v1820
    %v2249 = vpack.c.b16 %v1825, %v1821
    %v2250 = vpack.c.b16 %v1826, %v1822
    %v2251 = vpack.c.b16 %v1831, %v1827
    %v2252 = vpack.c.b16 %v1832, %v1828
    %v2253 = vpack.c.b16 %v1833, %v1829
    %v2254 = vpack.c.b16 %v1834, %v1830
    %v2255 = vpack.c.b16 %v1839, %v1835
    %v2256 = vpack.c.b16 %v1840, %v1836
    %v2257 = vpack.c.b16 %v1841, %v1837
    %v2258 = vpack.c.b16 %v1842, %v1838
    %v2259 = vpack.c.b16 %v1847, %v1843
    %v2260 = vpack.c.b16 %v1848, %v1844
    %v2261 = vpack.c.b16 %v1849, %v1845
    %v2262 = vpack.c.b16 %v1850, %v1846
    %v2263 = vpack.c.b16 %v1855, %v1851
    %v2264 = vpack.c.b16 %v1856, %v1852
    %v2265 = vpack.c.b16 %v1857, %v1853
    %v2266 = vpack.c.b16 %v1858, %v1854
    %v2267 = vpack.c.b16 %v1863, %v1859
    %v2268 = vpack.c.b16 %v1864, %v1860
    %v2269 = vpack.c.b16 %v1865, %v1861
    %v2270 = vpack.c.b16 %v1866, %v1862
    %v2271 = vpack.c.b16 %v1871, %v1867
    %v2272 = vpack.c.b16 %v1872, %v1868
    %v2273 = vpack.c.b16 %v1873, %v1869
    %v2274 = vpack.c.b16 %v1874, %v1870
    %v2275 = vpack.c.b16 %v1879, %v1875
    %v2276 = vpack.c.b16 %v1880, %v1876
    %v2277 = vpack.c.b16 %v1881, %v1877
    %v2278 = vpack.c.b16 %v1882, %v1878
    %v2279 = vpack.c.b16 %v1887, %v1883
    %v2280 = vpack.c.b16 %v1888, %v1884
    %v2281 = vpack.c.b16 %v1889, %v1885
    %v2282 = vpack.c.b16 %v1890, %v1886
    %v2283 = vpack.c.b16 %v1895, %v1891
    %v2284 = vpack.c.b16 %v1896, %v1892
    %v2285 = vpack.c.b16 %v1897, %v1893
    %v2286 = vpack.c.b16 %v1898, %v1894
    %v2287 = vpack.c.b16 %v1903, %v1899
    %v2288 = vpack.c.b16 %v1904, %v1900
    %v2289 = vpack.c.b16 %v1905, %v1901
    %v2290 = vpack.c.b16 %v1906, %v1902
    %v2291 = vpack.c.b16 %v1911, %v1907
    %v2292 = vpack.c.b16 %v1912, %v1908
    %v2293 = vpack.c.b16 %v1913, %v1909
    %v2294 = vpack.c.b16 %v1914, %v1910
    %v2295 = vpack.c.b16 %v1919, %v1915
    %v2296 = vpack.c.b16 %v1920, %v1916
    %v2297 = vpack.c.b16 %v1921, %v1917
    %v2298 = vpack.c.b16 %v1922, %v1918
    %v2299 = vpack.c.b16 %v1927, %v1923
    %v2300 = vpack.c.b16 %v1928, %v1924
    %v2301 = vpack.c.b16 %v1929, %v1925
    %v2302 = vpack.c.b16 %v1930, %v1926
    %v2303 = vpack.c.b16 %v1935, %v1931
    %v2304 = vpack.c.b16 %v1936, %v1932
    %v2305 = vpack.c.b16 %v1937, %v1933
    %v2306 = vpack.c.b16 %v1938, %v1934
    %v2307 = vpack.c.b16 %v1943, %v1939
    %v2308 = vpack.c.b16 %v1944, %v1940
    %v2309 = vpack.c.b16 %v1945, %v1941
    %v2310 = vpack.c.b16 %v1946, %v1942
    %v2311 = vpack.c.b16 %v1951, %v1947
    %v2312 = vpack.c.b16 %v1952, %v1948
    %v2313 = vpack.c.b16 %v1953, %v1949
    %v2314 = vpack.c.b16 %v1954, %v1950
    %v2315 = vpack.c.b16 %v1959, %v1955
    %v2316 = vpack.c.b16 %v1960, %v1956
    %v2317 = vpack.c.b16 %v1961, %v1957
    %v2318 = vpack.c.b16 %v1962, %v1958
    %v2319 = vpack.c.b16 %v1967, %v1963
    %v2320 = vpack.c.b16 %v1968, %v1964
    %v2321 = vpack.c.b16 %v1969, %v1965
    %v2322 = vpack.c.b16 %v1970, %v1966
    %v2323 = vpack.c.b16 %v1975, %v1971
    %v2324 = vpack.c.b16 %v1976, %v1972
    %v2325 = vpack.c.b16 %v1977, %v1973
    %v2326 = vpack.c.b16 %v1978, %v1974
    %v2327 = vpack.c.b16 %v1983, %v1979
    %v2328 = vpack.c.b16 %v1984, %v1980
    %v2329 = vpack.c.b16 %v1985, %v1981
    %v2330 = vpack.c.b16 %v1986, %v1982
    %v2331 = vpack.c.b16 %v1991, %v1987
    %v2332 = vpack.c.b16 %v1992, %v1988
    %v2333 = vpack.c.b16 %v1993, %v1989
    %v2334 = vpack.c.b16 %v1994, %v1990
    %v2335 = vpack.c.b16 %v1999, %v1995
    %v2336 = vpack.c.b16 %v2000, %v1996
    %v2337 = vpack.c.b16 %v2001, %v1997
    %v2338 = vpack.c.b16 %v2002, %v1998
    %v2339 = vpack.c.b16 %v2007, %v2003
    %v2340 = vpack.c.b16 %v2008, %v2004
    %v2341 = vpack.c.b16 %v2009, %v2005
    %v2342 = vpack.c.b16 %v2010, %v2006
    %v2343 = vpack.c.b16 %v2015, %v2011
    %v2344 = vpack.c.b16 %v2016, %v2012
    %v2345 = vpack.c.b16 %v2017, %v2013
    %v2346 = vpack.c.b16 %v2018, %v2014
    %v2347 = vpack.c.b16 %v2023, %v2019
    %v2348 = vpack.c.b16 %v2024, %v2020
    %v2349 = vpack.c.b16 %v2025, %v2021
    %v2350 = vpack.c.b16 %v2026, %v2022
    %v2351 = vpack.c.b16 %v2031, %v2027
    %v2352 = vpack.c.b16 %v2032, %v2028
    %v2353 = vpack.c.b16 %v2033, %v2029
    %v2354 = vpack.c.b16 %v2034, %v2030
    %v2355 = vpack.c.b16 %v2039, %v2035
    %v2356 = vpack.c.b16 %v2040, %v2036
    %v2357 = vpack.c.b16 %v2041, %v2037
    %v2358 = vpack.c.b16 %v2042, %v2038
    %v2359 = vpack.c.b16 %v2047, %v2043
    %v2360 = vpack.c.b16 %v2048, %v2044
    %v2361 = vpack.c.b16 %v2049, %v2045
    %v2362 = vpack.c.b16 %v2050, %v2046
    %v2363 = vpack.c.b16 %v2055, %v2051
    %v2364 = vpack.c.b16 %v2056, %v2052
    %v2365 = vpack.c.b16 %v2057, %v2053
    %v2366 = vpack.c.b16 %v2058, %v2054
    %v2367 = vpack.c.b16 %v2063, %v2059
    %v2368 = vpack.c.b16 %v2064, %v2060
    %v2369 = vpack.c.b16 %v2065, %v2061
    %v2370 = vpack.c.b16 %v2066, %v2062
    %v2371 = vpack.c.b16 %v2071, %v2067
    %v2372 = vpack.c.b16 %v2072, %v2068
    %v2373 = vpack.c.b16 %v2073, %v2069
    %v2374 = vpack.c.b16 %v2074, %v2070
    %v2375 = vpack.c.b16 %v2079, %v2075
    %v2376 = vpack.c.b16 %v2080, %v2076
    %v2377 = vpack.c.b16 %v2081, %v2077
    %v2378 = vpack.c.b16 %v2082, %v2078
    %v2379 = vpack.c.b16 %v2087, %v2083
    %v2380 = vpack.c.b16 %v2088, %v2084
    %v2381 = vpack.c.b16 %v2089, %v2085
    %v2382 = vpack.c.b16 %v2090, %v2086
    %v2383 = vpack.c.b16 %v2095, %v2091
    %v2384 = vpack.c.b16 %v2096, %v2092
    %v2385 = vpack.c.b16 %v2097, %v2093
    %v2386 = vpack.c.b16 %v2098, %v2094
    %v2387 = vpack.c.b16 %v2103, %v2099
    %v2388 = vpack.c.b16 %v2104, %v2100
    %v2389 = vpack.c.b16 %v2105, %v2101
    %v2390 = vpack.c.b16 %v2106, %v2102
    %v2391 = vpack.c.b16 %v2111, %v2107
    %v2392 = vpack.c.b16 %v2112, %v2108
    %v2393 = vpack.c.b16 %v2113, %v2109
    %v2394 = vpack.c.b16 %v2114, %v2110
    %v2395 = vpack.c.b16 %v2119, %v2115
    %v2396 = vpack.c.b16 %v2120, %v2116
    %v2397 = vpack.c.b16 %v2121, %v2117
    %v2398 = vpack.c.b16 %v2122, %v2118
    %v2399 = vpack.c.b16 %v2127, %v2123
    %v2400 = vpack.c.b16 %v2128, %v2124
    %v2401 = vpack.c.b16 %v2129, %v2125
    %v2402 = vpack.c.b16 %v2130, %v2126
    %v2403 = vpack.c.b16 %v2135, %v2131
    %v2404 = vpack.c.b16 %v2136, %v2132
    %v2405 = vpack.c.b16 %v2137, %v2133
    %v2406 = vpack.c.b16 %v2138, %v2134
    %v2407 = vpack.c.b16 %v2143, %v2139
    %v2408 = vpack.c.b16 %v2144, %v2140
    %v2409 = vpack.c.b16 %v2145, %v2141
    %v2410 = vpack.c.b16 %v2146, %v2142
    %v2411 = vpack.c.b16 %v2151, %v2147
    %v2412 = vpack.c.b16 %v2152, %v2148
    %v2413 = vpack.c.b16 %v2153, %v2149
    %v2414 = vpack.c.b16 %v2154, %v2150
    %v2415 = vpack.c.b16 %v2159, %v2155
    %v2416 = vpack.c.b16 %v2160, %v2156
    %v2417 = vpack.c.b16 %v2161, %v2157
    %v2418 = vpack.c.b16 %v2162, %v2158
    %2675 = vmatpush.bf16.msra.mxu0 %v2191
    %2676 = vmatpush.bf16.msra.mxu0 %v2187
    %2677 = vmatpush.bf16.msra.mxu0 %v2183
    %2678 = vmatpush.bf16.msra.mxu0 %v2179
    %2679 = vmatpush.bf16.msra.mxu0 %v2175
    %2680 = vmatpush.bf16.msra.mxu0 %v2171
    %2681 = vmatpush.bf16.msra.mxu0 %v2167
    %2682 = vmatpush.bf16.msra.mxu0 %v2163
    %2683 = vmatmul.bf16.gmra.mxu0 %v1387
    %v2684 = vpop.f32.mrf.mxu0
    %v2685 = vadd.f32 0.0, %v2684
    %v2686 = vpop.f32.mrf.mxu0
    %v2687 = vadd.f32 0.0, %v2686
    %2688 = vdwg.mxu0
    %2689 = vmatpush.bf16.msra.mxu0 %v2223
    %2690 = vmatpush.bf16.msra.mxu0 %v2219
    %2691 = vmatpush.bf16.msra.mxu0 %v2215
    %2692 = vmatpush.bf16.msra.mxu0 %v2211
    %2693 = vmatpush.bf16.msra.mxu0 %v2207
    %2694 = vmatpush.bf16.msra.mxu0 %v2203
    %2695 = vmatpush.bf16.msra.mxu0 %v2199
    %2696 = vmatpush.bf16.msra.mxu0 %v2195
    %2697 = vmatmul.bf16.gmra.mxu0 %v1388
    %v2698 = vpop.f32.mrf.mxu0
    %v2699 = vadd.f32 %v2685, %v2698
    %v2700 = vpop.f32.mrf.mxu0
    %v2701 = vadd.f32 %v2687, %v2700
    %2702 = vdwg.mxu0
    %2703 = vmatpush.bf16.msra.mxu0 %v2255
    %2704 = vmatpush.bf16.msra.mxu0 %v2251
    %2705 = vmatpush.bf16.msra.mxu0 %v2247
    %2706 = vmatpush.bf16.msra.mxu0 %v2243
    %2707 = vmatpush.bf16.msra.mxu0 %v2239
    %2708 = vmatpush.bf16.msra.mxu0 %v2235
    %2709 = vmatpush.bf16.msra.mxu0 %v2231
    %2710 = vmatpush.bf16.msra.mxu0 %v2227
    %2711 = vmatmul.bf16.gmra.mxu0 %v1389
    %v2712 = vpop.f32.mrf.mxu0
    %v2713 = vadd.f32 %v2699, %v2712
    %v2714 = vpop.f32.mrf.mxu0
    %v2715 = vadd.f32 %v2701, %v2714
    %2716 = vdwg.mxu0
    %2717 = vmatpush.bf16.msra.mxu0 %v2287
    %2718 = vmatpush.bf16.msra.mxu0 %v2283
    %2719 = vmatpush.bf16.msra.mxu0 %v2279
    %2720 = vmatpush.bf16.msra.mxu0 %v2275
    %2721 = vmatpush.bf16.msra.mxu0 %v2271
    %2722 = vmatpush.bf16.msra.mxu0 %v2267
    %2723 = vmatpush.bf16.msra.mxu0 %v2263
    %2724 = vmatpush.bf16.msra.mxu0 %v2259
    %2725 = vmatmul.bf16.gmra.mxu0 %v1390
    %v2726 = vpop.f32.mrf.mxu0
    %v2727 = vadd.f32 %v2713, %v2726
    %v2728 = vpop.f32.mrf.mxu0
    %v2729 = vadd.f32 %v2715, %v2728
    %2730 = vdwg.mxu0
    %2731 = vmatpush.bf16.msra.mxu0 %v2319
    %2732 = vmatpush.bf16.msra.mxu0 %v2315
    %2733 = vmatpush.bf16.msra.mxu0 %v2311
    %2734 = vmatpush.bf16.msra.mxu0 %v2307
    %2735 = vmatpush.bf16.msra.mxu0 %v2303
    %2736 = vmatpush.bf16.msra.mxu0 %v2299
    %2737 = vmatpush.bf16.msra.mxu0 %v2295
    %2738 = vmatpush.bf16.msra.mxu0 %v2291
    %2739 = vmatmul.bf16.gmra.mxu0 %v1391
    %v2740 = vpop.f32.mrf.mxu0
    %v2741 = vadd.f32 %v2727, %v2740
    %v2742 = vpop.f32.mrf.mxu0
    %v2743 = vadd.f32 %v2729, %v2742
    %2744 = vdwg.mxu0
    %2745 = vmatpush.bf16.msra.mxu0 %v2351
    %2746 = vmatpush.bf16.msra.mxu0 %v2347
    %2747 = vmatpush.bf16.msra.mxu0 %v2343
    %2748 = vmatpush.bf16.msra.mxu0 %v2339
    %2749 = vmatpush.bf16.msra.mxu0 %v2335
    %2750 = vmatpush.bf16.msra.mxu0 %v2331
    %2751 = vmatpush.bf16.msra.mxu0 %v2327
    %2752 = vmatpush.bf16.msra.mxu0 %v2323
    %2753 = vmatmul.bf16.gmra.mxu0 %v1392
    %v2754 = vpop.f32.mrf.mxu0
    %v2755 = vadd.f32 %v2741, %v2754
    %v2756 = vpop.f32.mrf.mxu0
    %v2757 = vadd.f32 %v2743, %v2756
    %2758 = vdwg.mxu0
    %2759 = vmatpush.bf16.msra.mxu0 %v2383
    %2760 = vmatpush.bf16.msra.mxu0 %v2379
    %2761 = vmatpush.bf16.msra.mxu0 %v2375
    %2762 = vmatpush.bf16.msra.mxu0 %v2371
    %2763 = vmatpush.bf16.msra.mxu0 %v2367
    %2764 = vmatpush.bf16.msra.mxu0 %v2363
    %2765 = vmatpush.bf16.msra.mxu0 %v2359
    %2766 = vmatpush.bf16.msra.mxu0 %v2355
    %2767 = vmatmul.bf16.gmra.mxu0 %v1393
    %v2768 = vpop.f32.mrf.mxu0
    %v2769 = vadd.f32 %v2755, %v2768
    %v2770 = vpop.f32.mrf.mxu0
    %v2771 = vadd.f32 %v2757, %v2770
    %2772 = vdwg.mxu0
    %2773 = vmatpush.bf16.msra.mxu0 %v2415
    %2774 = vmatpush.bf16.msra.mxu0 %v2411
    %2775 = vmatpush.bf16.msra.mxu0 %v2407
    %2776 = vmatpush.bf16.msra.mxu0 %v2403
    %2777 = vmatpush.bf16.msra.mxu0 %v2399
    %2778 = vmatpush.bf16.msra.mxu0 %v2395
    %2779 = vmatpush.bf16.msra.mxu0 %v2391
    %2780 = vmatpush.bf16.msra.mxu0 %v2387
    %2781 = vmatmul.bf16.gmra.mxu0 %v1394
    %v2782 = vpop.f32.mrf.mxu0
    %v2783 = vadd.f32 %v2769, %v2782
    %v2784 = vpop.f32.mrf.mxu0
    %v2785 = vadd.f32 %v2771, %v2784
    %2786 = vdwg.mxu0
    %2787 = vmatpush.bf16.msra.mxu0 %v2192
    %2788 = vmatpush.bf16.msra.mxu0 %v2188
    %2789 = vmatpush.bf16.msra.mxu0 %v2184
    %2790 = vmatpush.bf16.msra.mxu0 %v2180
    %2791 = vmatpush.bf16.msra.mxu0 %v2176
    %2792 = vmatpush.bf16.msra.mxu0 %v2172
    %2793 = vmatpush.bf16.msra.mxu0 %v2168
    %2794 = vmatpush.bf16.msra.mxu0 %v2164
    %2795 = vmatmul.bf16.gmra.mxu0 %v1387
    %v2796 = vpop.f32.mrf.mxu0
    %v2797 = vadd.f32 0.0, %v2796
    %v2798 = vpop.f32.mrf.mxu0
    %v2799 = vadd.f32 0.0, %v2798
    %2800 = vdwg.mxu0
    %2801 = vmatpush.bf16.msra.mxu0 %v2224
    %2802 = vmatpush.bf16.msra.mxu0 %v2220
    %2803 = vmatpush.bf16.msra.mxu0 %v2216
    %2804 = vmatpush.bf16.msra.mxu0 %v2212
    %2805 = vmatpush.bf16.msra.mxu0 %v2208
    %2806 = vmatpush.bf16.msra.mxu0 %v2204
    %2807 = vmatpush.bf16.msra.mxu0 %v2200
    %2808 = vmatpush.bf16.msra.mxu0 %v2196
    %2809 = vmatmul.bf16.gmra.mxu0 %v1388
    %v2810 = vpop.f32.mrf.mxu0
    %v2811 = vadd.f32 %v2797, %v2810
    %v2812 = vpop.f32.mrf.mxu0
    %v2813 = vadd.f32 %v2799, %v2812
    %2814 = vdwg.mxu0
    %2815 = vmatpush.bf16.msra.mxu0 %v2256
    %2816 = vmatpush.bf16.msra.mxu0 %v2252
    %2817 = vmatpush.bf16.msra.mxu0 %v2248
    %2818 = vmatpush.bf16.msra.mxu0 %v2244
    %2819 = vmatpush.bf16.msra.mxu0 %v2240
    %2820 = vmatpush.bf16.msra.mxu0 %v2236
    %2821 = vmatpush.bf16.msra.mxu0 %v2232
    %2822 = vmatpush.bf16.msra.mxu0 %v2228
    %2823 = vmatmul.bf16.gmra.mxu0 %v1389
    %v2824 = vpop.f32.mrf.mxu0
    %v2825 = vadd.f32 %v2811, %v2824
    %v2826 = vpop.f32.mrf.mxu0
    %v2827 = vadd.f32 %v2813, %v2826
    %2828 = vdwg.mxu0
    %2829 = vmatpush.bf16.msra.mxu0 %v2288
    %2830 = vmatpush.bf16.msra.mxu0 %v2284
    %2831 = vmatpush.bf16.msra.mxu0 %v2280
    %2832 = vmatpush.bf16.msra.mxu0 %v2276
    %2833 = vmatpush.bf16.msra.mxu0 %v2272
    %2834 = vmatpush.bf16.msra.mxu0 %v2268
    %2835 = vmatpush.bf16.msra.mxu0 %v2264
    %2836 = vmatpush.bf16.msra.mxu0 %v2260
    %2837 = vmatmul.bf16.gmra.mxu0 %v1390
    %v2838 = vpop.f32.mrf.mxu0
    %v2839 = vadd.f32 %v2825, %v2838
    %v2840 = vpop.f32.mrf.mxu0
    %v2841 = vadd.f32 %v2827, %v2840
    %2842 = vdwg.mxu0
    %2843 = vmatpush.bf16.msra.mxu0 %v2320
    %2844 = vmatpush.bf16.msra.mxu0 %v2316
    %2845 = vmatpush.bf16.msra.mxu0 %v2312
    %2846 = vmatpush.bf16.msra.mxu0 %v2308
    %2847 = vmatpush.bf16.msra.mxu0 %v2304
    %2848 = vmatpush.bf16.msra.mxu0 %v2300
    %2849 = vmatpush.bf16.msra.mxu0 %v2296
    %2850 = vmatpush.bf16.msra.mxu0 %v2292
    %2851 = vmatmul.bf16.gmra.mxu0 %v1391
    %v2852 = vpop.f32.mrf.mxu0
    %v2853 = vadd.f32 %v2839, %v2852
    %v2854 = vpop.f32.mrf.mxu0
    %v2855 = vadd.f32 %v2841, %v2854
    %2856 = vdwg.mxu0
    %2857 = vmatpush.bf16.msra.mxu0 %v2352
    %2858 = vmatpush.bf16.msra.mxu0 %v2348
    %2859 = vmatpush.bf16.msra.mxu0 %v2344
    %2860 = vmatpush.bf16.msra.mxu0 %v2340
    %2861 = vmatpush.bf16.msra.mxu0 %v2336
    %2862 = vmatpush.bf16.msra.mxu0 %v2332
    %2863 = vmatpush.bf16.msra.mxu0 %v2328
    %2864 = vmatpush.bf16.msra.mxu0 %v2324
    %2865 = vmatmul.bf16.gmra.mxu0 %v1392
    %v2866 = vpop.f32.mrf.mxu0
    %v2867 = vadd.f32 %v2853, %v2866
    %v2868 = vpop.f32.mrf.mxu0
    %v2869 = vadd.f32 %v2855, %v2868
    %2870 = vdwg.mxu0
    %2871 = vmatpush.bf16.msra.mxu0 %v2384
    %2872 = vmatpush.bf16.msra.mxu0 %v2380
    %2873 = vmatpush.bf16.msra.mxu0 %v2376
    %2874 = vmatpush.bf16.msra.mxu0 %v2372
    %2875 = vmatpush.bf16.msra.mxu0 %v2368
    %2876 = vmatpush.bf16.msra.mxu0 %v2364
    %2877 = vmatpush.bf16.msra.mxu0 %v2360
    %2878 = vmatpush.bf16.msra.mxu0 %v2356
    %2879 = vmatmul.bf16.gmra.mxu0 %v1393
    %v2880 = vpop.f32.mrf.mxu0
    %v2881 = vadd.f32 %v2867, %v2880
    %v2882 = vpop.f32.mrf.mxu0
    %v2883 = vadd.f32 %v2869, %v2882
    %2884 = vdwg.mxu0
    %2885 = vmatpush.bf16.msra.mxu0 %v2416
    %2886 = vmatpush.bf16.msra.mxu0 %v2412
    %2887 = vmatpush.bf16.msra.mxu0 %v2408
    %2888 = vmatpush.bf16.msra.mxu0 %v2404
    %2889 = vmatpush.bf16.msra.mxu0 %v2400
    %2890 = vmatpush.bf16.msra.mxu0 %v2396
    %2891 = vmatpush.bf16.msra.mxu0 %v2392
    %2892 = vmatpush.bf16.msra.mxu0 %v2388
    %2893 = vmatmul.bf16.gmra.mxu0 %v1394
    %v2894 = vpop.f32.mrf.mxu0
    %v2895 = vadd.f32 %v2881, %v2894
    %v2896 = vpop.f32.mrf.mxu0
    %v2897 = vadd.f32 %v2883, %v2896
    %2898 = vdwg.mxu0
    %2899 = vmatpush.bf16.msra.mxu0 %v2193
    %2900 = vmatpush.bf16.msra.mxu0 %v2189
    %2901 = vmatpush.bf16.msra.mxu0 %v2185
    %2902 = vmatpush.bf16.msra.mxu0 %v2181
    %2903 = vmatpush.bf16.msra.mxu0 %v2177
    %2904 = vmatpush.bf16.msra.mxu0 %v2173
    %2905 = vmatpush.bf16.msra.mxu0 %v2169
    %2906 = vmatpush.bf16.msra.mxu0 %v2165
    %2907 = vmatmul.bf16.gmra.mxu0 %v1387
    %v2908 = vpop.f32.mrf.mxu0
    %v2909 = vadd.f32 0.0, %v2908
    %v2910 = vpop.f32.mrf.mxu0
    %v2911 = vadd.f32 0.0, %v2910
    %2912 = vdwg.mxu0
    %2913 = vmatpush.bf16.msra.mxu0 %v2225
    %2914 = vmatpush.bf16.msra.mxu0 %v2221
    %2915 = vmatpush.bf16.msra.mxu0 %v2217
    %2916 = vmatpush.bf16.msra.mxu0 %v2213
    %2917 = vmatpush.bf16.msra.mxu0 %v2209
    %2918 = vmatpush.bf16.msra.mxu0 %v2205
    %2919 = vmatpush.bf16.msra.mxu0 %v2201
    %2920 = vmatpush.bf16.msra.mxu0 %v2197
    %2921 = vmatmul.bf16.gmra.mxu0 %v1388
    %v2922 = vpop.f32.mrf.mxu0
    %v2923 = vadd.f32 %v2909, %v2922
    %v2924 = vpop.f32.mrf.mxu0
    %v2925 = vadd.f32 %v2911, %v2924
    %2926 = vdwg.mxu0
    %2927 = vmatpush.bf16.msra.mxu0 %v2257
    %2928 = vmatpush.bf16.msra.mxu0 %v2253
    %2929 = vmatpush.bf16.msra.mxu0 %v2249
    %2930 = vmatpush.bf16.msra.mxu0 %v2245
    %2931 = vmatpush.bf16.msra.mxu0 %v2241
    %2932 = vmatpush.bf16.msra.mxu0 %v2237
    %2933 = vmatpush.bf16.msra.mxu0 %v2233
    %2934 = vmatpush.bf16.msra.mxu0 %v2229
    %2935 = vmatmul.bf16.gmra.mxu0 %v1389
    %v2936 = vpop.f32.mrf.mxu0
    %v2937 = vadd.f32 %v2923, %v2936
    %v2938 = vpop.f32.mrf.mxu0
    %v2939 = vadd.f32 %v2925, %v2938
    %2940 = vdwg.mxu0
    %2941 = vmatpush.bf16.msra.mxu0 %v2289
    %2942 = vmatpush.bf16.msra.mxu0 %v2285
    %2943 = vmatpush.bf16.msra.mxu0 %v2281
    %2944 = vmatpush.bf16.msra.mxu0 %v2277
    %2945 = vmatpush.bf16.msra.mxu0 %v2273
    %2946 = vmatpush.bf16.msra.mxu0 %v2269
    %2947 = vmatpush.bf16.msra.mxu0 %v2265
    %2948 = vmatpush.bf16.msra.mxu0 %v2261
    %2949 = vmatmul.bf16.gmra.mxu0 %v1390
    %v2950 = vpop.f32.mrf.mxu0
    %v2951 = vadd.f32 %v2937, %v2950
    %v2952 = vpop.f32.mrf.mxu0
    %v2953 = vadd.f32 %v2939, %v2952
    %2954 = vdwg.mxu0
    %2955 = vmatpush.bf16.msra.mxu0 %v2321
    %2956 = vmatpush.bf16.msra.mxu0 %v2317
    %2957 = vmatpush.bf16.msra.mxu0 %v2313
    %2958 = vmatpush.bf16.msra.mxu0 %v2309
    %2959 = vmatpush.bf16.msra.mxu0 %v2305
    %2960 = vmatpush.bf16.msra.mxu0 %v2301
    %2961 = vmatpush.bf16.msra.mxu0 %v2297
    %2962 = vmatpush.bf16.msra.mxu0 %v2293
    %2963 = vmatmul.bf16.gmra.mxu0 %v1391
    %v2964 = vpop.f32.mrf.mxu0
    %v2965 = vadd.f32 %v2951, %v2964
    %v2966 = vpop.f32.mrf.mxu0
    %v2967 = vadd.f32 %v2953, %v2966
    %2968 = vdwg.mxu0
    %2969 = vmatpush.bf16.msra.mxu0 %v2353
    %2970 = vmatpush.bf16.msra.mxu0 %v2349
    %2971 = vmatpush.bf16.msra.mxu0 %v2345
    %2972 = vmatpush.bf16.msra.mxu0 %v2341
    %2973 = vmatpush.bf16.msra.mxu0 %v2337
    %2974 = vmatpush.bf16.msra.mxu0 %v2333
    %2975 = vmatpush.bf16.msra.mxu0 %v2329
    %2976 = vmatpush.bf16.msra.mxu0 %v2325
    %2977 = vmatmul.bf16.gmra.mxu0 %v1392
    %v2978 = vpop.f32.mrf.mxu0
    %v2979 = vadd.f32 %v2965, %v2978
    %v2980 = vpop.f32.mrf.mxu0
    %v2981 = vadd.f32 %v2967, %v2980
    %2982 = vdwg.mxu0
    %2983 = vmatpush.bf16.msra.mxu0 %v2385
    %2984 = vmatpush.bf16.msra.mxu0 %v2381
    %2985 = vmatpush.bf16.msra.mxu0 %v2377
    %2986 = vmatpush.bf16.msra.mxu0 %v2373
    %2987 = vmatpush.bf16.msra.mxu0 %v2369
    %2988 = vmatpush.bf16.msra.mxu0 %v2365
    %2989 = vmatpush.bf16.msra.mxu0 %v2361
    %2990 = vmatpush.bf16.msra.mxu0 %v2357
    %2991 = vmatmul.bf16.gmra.mxu0 %v1393
    %v2992 = vpop.f32.mrf.mxu0
    %v2993 = vadd.f32 %v2979, %v2992
    %v2994 = vpop.f32.mrf.mxu0
    %v2995 = vadd.f32 %v2981, %v2994
    %2996 = vdwg.mxu0
    %2997 = vmatpush.bf16.msra.mxu0 %v2417
    %2998 = vmatpush.bf16.msra.mxu0 %v2413
    %2999 = vmatpush.bf16.msra.mxu0 %v2409
    %3000 = vmatpush.bf16.msra.mxu0 %v2405
    %3001 = vmatpush.bf16.msra.mxu0 %v2401
    %3002 = vmatpush.bf16.msra.mxu0 %v2397
    %3003 = vmatpush.bf16.msra.mxu0 %v2393
    %3004 = vmatpush.bf16.msra.mxu0 %v2389
    %3005 = vmatmul.bf16.gmra.mxu0 %v1394
    %v3006 = vpop.f32.mrf.mxu0
    %v3007 = vadd.f32 %v2993, %v3006
    %v3008 = vpop.f32.mrf.mxu0
    %v3009 = vadd.f32 %v2995, %v3008
    %3010 = vdwg.mxu0
    %3011 = vmatpush.bf16.msra.mxu0 %v2194
    %3012 = vmatpush.bf16.msra.mxu0 %v2190
    %3013 = vmatpush.bf16.msra.mxu0 %v2186
    %3014 = vmatpush.bf16.msra.mxu0 %v2182
    %3015 = vmatpush.bf16.msra.mxu0 %v2178
    %3016 = vmatpush.bf16.msra.mxu0 %v2174
    %3017 = vmatpush.bf16.msra.mxu0 %v2170
    %3018 = vmatpush.bf16.msra.mxu0 %v2166
    %3019 = vmatmul.bf16.gmra.mxu0 %v1387
    %v3020 = vpop.f32.mrf.mxu0
    %v3021 = vadd.f32 0.0, %v3020
    %v3022 = vpop.f32.mrf.mxu0
    %v3023 = vadd.f32 0.0, %v3022
    %3024 = vdwg.mxu0
    %3025 = vmatpush.bf16.msra.mxu0 %v2226
    %3026 = vmatpush.bf16.msra.mxu0 %v2222
    %3027 = vmatpush.bf16.msra.mxu0 %v2218
    %3028 = vmatpush.bf16.msra.mxu0 %v2214
    %3029 = vmatpush.bf16.msra.mxu0 %v2210
    %3030 = vmatpush.bf16.msra.mxu0 %v2206
    %3031 = vmatpush.bf16.msra.mxu0 %v2202
    %3032 = vmatpush.bf16.msra.mxu0 %v2198
    %3033 = vmatmul.bf16.gmra.mxu0 %v1388
    %v3034 = vpop.f32.mrf.mxu0
    %v3035 = vadd.f32 %v3021, %v3034
    %v3036 = vpop.f32.mrf.mxu0
    %v3037 = vadd.f32 %v3023, %v3036
    %3038 = vdwg.mxu0
    %3039 = vmatpush.bf16.msra.mxu0 %v2258
    %3040 = vmatpush.bf16.msra.mxu0 %v2254
    %3041 = vmatpush.bf16.msra.mxu0 %v2250
    %3042 = vmatpush.bf16.msra.mxu0 %v2246
    %3043 = vmatpush.bf16.msra.mxu0 %v2242
    %3044 = vmatpush.bf16.msra.mxu0 %v2238
    %3045 = vmatpush.bf16.msra.mxu0 %v2234
    %3046 = vmatpush.bf16.msra.mxu0 %v2230
    %3047 = vmatmul.bf16.gmra.mxu0 %v1389
    %v3048 = vpop.f32.mrf.mxu0
    %v3049 = vadd.f32 %v3035, %v3048
    %v3050 = vpop.f32.mrf.mxu0
    %v3051 = vadd.f32 %v3037, %v3050
    %3052 = vdwg.mxu0
    %3053 = vmatpush.bf16.msra.mxu0 %v2290
    %3054 = vmatpush.bf16.msra.mxu0 %v2286
    %3055 = vmatpush.bf16.msra.mxu0 %v2282
    %3056 = vmatpush.bf16.msra.mxu0 %v2278
    %3057 = vmatpush.bf16.msra.mxu0 %v2274
    %3058 = vmatpush.bf16.msra.mxu0 %v2270
    %3059 = vmatpush.bf16.msra.mxu0 %v2266
    %3060 = vmatpush.bf16.msra.mxu0 %v2262
    %3061 = vmatmul.bf16.gmra.mxu0 %v1390
    %v3062 = vpop.f32.mrf.mxu0
    %v3063 = vadd.f32 %v3049, %v3062
    %v3064 = vpop.f32.mrf.mxu0
    %v3065 = vadd.f32 %v3051, %v3064
    %3066 = vdwg.mxu0
    %3067 = vmatpush.bf16.msra.mxu0 %v2322
    %3068 = vmatpush.bf16.msra.mxu0 %v2318
    %3069 = vmatpush.bf16.msra.mxu0 %v2314
    %3070 = vmatpush.bf16.msra.mxu0 %v2310
    %3071 = vmatpush.bf16.msra.mxu0 %v2306
    %3072 = vmatpush.bf16.msra.mxu0 %v2302
    %3073 = vmatpush.bf16.msra.mxu0 %v2298
    %3074 = vmatpush.bf16.msra.mxu0 %v2294
    %3075 = vmatmul.bf16.gmra.mxu0 %v1391
    %v3076 = vpop.f32.mrf.mxu0
    %v3077 = vadd.f32 %v3063, %v3076
    %v3078 = vpop.f32.mrf.mxu0
    %v3079 = vadd.f32 %v3065, %v3078
    %3080 = vdwg.mxu0
    %3081 = vmatpush.bf16.msra.mxu0 %v2354
    %3082 = vmatpush.bf16.msra.mxu0 %v2350
    %3083 = vmatpush.bf16.msra.mxu0 %v2346
    %3084 = vmatpush.bf16.msra.mxu0 %v2342
    %3085 = vmatpush.bf16.msra.mxu0 %v2338
    %3086 = vmatpush.bf16.msra.mxu0 %v2334
    %3087 = vmatpush.bf16.msra.mxu0 %v2330
    %3088 = vmatpush.bf16.msra.mxu0 %v2326
    %3089 = vmatmul.bf16.gmra.mxu0 %v1392
    %v3090 = vpop.f32.mrf.mxu0
    %v3091 = vadd.f32 %v3077, %v3090
    %v3092 = vpop.f32.mrf.mxu0
    %v3093 = vadd.f32 %v3079, %v3092
    %3094 = vdwg.mxu0
    %3095 = vmatpush.bf16.msra.mxu0 %v2386
    %3096 = vmatpush.bf16.msra.mxu0 %v2382
    %3097 = vmatpush.bf16.msra.mxu0 %v2378
    %3098 = vmatpush.bf16.msra.mxu0 %v2374
    %3099 = vmatpush.bf16.msra.mxu0 %v2370
    %3100 = vmatpush.bf16.msra.mxu0 %v2366
    %3101 = vmatpush.bf16.msra.mxu0 %v2362
    %3102 = vmatpush.bf16.msra.mxu0 %v2358
    %3103 = vmatmul.bf16.gmra.mxu0 %v1393
    %v3104 = vpop.f32.mrf.mxu0
    %v3105 = vadd.f32 %v3091, %v3104
    %v3106 = vpop.f32.mrf.mxu0
    %v3107 = vadd.f32 %v3093, %v3106
    %3108 = vdwg.mxu0
    %3109 = vmatpush.bf16.msra.mxu0 %v2418
    %3110 = vmatpush.bf16.msra.mxu0 %v2414
    %3111 = vmatpush.bf16.msra.mxu0 %v2410
    %3112 = vmatpush.bf16.msra.mxu0 %v2406
    %3113 = vmatpush.bf16.msra.mxu0 %v2402
    %3114 = vmatpush.bf16.msra.mxu0 %v2398
    %3115 = vmatpush.bf16.msra.mxu0 %v2394
    %3116 = vmatpush.bf16.msra.mxu0 %v2390
    %3117 = vmatmul.bf16.gmra.mxu0 %v1394
    %v3118 = vpop.f32.mrf.mxu0
    %v3119 = vadd.f32 %v3105, %v3118
    %v3120 = vpop.f32.mrf.mxu0
    %v3121 = vadd.f32 %v3107, %v3120
    %3122 = vdwg.mxu0
    %v3123 = vrot.slane %v2783, 4
    %v3124 = vadd.f32 %v2783, %v3123
    %v3125 = vrot.slane %v3124, 2
    %v3126 = vadd.f32 %v3124, %v3125
    %v3127 = vrot.slane %v3126, 1
    %v3128 = vadd.f32 %v3126, %v3127
    %v3129 = vrot.slane %v2895, 4
    %v3130 = vadd.f32 %v2895, %v3129
    %v3131 = vrot.slane %v3130, 2
    %v3132 = vadd.f32 %v3130, %v3131
    %v3133 = vrot.slane %v3132, 1
    %v3134 = vadd.f32 %v3132, %v3133
    %v3135 = vrot.slane %v3007, 4
    %v3136 = vadd.f32 %v3007, %v3135
    %v3137 = vrot.slane %v3136, 2
    %v3138 = vadd.f32 %v3136, %v3137
    %v3139 = vrot.slane %v3138, 1
    %v3140 = vadd.f32 %v3138, %v3139
    %v3141 = vrot.slane %v3119, 4
    %v3142 = vadd.f32 %v3119, %v3141
    %v3143 = vrot.slane %v3142, 2
    %v3144 = vadd.f32 %v3142, %v3143
    %v3145 = vrot.slane %v3144, 1
    %v3146 = vadd.f32 %v3144, %v3145
    %v3147 = vrot.slane %v2785, 4
    %v3148 = vadd.f32 %v2785, %v3147
    %v3149 = vrot.slane %v3148, 2
    %v3150 = vadd.f32 %v3148, %v3149
    %v3151 = vrot.slane %v3150, 1
    %v3152 = vadd.f32 %v3150, %v3151
    %v3153 = vrot.slane %v2897, 4
    %v3154 = vadd.f32 %v2897, %v3153
    %v3155 = vrot.slane %v3154, 2
    %v3156 = vadd.f32 %v3154, %v3155
    %v3157 = vrot.slane %v3156, 1
    %v3158 = vadd.f32 %v3156, %v3157
    %v3159 = vrot.slane %v3009, 4
    %v3160 = vadd.f32 %v3009, %v3159
    %v3161 = vrot.slane %v3160, 2
    %v3162 = vadd.f32 %v3160, %v3161
    %v3163 = vrot.slane %v3162, 1
    %v3164 = vadd.f32 %v3162, %v3163
    %v3165 = vrot.slane %v3121, 4
    %v3166 = vadd.f32 %v3121, %v3165
    %v3167 = vrot.slane %v3166, 2
    %v3168 = vadd.f32 %v3166, %v3167
    %v3169 = vrot.slane %v3168, 1
    %v3170 = vadd.f32 %v3168, %v3169
    %v3171 = vmul.f32 %v3128, %v536
    %v3172 = vmul.f32 %v3134, %v536
    %v3173 = vmul.f32 %v3140, %v536
    %v3174 = vmul.f32 %v3146, %v536
    %v3175 = vmul.f32 %v3152, %v536
    %v3176 = vmul.f32 %v3158, %v536
    %v3177 = vmul.f32 %v3164, %v536
    %v3178 = vmul.f32 %v3170, %v536
    %v3179 = vmul.f32 %v2783, %v2783
    %v3180 = vmul.f32 %v2895, %v2895
    %v3181 = vmul.f32 %v3007, %v3007
    %v3182 = vmul.f32 %v3119, %v3119
    %v3183 = vmul.f32 %v2785, %v2785
    %v3184 = vmul.f32 %v2897, %v2897
    %v3185 = vmul.f32 %v3009, %v3009
    %v3186 = vmul.f32 %v3121, %v3121
    %v3187 = vrot.slane %v3179, 4
    %v3188 = vadd.f32 %v3179, %v3187
    %v3189 = vrot.slane %v3188, 2
    %v3190 = vadd.f32 %v3188, %v3189
    %v3191 = vrot.slane %v3190, 1
    %v3192 = vadd.f32 %v3190, %v3191
    %v3193 = vrot.slane %v3180, 4
    %v3194 = vadd.f32 %v3180, %v3193
    %v3195 = vrot.slane %v3194, 2
    %v3196 = vadd.f32 %v3194, %v3195
    %v3197 = vrot.slane %v3196, 1
    %v3198 = vadd.f32 %v3196, %v3197
    %v3199 = vrot.slane %v3181, 4
    %v3200 = vadd.f32 %v3181, %v3199
    %v3201 = vrot.slane %v3200, 2
    %v3202 = vadd.f32 %v3200, %v3201
    %v3203 = vrot.slane %v3202, 1
    %v3204 = vadd.f32 %v3202, %v3203
    %v3205 = vrot.slane %v3182, 4
    %v3206 = vadd.f32 %v3182, %v3205
    %v3207 = vrot.slane %v3206, 2
    %v3208 = vadd.f32 %v3206, %v3207
    %v3209 = vrot.slane %v3208, 1
    %v3210 = vadd.f32 %v3208, %v3209
    %v3211 = vrot.slane %v3183, 4
    %v3212 = vadd.f32 %v3183, %v3211
    %v3213 = vrot.slane %v3212, 2
    %v3214 = vadd.f32 %v3212, %v3213
    %v3215 = vrot.slane %v3214, 1
    %v3216 = vadd.f32 %v3214, %v3215
    %v3217 = vrot.slane %v3184, 4
    %v3218 = vadd.f32 %v3184, %v3217
    %v3219 = vrot.slane %v3218, 2
    %v3220 = vadd.f32 %v3218, %v3219
    %v3221 = vrot.slane %v3220, 1
    %v3222 = vadd.f32 %v3220, %v3221
    %v3223 = vrot.slane %v3185, 4
    %v3224 = vadd.f32 %v3185, %v3223
    %v3225 = vrot.slane %v3224, 2
    %v3226 = vadd.f32 %v3224, %v3225
    %v3227 = vrot.slane %v3226, 1
    %v3228 = vadd.f32 %v3226, %v3227
    %v3229 = vrot.slane %v3186, 4
    %v3230 = vadd.f32 %v3186, %v3229
    %v3231 = vrot.slane %v3230, 2
    %v3232 = vadd.f32 %v3230, %v3231
    %v3233 = vrot.slane %v3232, 1
    %v3234 = vadd.f32 %v3232, %v3233
    %v3235 = vmul.f32 %v3192, %v536
    %v3236 = vmul.f32 %v3198, %v536
    %v3237 = vmul.f32 %v3204, %v536
    %v3238 = vmul.f32 %v3210, %v536
    %v3239 = vmul.f32 %v3216, %v536
    %v3240 = vmul.f32 %v3222, %v536
    %v3241 = vmul.f32 %v3228, %v536
    %v3242 = vmul.f32 %v3234, %v536
    %v3243 = vmul.f32 %v3171, %v3171
    %v3244 = vmul.f32 %v3172, %v3172
    %v3245 = vmul.f32 %v3173, %v3173
    %v3246 = vmul.f32 %v3174, %v3174
    %v3247 = vmul.f32 %v3175, %v3175
    %v3248 = vmul.f32 %v3176, %v3176
    %v3249 = vmul.f32 %v3177, %v3177
    %v3250 = vmul.f32 %v3178, %v3178
    %v3251 = vsub.f32 %v3235, %v3243
    %v3252 = vsub.f32 %v3236, %v3244
    %v3253 = vsub.f32 %v3237, %v3245
    %v3254 = vsub.f32 %v3238, %v3246
    %v3255 = vsub.f32 %v3239, %v3247
    %v3256 = vsub.f32 %v3240, %v3248
    %v3257 = vsub.f32 %v3241, %v3249
    %v3258 = vsub.f32 %v3242, %v3250
    %s3259 = scalar_lea.vmem [#allocation11], 2
    %v3260 = vld [vmem:[%s3259] ss:$8 sm:$0xf]
    %s3261 = scalar_lea.vmem [#allocation11], 3
    %v3262 = vld [vmem:[%s3261] ss:$8 sm:$0xf]
    %v3263 = vadd.f32 %v3251, 1e-05
    %v3264 = vadd.f32 %v3252, 1e-05
    %v3265 = vadd.f32 %v3253, 1e-05
    %v3266 = vadd.f32 %v3254, 1e-05
    %v3267 = vadd.f32 %v3255, 1e-05
    %v3268 = vadd.f32 %v3256, 1e-05
    %v3269 = vadd.f32 %v3257, 1e-05
    %v3270 = vadd.f32 %v3258, 1e-05
    %v3271 = vrsqrt.pop %v3263
    %v3272 = vmul.f32 %v3271, %v3263
    %v3273 = vmul.f32 %v3272, %v3271
    %v3274 = vmul.f32 0.5, %v3273
    %v3275 = vsub.f32 1.5, %v3274
    %v3276 = vmul.f32 %v3271, %v3275
    %vm3277 = vweird.f32 %v3263
    %vm3278 = vweird.f32 %v3271
    %vm3279 = vmor %vm3277, %vm3278
    %v3280 = vsel %vm3279, %v3271, %v3276
    %v3281 = vrsqrt.pop %v3264
    %v3282 = vmul.f32 %v3281, %v3264
    %v3283 = vmul.f32 %v3282, %v3281
    %v3284 = vmul.f32 0.5, %v3283
    %v3285 = vsub.f32 1.5, %v3284
    %v3286 = vmul.f32 %v3281, %v3285
    %vm3287 = vweird.f32 %v3264
    %vm3288 = vweird.f32 %v3281
    %vm3289 = vmor %vm3287, %vm3288
    %v3290 = vsel %vm3289, %v3281, %v3286
    %v3291 = vrsqrt.pop %v3265
    %v3292 = vmul.f32 %v3291, %v3265
    %v3293 = vmul.f32 %v3292, %v3291
    %v3294 = vmul.f32 0.5, %v3293
    %v3295 = vsub.f32 1.5, %v3294
    %v3296 = vmul.f32 %v3291, %v3295
    %vm3297 = vweird.f32 %v3265
    %vm3298 = vweird.f32 %v3291
    %vm3299 = vmor %vm3297, %vm3298
    %v3300 = vsel %vm3299, %v3291, %v3296
    %v3301 = vrsqrt.pop %v3266
    %v3302 = vmul.f32 %v3301, %v3266
    %v3303 = vmul.f32 %v3302, %v3301
    %v3304 = vmul.f32 0.5, %v3303
    %v3305 = vsub.f32 1.5, %v3304
    %v3306 = vmul.f32 %v3301, %v3305
    %vm3307 = vweird.f32 %v3266
    %vm3308 = vweird.f32 %v3301
    %vm3309 = vmor %vm3307, %vm3308
    %v3310 = vsel %vm3309, %v3301, %v3306
    %v3311 = vrsqrt.pop %v3267
    %v3312 = vmul.f32 %v3311, %v3267
    %v3313 = vmul.f32 %v3312, %v3311
    %v3314 = vmul.f32 0.5, %v3313
    %v3315 = vsub.f32 1.5, %v3314
    %v3316 = vmul.f32 %v3311, %v3315
    %vm3317 = vweird.f32 %v3267
    %vm3318 = vweird.f32 %v3311
    %vm3319 = vmor %vm3317, %vm3318
    %v3320 = vsel %vm3319, %v3311, %v3316
    %v3321 = vrsqrt.pop %v3268
    %v3322 = vmul.f32 %v3321, %v3268
    %v3323 = vmul.f32 %v3322, %v3321
    %v3324 = vmul.f32 0.5, %v3323
    %v3325 = vsub.f32 1.5, %v3324
    %v3326 = vmul.f32 %v3321, %v3325
    %vm3327 = vweird.f32 %v3268
    %vm3328 = vweird.f32 %v3321
    %vm3329 = vmor %vm3327, %vm3328
    %v3330 = vsel %vm3329, %v3321, %v3326
    %v3331 = vrsqrt.pop %v3269
    %v3332 = vmul.f32 %v3331, %v3269
    %v3333 = vmul.f32 %v3332, %v3331
    %v3334 = vmul.f32 0.5, %v3333
    %v3335 = vsub.f32 1.5, %v3334
    %v3336 = vmul.f32 %v3331, %v3335
    %vm3337 = vweird.f32 %v3269
    %vm3338 = vweird.f32 %v3331
    %vm3339 = vmor %vm3337, %vm3338
    %v3340 = vsel %vm3339, %v3331, %v3336
    %v3341 = vrsqrt.pop %v3270
    %v3342 = vmul.f32 %v3341, %v3270
    %v3343 = vmul.f32 %v3342, %v3341
    %v3344 = vmul.f32 0.5, %v3343
    %v3345 = vsub.f32 1.5, %v3344
    %v3346 = vmul.f32 %v3341, %v3345
    %vm3347 = vweird.f32 %v3270
    %vm3348 = vweird.f32 %v3341
    %vm3349 = vmor %vm3347, %vm3348
    %v3350 = vsel %vm3349, %v3341, %v3346
    %v3359 = vrot.slane %v3290, 7
    %v3360 = vrot.slane %v3300, 6
    %v3361 = vrot.slane %v3310, 5
    %v3362 = vrot.slane %v3330, 7
    %v3363 = vrot.slane %v3340, 6
    %v3364 = vrot.slane %v3350, 5
    %v3365 = vsel %vm926, %v3280, %v3359
    %v3366 = vsel %vm928, %v3360, %v3361
    %v3367 = vsel %vm930, %v3365, %v3366
    %v3368 = vsel %vm926, %v3320, %v3362
    %v3369 = vsel %vm928, %v3363, %v3364
    %v3370 = vsel %vm930, %v3368, %v3369
    %v3373 = vmul.f32 %v3260, %v3367
    %v3374 = vmul.f32 %v3260, %v3370
    %v3377 = vperm.slane %v3373, 0
    %v3378 = vperm.slane %v3373, 1
    %v3379 = vperm.slane %v3373, 2
    %v3380 = vperm.slane %v3373, 3
    %v3381 = vperm.slane %v3374, 0
    %v3382 = vperm.slane %v3374, 1
    %v3383 = vperm.slane %v3374, 2
    %v3384 = vperm.slane %v3374, 3
    %v3393 = vmul.f32 %v3171, %v3377
    %v3394 = vmul.f32 %v3172, %v3378
    %v3395 = vmul.f32 %v3173, %v3379
    %v3396 = vmul.f32 %v3174, %v3380
    %v3397 = vmul.f32 %v3175, %v3381
    %v3398 = vmul.f32 %v3176, %v3382
    %v3399 = vmul.f32 %v3177, %v3383
    %v3400 = vmul.f32 %v3178, %v3384
    %v3409 = vrot.slane %v3394, 7
    %v3410 = vrot.slane %v3395, 6
    %v3411 = vrot.slane %v3396, 5
    %v3412 = vrot.slane %v3398, 7
    %v3413 = vrot.slane %v3399, 6
    %v3414 = vrot.slane %v3400, 5
    %v3415 = vsel %vm926, %v3393, %v3409
    %v3416 = vsel %vm928, %v3410, %v3411
    %v3417 = vsel %vm930, %v3415, %v3416
    %v3418 = vsel %vm926, %v3397, %v3412
    %v3419 = vsel %vm928, %v3413, %v3414
    %v3420 = vsel %vm930, %v3418, %v3419
    %v3423 = vsub.f32 %v3262, %v3417
    %v3424 = vsub.f32 %v3262, %v3420
    %v3425 = vmul.f32 %v2783, %v3377
    %v3426 = vmul.f32 %v2895, %v3378
    %v3427 = vmul.f32 %v3007, %v3379
    %v3428 = vmul.f32 %v3119, %v3380
    %v3429 = vmul.f32 %v2785, %v3381
    %v3430 = vmul.f32 %v2897, %v3382
    %v3431 = vmul.f32 %v3009, %v3383
    %v3432 = vmul.f32 %v3121, %v3384
    %v3435 = vperm.slane %v3423, 0
    %v3436 = vperm.slane %v3423, 1
    %v3437 = vperm.slane %v3423, 2
    %v3438 = vperm.slane %v3423, 3
    %v3439 = vperm.slane %v3424, 0
    %v3440 = vperm.slane %v3424, 1
    %v3441 = vperm.slane %v3424, 2
    %v3442 = vperm.slane %v3424, 3
    %v3451 = vadd.f32 %v3425, %v3435
    %v3452 = vadd.f32 %v3426, %v3436
    %v3453 = vadd.f32 %v3427, %v3437
    %v3454 = vadd.f32 %v3428, %v3438
    %v3455 = vadd.f32 %v3429, %v3439
    %v3456 = vadd.f32 %v3430, %v3440
    %v3457 = vadd.f32 %v3431, %v3441
    %v3458 = vadd.f32 %v3432, %v3442
    %v3459 = vmax.f32 %v3451, 0.0
    %v3460 = vmax.f32 %v3452, 0.0
    %v3461 = vmax.f32 %v3453, 0.0
    %v3462 = vmax.f32 %v3454, 0.0
    %v3463 = vmax.f32 %v3455, 0.0
    %v3464 = vmax.f32 %v3456, 0.0
    %v3465 = vmax.f32 %v3457, 0.0
    %v3466 = vmax.f32 %v3458, 0.0
    %v3467 = vld [vmem:[#allocation8] sm:$0xff]
    %v3468 = vld [vmem:[#allocation8 + $0x8] sm:$0xff]
    %v3469 = vld [vmem:[#allocation8 + $0x10] sm:$0xff]
    %v3470 = vld [vmem:[#allocation8 + $0x18] sm:$0xff]
    %v3471 = vld [vmem:[#allocation8 + $0x20] sm:$0xff]
    %v3472 = vld [vmem:[#allocation8 + $0x28] sm:$0xff]
    %v3473 = vld [vmem:[#allocation8 + $0x30] sm:$0xff]
    %v3474 = vld [vmem:[#allocation8 + $0x38] sm:$0xff]
    %v3475 = vld [vmem:[#allocation8 + $0x40] sm:$0xff]
    %v3476 = vld [vmem:[#allocation8 + $0x48] sm:$0xff]
    %v3477 = vld [vmem:[#allocation8 + $0x50] sm:$0xff]
    %v3478 = vld [vmem:[#allocation8 + $0x58] sm:$0xff]
    %v3479 = vld [vmem:[#allocation8 + $0x60] sm:$0xff]
    %v3480 = vld [vmem:[#allocation8 + $0x68] sm:$0xff]
    %v3481 = vld [vmem:[#allocation8 + $0x70] sm:$0xff]
    %v3482 = vld [vmem:[#allocation8 + $0x78] sm:$0xff]
    %v3483 = vld [vmem:[#allocation8 + $0x80] sm:$0xff]
    %v3484 = vld [vmem:[#allocation8 + $0x88] sm:$0xff]
    %v3485 = vld [vmem:[#allocation8 + $0x90] sm:$0xff]
    %v3486 = vld [vmem:[#allocation8 + $0x98] sm:$0xff]
    %v3487 = vld [vmem:[#allocation8 + $0xa0] sm:$0xff]
    %v3488 = vld [vmem:[#allocation8 + $0xa8] sm:$0xff]
    %v3489 = vld [vmem:[#allocation8 + $0xb0] sm:$0xff]
    %v3490 = vld [vmem:[#allocation8 + $0xb8] sm:$0xff]
    %v3491 = vld [vmem:[#allocation8 + $0xc0] sm:$0xff]
    %v3492 = vld [vmem:[#allocation8 + $0xc8] sm:$0xff]
    %v3493 = vld [vmem:[#allocation8 + $0xd0] sm:$0xff]
    %v3494 = vld [vmem:[#allocation8 + $0xd8] sm:$0xff]
    %v3495 = vld [vmem:[#allocation8 + $0xe0] sm:$0xff]
    %v3496 = vld [vmem:[#allocation8 + $0xe8] sm:$0xff]
    %v3497 = vld [vmem:[#allocation8 + $0xf0] sm:$0xff]
    %v3498 = vld [vmem:[#allocation8 + $0xf8] sm:$0xff]
    %v3499 = vld [vmem:[#allocation8 + $0x100] sm:$0xff]
    %v3500 = vld [vmem:[#allocation8 + $0x108] sm:$0xff]
    %v3501 = vld [vmem:[#allocation8 + $0x110] sm:$0xff]
    %v3502 = vld [vmem:[#allocation8 + $0x118] sm:$0xff]
    %v3503 = vld [vmem:[#allocation8 + $0x120] sm:$0xff]
    %v3504 = vld [vmem:[#allocation8 + $0x128] sm:$0xff]
    %v3505 = vld [vmem:[#allocation8 + $0x130] sm:$0xff]
    %v3506 = vld [vmem:[#allocation8 + $0x138] sm:$0xff]
    %v3507 = vld [vmem:[#allocation8 + $0x140] sm:$0xff]
    %v3508 = vld [vmem:[#allocation8 + $0x148] sm:$0xff]
    %v3509 = vld [vmem:[#allocation8 + $0x150] sm:$0xff]
    %v3510 = vld [vmem:[#allocation8 + $0x158] sm:$0xff]
    %v3511 = vld [vmem:[#allocation8 + $0x160] sm:$0xff]
    %v3512 = vld [vmem:[#allocation8 + $0x168] sm:$0xff]
    %v3513 = vld [vmem:[#allocation8 + $0x170] sm:$0xff]
    %v3514 = vld [vmem:[#allocation8 + $0x178] sm:$0xff]
    %v3515 = vld [vmem:[#allocation8 + $0x180] sm:$0xff]
    %v3516 = vld [vmem:[#allocation8 + $0x188] sm:$0xff]
    %v3517 = vld [vmem:[#allocation8 + $0x190] sm:$0xff]
    %v3518 = vld [vmem:[#allocation8 + $0x198] sm:$0xff]
    %v3519 = vld [vmem:[#allocation8 + $0x1a0] sm:$0xff]
    %v3520 = vld [vmem:[#allocation8 + $0x1a8] sm:$0xff]
    %v3521 = vld [vmem:[#allocation8 + $0x1b0] sm:$0xff]
    %v3522 = vld [vmem:[#allocation8 + $0x1b8] sm:$0xff]
    %v3523 = vld [vmem:[#allocation8 + $0x1c0] sm:$0xff]
    %v3524 = vld [vmem:[#allocation8 + $0x1c8] sm:$0xff]
    %v3525 = vld [vmem:[#allocation8 + $0x1d0] sm:$0xff]
    %v3526 = vld [vmem:[#allocation8 + $0x1d8] sm:$0xff]
    %v3527 = vld [vmem:[#allocation8 + $0x1e0] sm:$0xff]
    %v3528 = vld [vmem:[#allocation8 + $0x1e8] sm:$0xff]
    %v3529 = vld [vmem:[#allocation8 + $0x1f0] sm:$0xff]
    %v3530 = vld [vmem:[#allocation8 + $0x1f8] sm:$0xff]
    %v3531 = vpack.c.bf16 %v3463, %v3459
    %v3532 = vpack.c.bf16 %v3464, %v3460
    %v3533 = vpack.c.bf16 %v3465, %v3461
    %v3534 = vpack.c.bf16 %v3466, %v3462
    %v3599 = vunpack.c.l.b16 %v3467
    %v3600 = vunpack.c.h.b16 %v3467
    %v3601 = vunpack.c.l.b16 %v3468
    %v3602 = vunpack.c.h.b16 %v3468
    %v3603 = vunpack.c.l.b16 %v3469
    %v3604 = vunpack.c.h.b16 %v3469
    %v3605 = vunpack.c.l.b16 %v3470
    %v3606 = vunpack.c.h.b16 %v3470
    %v3607 = vunpack.c.l.b16 %v3471
    %v3608 = vunpack.c.h.b16 %v3471
    %v3609 = vunpack.c.l.b16 %v3472
    %v3610 = vunpack.c.h.b16 %v3472
    %v3611 = vunpack.c.l.b16 %v3473
    %v3612 = vunpack.c.h.b16 %v3473
    %v3613 = vunpack.c.l.b16 %v3474
    %v3614 = vunpack.c.h.b16 %v3474
    %v3615 = vunpack.c.l.b16 %v3475
    %v3616 = vunpack.c.h.b16 %v3475
    %v3617 = vunpack.c.l.b16 %v3476
    %v3618 = vunpack.c.h.b16 %v3476
    %v3619 = vunpack.c.l.b16 %v3477
    %v3620 = vunpack.c.h.b16 %v3477
    %v3621 = vunpack.c.l.b16 %v3478
    %v3622 = vunpack.c.h.b16 %v3478
    %v3623 = vunpack.c.l.b16 %v3479
    %v3624 = vunpack.c.h.b16 %v3479
    %v3625 = vunpack.c.l.b16 %v3480
    %v3626 = vunpack.c.h.b16 %v3480
    %v3627 = vunpack.c.l.b16 %v3481
    %v3628 = vunpack.c.h.b16 %v3481
    %v3629 = vunpack.c.l.b16 %v3482
    %v3630 = vunpack.c.h.b16 %v3482
    %v3631 = vunpack.c.l.b16 %v3483
    %v3632 = vunpack.c.h.b16 %v3483
    %v3633 = vunpack.c.l.b16 %v3484
    %v3634 = vunpack.c.h.b16 %v3484
    %v3635 = vunpack.c.l.b16 %v3485
    %v3636 = vunpack.c.h.b16 %v3485
    %v3637 = vunpack.c.l.b16 %v3486
    %v3638 = vunpack.c.h.b16 %v3486
    %v3639 = vunpack.c.l.b16 %v3487
    %v3640 = vunpack.c.h.b16 %v3487
    %v3641 = vunpack.c.l.b16 %v3488
    %v3642 = vunpack.c.h.b16 %v3488
    %v3643 = vunpack.c.l.b16 %v3489
    %v3644 = vunpack.c.h.b16 %v3489
    %v3645 = vunpack.c.l.b16 %v3490
    %v3646 = vunpack.c.h.b16 %v3490
    %v3647 = vunpack.c.l.b16 %v3491
    %v3648 = vunpack.c.h.b16 %v3491
    %v3649 = vunpack.c.l.b16 %v3492
    %v3650 = vunpack.c.h.b16 %v3492
    %v3651 = vunpack.c.l.b16 %v3493
    %v3652 = vunpack.c.h.b16 %v3493
    %v3653 = vunpack.c.l.b16 %v3494
    %v3654 = vunpack.c.h.b16 %v3494
    %v3655 = vunpack.c.l.b16 %v3495
    %v3656 = vunpack.c.h.b16 %v3495
    %v3657 = vunpack.c.l.b16 %v3496
    %v3658 = vunpack.c.h.b16 %v3496
    %v3659 = vunpack.c.l.b16 %v3497
    %v3660 = vunpack.c.h.b16 %v3497
    %v3661 = vunpack.c.l.b16 %v3498
    %v3662 = vunpack.c.h.b16 %v3498
    %v3663 = vunpack.c.l.b16 %v3499
    %v3664 = vunpack.c.h.b16 %v3499
    %v3665 = vunpack.c.l.b16 %v3500
    %v3666 = vunpack.c.h.b16 %v3500
    %v3667 = vunpack.c.l.b16 %v3501
    %v3668 = vunpack.c.h.b16 %v3501
    %v3669 = vunpack.c.l.b16 %v3502
    %v3670 = vunpack.c.h.b16 %v3502
    %v3671 = vunpack.c.l.b16 %v3503
    %v3672 = vunpack.c.h.b16 %v3503
    %v3673 = vunpack.c.l.b16 %v3504
    %v3674 = vunpack.c.h.b16 %v3504
    %v3675 = vunpack.c.l.b16 %v3505
    %v3676 = vunpack.c.h.b16 %v3505
    %v3677 = vunpack.c.l.b16 %v3506
    %v3678 = vunpack.c.h.b16 %v3506
    %v3679 = vunpack.c.l.b16 %v3507
    %v3680 = vunpack.c.h.b16 %v3507
    %v3681 = vunpack.c.l.b16 %v3508
    %v3682 = vunpack.c.h.b16 %v3508
    %v3683 = vunpack.c.l.b16 %v3509
    %v3684 = vunpack.c.h.b16 %v3509
    %v3685 = vunpack.c.l.b16 %v3510
    %v3686 = vunpack.c.h.b16 %v3510
    %v3687 = vunpack.c.l.b16 %v3511
    %v3688 = vunpack.c.h.b16 %v3511
    %v3689 = vunpack.c.l.b16 %v3512
    %v3690 = vunpack.c.h.b16 %v3512
    %v3691 = vunpack.c.l.b16 %v3513
    %v3692 = vunpack.c.h.b16 %v3513
    %v3693 = vunpack.c.l.b16 %v3514
    %v3694 = vunpack.c.h.b16 %v3514
    %v3695 = vunpack.c.l.b16 %v3515
    %v3696 = vunpack.c.h.b16 %v3515
    %v3697 = vunpack.c.l.b16 %v3516
    %v3698 = vunpack.c.h.b16 %v3516
    %v3699 = vunpack.c.l.b16 %v3517
    %v3700 = vunpack.c.h.b16 %v3517
    %v3701 = vunpack.c.l.b16 %v3518
    %v3702 = vunpack.c.h.b16 %v3518
    %v3703 = vunpack.c.l.b16 %v3519
    %v3704 = vunpack.c.h.b16 %v3519
    %v3705 = vunpack.c.l.b16 %v3520
    %v3706 = vunpack.c.h.b16 %v3520
    %v3707 = vunpack.c.l.b16 %v3521
    %v3708 = vunpack.c.h.b16 %v3521
    %v3709 = vunpack.c.l.b16 %v3522
    %v3710 = vunpack.c.h.b16 %v3522
    %v3711 = vunpack.c.l.b16 %v3523
    %v3712 = vunpack.c.h.b16 %v3523
    %v3713 = vunpack.c.l.b16 %v3524
    %v3714 = vunpack.c.h.b16 %v3524
    %v3715 = vunpack.c.l.b16 %v3525
    %v3716 = vunpack.c.h.b16 %v3525
    %v3717 = vunpack.c.l.b16 %v3526
    %v3718 = vunpack.c.h.b16 %v3526
    %v3719 = vunpack.c.l.b16 %v3527
    %v3720 = vunpack.c.h.b16 %v3527
    %v3721 = vunpack.c.l.b16 %v3528
    %v3722 = vunpack.c.h.b16 %v3528
    %v3723 = vunpack.c.l.b16 %v3529
    %v3724 = vunpack.c.h.b16 %v3529
    %v3725 = vunpack.c.l.b16 %v3530
    %v3726 = vunpack.c.h.b16 %v3530
    %v3727 = vpack.c.b16 %v3601, %v3599
    %v3728 = vpack.c.b16 %v3602, %v3600
    %v3729 = vpack.c.b16 %v3605, %v3603
    %v3730 = vpack.c.b16 %v3606, %v3604
    %v3731 = vpack.c.b16 %v3609, %v3607
    %v3732 = vpack.c.b16 %v3610, %v3608
    %v3733 = vpack.c.b16 %v3613, %v3611
    %v3734 = vpack.c.b16 %v3614, %v3612
    %v3735 = vpack.c.b16 %v3617, %v3615
    %v3736 = vpack.c.b16 %v3618, %v3616
    %v3737 = vpack.c.b16 %v3621, %v3619
    %v3738 = vpack.c.b16 %v3622, %v3620
    %v3739 = vpack.c.b16 %v3625, %v3623
    %v3740 = vpack.c.b16 %v3626, %v3624
    %v3741 = vpack.c.b16 %v3629, %v3627
    %v3742 = vpack.c.b16 %v3630, %v3628
    %v3743 = vpack.c.b16 %v3633, %v3631
    %v3744 = vpack.c.b16 %v3634, %v3632
    %v3745 = vpack.c.b16 %v3637, %v3635
    %v3746 = vpack.c.b16 %v3638, %v3636
    %v3747 = vpack.c.b16 %v3641, %v3639
    %v3748 = vpack.c.b16 %v3642, %v3640
    %v3749 = vpack.c.b16 %v3645, %v3643
    %v3750 = vpack.c.b16 %v3646, %v3644
    %v3751 = vpack.c.b16 %v3649, %v3647
    %v3752 = vpack.c.b16 %v3650, %v3648
    %v3753 = vpack.c.b16 %v3653, %v3651
    %v3754 = vpack.c.b16 %v3654, %v3652
    %v3755 = vpack.c.b16 %v3657, %v3655
    %v3756 = vpack.c.b16 %v3658, %v3656
    %v3757 = vpack.c.b16 %v3661, %v3659
    %v3758 = vpack.c.b16 %v3662, %v3660
    %v3759 = vpack.c.b16 %v3665, %v3663
    %v3760 = vpack.c.b16 %v3666, %v3664
    %v3761 = vpack.c.b16 %v3669, %v3667
    %v3762 = vpack.c.b16 %v3670, %v3668
    %v3763 = vpack.c.b16 %v3673, %v3671
    %v3764 = vpack.c.b16 %v3674, %v3672
    %v3765 = vpack.c.b16 %v3677, %v3675
    %v3766 = vpack.c.b16 %v3678, %v3676
    %v3767 = vpack.c.b16 %v3681, %v3679
    %v3768 = vpack.c.b16 %v3682, %v3680
    %v3769 = vpack.c.b16 %v3685, %v3683
    %v3770 = vpack.c.b16 %v3686, %v3684
    %v3771 = vpack.c.b16 %v3689, %v3687
    %v3772 = vpack.c.b16 %v3690, %v3688
    %v3773 = vpack.c.b16 %v3693, %v3691
    %v3774 = vpack.c.b16 %v3694, %v3692
    %v3775 = vpack.c.b16 %v3697, %v3695
    %v3776 = vpack.c.b16 %v3698, %v3696
    %v3777 = vpack.c.b16 %v3701, %v3699
    %v3778 = vpack.c.b16 %v3702, %v3700
    %v3779 = vpack.c.b16 %v3705, %v3703
    %v3780 = vpack.c.b16 %v3706, %v3704
    %v3781 = vpack.c.b16 %v3709, %v3707
    %v3782 = vpack.c.b16 %v3710, %v3708
    %v3783 = vpack.c.b16 %v3713, %v3711
    %v3784 = vpack.c.b16 %v3714, %v3712
    %v3785 = vpack.c.b16 %v3717, %v3715
    %v3786 = vpack.c.b16 %v3718, %v3716
    %v3787 = vpack.c.b16 %v3721, %v3719
    %v3788 = vpack.c.b16 %v3722, %v3720
    %v3789 = vpack.c.b16 %v3725, %v3723
    %v3790 = vpack.c.b16 %v3726, %v3724
    %3855 = vmatpush.bf16.msra.mxu0 %v3741
    %3856 = vmatpush.bf16.msra.mxu0 %v3739
    %3857 = vmatpush.bf16.msra.mxu0 %v3737
    %3858 = vmatpush.bf16.msra.mxu0 %v3735
    %3859 = vmatpush.bf16.msra.mxu0 %v3733
    %3860 = vmatpush.bf16.msra.mxu0 %v3731
    %3861 = vmatpush.bf16.msra.mxu0 %v3729
    %3862 = vmatpush.bf16.msra.mxu0 %v3727
    %3863 = vmatmul.bf16.gmra.mxu0 %v3531
    %v3864 = vpop.f32.mrf.mxu0
    %v3865 = vadd.f32 0.0, %v3864
    %v3866 = vpop.f32.mrf.mxu0
    %v3867 = vadd.f32 0.0, %v3866
    %3868 = vdwg.mxu0
    %3869 = vmatpush.bf16.msra.mxu0 %v3757
    %3870 = vmatpush.bf16.msra.mxu0 %v3755
    %3871 = vmatpush.bf16.msra.mxu0 %v3753
    %3872 = vmatpush.bf16.msra.mxu0 %v3751
    %3873 = vmatpush.bf16.msra.mxu0 %v3749
    %3874 = vmatpush.bf16.msra.mxu0 %v3747
    %3875 = vmatpush.bf16.msra.mxu0 %v3745
    %3876 = vmatpush.bf16.msra.mxu0 %v3743
    %3877 = vmatmul.bf16.gmra.mxu0 %v3532
    %v3878 = vpop.f32.mrf.mxu0
    %v3879 = vadd.f32 %v3865, %v3878
    %v3880 = vpop.f32.mrf.mxu0
    %v3881 = vadd.f32 %v3867, %v3880
    %3882 = vdwg.mxu0
    %3883 = vmatpush.bf16.msra.mxu0 %v3773
    %3884 = vmatpush.bf16.msra.mxu0 %v3771
    %3885 = vmatpush.bf16.msra.mxu0 %v3769
    %3886 = vmatpush.bf16.msra.mxu0 %v3767
    %3887 = vmatpush.bf16.msra.mxu0 %v3765
    %3888 = vmatpush.bf16.msra.mxu0 %v3763
    %3889 = vmatpush.bf16.msra.mxu0 %v3761
    %3890 = vmatpush.bf16.msra.mxu0 %v3759
    %3891 = vmatmul.bf16.gmra.mxu0 %v3533
    %v3892 = vpop.f32.mrf.mxu0
    %v3893 = vadd.f32 %v3879, %v3892
    %v3894 = vpop.f32.mrf.mxu0
    %v3895 = vadd.f32 %v3881, %v3894
    %3896 = vdwg.mxu0
    %3897 = vmatpush.bf16.msra.mxu0 %v3789
    %3898 = vmatpush.bf16.msra.mxu0 %v3787
    %3899 = vmatpush.bf16.msra.mxu0 %v3785
    %3900 = vmatpush.bf16.msra.mxu0 %v3783
    %3901 = vmatpush.bf16.msra.mxu0 %v3781
    %3902 = vmatpush.bf16.msra.mxu0 %v3779
    %3903 = vmatpush.bf16.msra.mxu0 %v3777
    %3904 = vmatpush.bf16.msra.mxu0 %v3775
    %3905 = vmatmul.bf16.gmra.mxu0 %v3534
    %v3906 = vpop.f32.mrf.mxu0
    %v3907 = vadd.f32 %v3893, %v3906
    %v3908 = vpop.f32.mrf.mxu0
    %v3909 = vadd.f32 %v3895, %v3908
    %3910 = vdwg.mxu0
    %3911 = vmatpush.bf16.msra.mxu0 %v3742
    %3912 = vmatpush.bf16.msra.mxu0 %v3740
    %3913 = vmatpush.bf16.msra.mxu0 %v3738
    %3914 = vmatpush.bf16.msra.mxu0 %v3736
    %3915 = vmatpush.bf16.msra.mxu0 %v3734
    %3916 = vmatpush.bf16.msra.mxu0 %v3732
    %3917 = vmatpush.bf16.msra.mxu0 %v3730
    %3918 = vmatpush.bf16.msra.mxu0 %v3728
    %3919 = vmatmul.bf16.gmra.mxu0 %v3531
    %v3920 = vpop.f32.mrf.mxu0
    %v3921 = vadd.f32 0.0, %v3920
    %v3922 = vpop.f32.mrf.mxu0
    %v3923 = vadd.f32 0.0, %v3922
    %3924 = vdwg.mxu0
    %3925 = vmatpush.bf16.msra.mxu0 %v3758
    %3926 = vmatpush.bf16.msra.mxu0 %v3756
    %3927 = vmatpush.bf16.msra.mxu0 %v3754
    %3928 = vmatpush.bf16.msra.mxu0 %v3752
    %3929 = vmatpush.bf16.msra.mxu0 %v3750
    %3930 = vmatpush.bf16.msra.mxu0 %v3748
    %3931 = vmatpush.bf16.msra.mxu0 %v3746
    %3932 = vmatpush.bf16.msra.mxu0 %v3744
    %3933 = vmatmul.bf16.gmra.mxu0 %v3532
    %v3934 = vpop.f32.mrf.mxu0
    %v3935 = vadd.f32 %v3921, %v3934
    %v3936 = vpop.f32.mrf.mxu0
    %v3937 = vadd.f32 %v3923, %v3936
    %3938 = vdwg.mxu0
    %3939 = vmatpush.bf16.msra.mxu0 %v3774
    %3940 = vmatpush.bf16.msra.mxu0 %v3772
    %3941 = vmatpush.bf16.msra.mxu0 %v3770
    %3942 = vmatpush.bf16.msra.mxu0 %v3768
    %3943 = vmatpush.bf16.msra.mxu0 %v3766
    %3944 = vmatpush.bf16.msra.mxu0 %v3764
    %3945 = vmatpush.bf16.msra.mxu0 %v3762
    %3946 = vmatpush.bf16.msra.mxu0 %v3760
    %3947 = vmatmul.bf16.gmra.mxu0 %v3533
    %v3948 = vpop.f32.mrf.mxu0
    %v3949 = vadd.f32 %v3935, %v3948
    %v3950 = vpop.f32.mrf.mxu0
    %v3951 = vadd.f32 %v3937, %v3950
    %3952 = vdwg.mxu0
    %3953 = vmatpush.bf16.msra.mxu0 %v3790
    %3954 = vmatpush.bf16.msra.mxu0 %v3788
    %3955 = vmatpush.bf16.msra.mxu0 %v3786
    %3956 = vmatpush.bf16.msra.mxu0 %v3784
    %3957 = vmatpush.bf16.msra.mxu0 %v3782
    %3958 = vmatpush.bf16.msra.mxu0 %v3780
    %3959 = vmatpush.bf16.msra.mxu0 %v3778
    %3960 = vmatpush.bf16.msra.mxu0 %v3776
    %3961 = vmatmul.bf16.gmra.mxu0 %v3534
    %v3962 = vpop.f32.mrf.mxu0
    %v3963 = vadd.f32 %v3949, %v3962
    %v3964 = vpop.f32.mrf.mxu0
    %v3965 = vadd.f32 %v3951, %v3964
    %3966 = vdwg.mxu0
    %v3967 = vrot.slane %v3907, 4
    %v3968 = vadd.f32 %v3907, %v3967
    %v3969 = vrot.slane %v3968, 2
    %v3970 = vadd.f32 %v3968, %v3969
    %v3971 = vrot.slane %v3970, 1
    %v3972 = vadd.f32 %v3970, %v3971
    %v3973 = vrot.slane %v3963, 4
    %v3974 = vadd.f32 %v3963, %v3973
    %v3975 = vrot.slane %v3974, 2
    %v3976 = vadd.f32 %v3974, %v3975
    %v3977 = vrot.slane %v3976, 1
    %v3978 = vadd.f32 %v3976, %v3977
    %v3979 = vrot.slane %v3909, 4
    %v3980 = vadd.f32 %v3909, %v3979
    %v3981 = vrot.slane %v3980, 2
    %v3982 = vadd.f32 %v3980, %v3981
    %v3983 = vrot.slane %v3982, 1
    %v3984 = vadd.f32 %v3982, %v3983
    %v3985 = vrot.slane %v3965, 4
    %v3986 = vadd.f32 %v3965, %v3985
    %v3987 = vrot.slane %v3986, 2
    %v3988 = vadd.f32 %v3986, %v3987
    %v3989 = vrot.slane %v3988, 1
    %v3990 = vadd.f32 %v3988, %v3989
    %v3991 = vmul.f32 %v3972, %v536
    %v3992 = vmul.f32 %v3978, %v536
    %v3993 = vmul.f32 %v3984, %v536
    %v3994 = vmul.f32 %v3990, %v536
    %v3995 = vmul.f32 %v3907, %v3907
    %v3996 = vmul.f32 %v3963, %v3963
    %v3997 = vmul.f32 %v3909, %v3909
    %v3998 = vmul.f32 %v3965, %v3965
    %v3999 = vrot.slane %v3995, 4
    %v4000 = vadd.f32 %v3995, %v3999
    %v4001 = vrot.slane %v4000, 2
    %v4002 = vadd.f32 %v4000, %v4001
    %v4003 = vrot.slane %v4002, 1
    %v4004 = vadd.f32 %v4002, %v4003
    %v4005 = vrot.slane %v3996, 4
    %v4006 = vadd.f32 %v3996, %v4005
    %v4007 = vrot.slane %v4006, 2
    %v4008 = vadd.f32 %v4006, %v4007
    %v4009 = vrot.slane %v4008, 1
    %v4010 = vadd.f32 %v4008, %v4009
    %v4011 = vrot.slane %v3997, 4
    %v4012 = vadd.f32 %v3997, %v4011
    %v4013 = vrot.slane %v4012, 2
    %v4014 = vadd.f32 %v4012, %v4013
    %v4015 = vrot.slane %v4014, 1
    %v4016 = vadd.f32 %v4014, %v4015
    %v4017 = vrot.slane %v3998, 4
    %v4018 = vadd.f32 %v3998, %v4017
    %v4019 = vrot.slane %v4018, 2
    %v4020 = vadd.f32 %v4018, %v4019
    %v4021 = vrot.slane %v4020, 1
    %v4022 = vadd.f32 %v4020, %v4021
    %v4023 = vmul.f32 %v4004, %v536
    %v4024 = vmul.f32 %v4010, %v536
    %v4025 = vmul.f32 %v4016, %v536
    %v4026 = vmul.f32 %v4022, %v536
    %v4027 = vmul.f32 %v3991, %v3991
    %v4028 = vmul.f32 %v3992, %v3992
    %v4029 = vmul.f32 %v3993, %v3993
    %v4030 = vmul.f32 %v3994, %v3994
    %v4031 = vsub.f32 %v4023, %v4027
    %v4032 = vsub.f32 %v4024, %v4028
    %v4033 = vsub.f32 %v4025, %v4029
    %v4034 = vsub.f32 %v4026, %v4030
    %s4035 = scalar_lea.vmem [#allocation11], 4
    %v4036 = vld [vmem:[%s4035] ss:$8 sm:$0x3]
    %s4037 = scalar_lea.vmem [#allocation11], 5
    %v4038 = vld [vmem:[%s4037] ss:$8 sm:$0x3]
    %v4039 = vadd.f32 %v4031, 1e-05
    %v4040 = vadd.f32 %v4032, 1e-05
    %v4041 = vadd.f32 %v4033, 1e-05
    %v4042 = vadd.f32 %v4034, 1e-05
    %v4043 = vrsqrt.pop %v4039
    %v4044 = vmul.f32 %v4043, %v4039
    %v4045 = vmul.f32 %v4044, %v4043
    %v4046 = vmul.f32 0.5, %v4045
    %v4047 = vsub.f32 1.5, %v4046
    %v4048 = vmul.f32 %v4043, %v4047
    %vm4049 = vweird.f32 %v4039
    %vm4050 = vweird.f32 %v4043
    %vm4051 = vmor %vm4049, %vm4050
    %v4052 = vsel %vm4051, %v4043, %v4048
    %v4053 = vrsqrt.pop %v4040
    %v4054 = vmul.f32 %v4053, %v4040
    %v4055 = vmul.f32 %v4054, %v4053
    %v4056 = vmul.f32 0.5, %v4055
    %v4057 = vsub.f32 1.5, %v4056
    %v4058 = vmul.f32 %v4053, %v4057
    %vm4059 = vweird.f32 %v4040
    %vm4060 = vweird.f32 %v4053
    %vm4061 = vmor %vm4059, %vm4060
    %v4062 = vsel %vm4061, %v4053, %v4058
    %v4063 = vrsqrt.pop %v4041
    %v4064 = vmul.f32 %v4063, %v4041
    %v4065 = vmul.f32 %v4064, %v4063
    %v4066 = vmul.f32 0.5, %v4065
    %v4067 = vsub.f32 1.5, %v4066
    %v4068 = vmul.f32 %v4063, %v4067
    %vm4069 = vweird.f32 %v4041
    %vm4070 = vweird.f32 %v4063
    %vm4071 = vmor %vm4069, %vm4070
    %v4072 = vsel %vm4071, %v4063, %v4068
    %v4073 = vrsqrt.pop %v4042
    %v4074 = vmul.f32 %v4073, %v4042
    %v4075 = vmul.f32 %v4074, %v4073
    %v4076 = vmul.f32 0.5, %v4075
    %v4077 = vsub.f32 1.5, %v4076
    %v4078 = vmul.f32 %v4073, %v4077
    %vm4079 = vweird.f32 %v4042
    %vm4080 = vweird.f32 %v4073
    %vm4081 = vmor %vm4079, %vm4080
    %v4082 = vsel %vm4081, %v4073, %v4078
    %v4087 = vrot.slane %v4062, 7
    %v4088 = vrot.slane %v4082, 7
    %v4089 = vsel %vm926, %v4052, %v4087
    %v4090 = vsel %vm926, %v4072, %v4088
    %v4093 = vmul.f32 %v4036, %v4089
    %v4094 = vmul.f32 %v4036, %v4090
    %v4097 = vperm.slane %v4093, 0
    %v4098 = vperm.slane %v4093, 1
    %v4099 = vperm.slane %v4094, 0
    %v4100 = vperm.slane %v4094, 1
    %v4105 = vmul.f32 %v3991, %v4097
    %v4106 = vmul.f32 %v3992, %v4098
    %v4107 = vmul.f32 %v3993, %v4099
    %v4108 = vmul.f32 %v3994, %v4100
    %v4113 = vrot.slane %v4106, 7
    %v4114 = vrot.slane %v4108, 7
    %v4115 = vsel %vm926, %v4105, %v4113
    %v4116 = vsel %vm926, %v4107, %v4114
    %v4119 = vsub.f32 %v4038, %v4115
    %v4120 = vsub.f32 %v4038, %v4116
    %v4121 = vmul.f32 %v3907, %v4097
    %v4122 = vmul.f32 %v3963, %v4098
    %v4123 = vmul.f32 %v3909, %v4099
    %v4124 = vmul.f32 %v3965, %v4100
    %v4127 = vperm.slane %v4119, 0
    %v4128 = vperm.slane %v4119, 1
    %v4129 = vperm.slane %v4120, 0
    %v4130 = vperm.slane %v4120, 1
    %v4135 = vadd.f32 %v4121, %v4127
    %v4136 = vadd.f32 %v4122, %v4128
    %v4137 = vadd.f32 %v4123, %v4129
    %v4138 = vadd.f32 %v4124, %v4130
    %v4139 = vmax.f32 %v4135, 0.0
    %v4140 = vmax.f32 %v4136, 0.0
    %v4141 = vmax.f32 %v4137, 0.0
    %v4142 = vmax.f32 %v4138, 0.0
    %v4143 = vld [vmem:[#allocation10] sm:$0xf]
    %v4144 = vld [vmem:[#allocation10 + $0x4] sm:$0xf]
    %v4145 = vld [vmem:[#allocation10 + $0x8] sm:$0xf]
    %v4146 = vld [vmem:[#allocation10 + $0xc] sm:$0xf]
    %v4147 = vld [vmem:[#allocation10 + $0x10] sm:$0xf]
    %v4148 = vld [vmem:[#allocation10 + $0x14] sm:$0xf]
    %v4149 = vld [vmem:[#allocation10 + $0x18] sm:$0xf]
    %v4150 = vld [vmem:[#allocation10 + $0x1c] sm:$0xf]
    %v4151 = vld [vmem:[#allocation10 + $0x20] sm:$0xf]
    %v4152 = vld [vmem:[#allocation10 + $0x24] sm:$0xf]
    %v4153 = vld [vmem:[#allocation10 + $0x28] sm:$0xf]
    %v4154 = vld [vmem:[#allocation10 + $0x2c] sm:$0xf]
    %v4155 = vld [vmem:[#allocation10 + $0x30] sm:$0xf]
    %v4156 = vld [vmem:[#allocation10 + $0x34] sm:$0xf]
    %v4157 = vld [vmem:[#allocation10 + $0x38] sm:$0xf]
    %v4158 = vld [vmem:[#allocation10 + $0x3c] sm:$0xf]
    %v4159 = vld [vmem:[#allocation10 + $0x40] sm:$0xf]
    %v4160 = vld [vmem:[#allocation10 + $0x44] sm:$0xf]
    %v4161 = vld [vmem:[#allocation10 + $0x48] sm:$0xf]
    %v4162 = vld [vmem:[#allocation10 + $0x4c] sm:$0xf]
    %v4163 = vld [vmem:[#allocation10 + $0x50] sm:$0xf]
    %v4164 = vld [vmem:[#allocation10 + $0x54] sm:$0xf]
    %v4165 = vld [vmem:[#allocation10 + $0x58] sm:$0xf]
    %v4166 = vld [vmem:[#allocation10 + $0x5c] sm:$0xf]
    %v4167 = vld [vmem:[#allocation10 + $0x60] sm:$0xf]
    %v4168 = vld [vmem:[#allocation10 + $0x64] sm:$0xf]
    %v4169 = vld [vmem:[#allocation10 + $0x68] sm:$0xf]
    %v4170 = vld [vmem:[#allocation10 + $0x6c] sm:$0xf]
    %v4171 = vld [vmem:[#allocation10 + $0x70] sm:$0xf]
    %v4172 = vld [vmem:[#allocation10 + $0x74] sm:$0xf]
    %v4173 = vld [vmem:[#allocation10 + $0x78] sm:$0xf]
    %v4174 = vld [vmem:[#allocation10 + $0x7c] sm:$0xf]
    %v4175 = vpack.c.bf16 %v4141, %v4139
    %v4176 = vpack.c.bf16 %v4142, %v4140
    %v4209 = vunpack.c.l.b16 %v4143
    %v4210 = vunpack.c.l.b16 %v4144
    %v4211 = vunpack.c.l.b16 %v4145
    %v4212 = vunpack.c.l.b16 %v4146
    %v4213 = vunpack.c.l.b16 %v4147
    %v4214 = vunpack.c.l.b16 %v4148
    %v4215 = vunpack.c.l.b16 %v4149
    %v4216 = vunpack.c.l.b16 %v4150
    %v4217 = vunpack.c.l.b16 %v4151
    %v4218 = vunpack.c.l.b16 %v4152
    %v4219 = vunpack.c.l.b16 %v4153
    %v4220 = vunpack.c.l.b16 %v4154
    %v4221 = vunpack.c.l.b16 %v4155
    %v4222 = vunpack.c.l.b16 %v4156
    %v4223 = vunpack.c.l.b16 %v4157
    %v4224 = vunpack.c.l.b16 %v4158
    %v4225 = vunpack.c.l.b16 %v4159
    %v4226 = vunpack.c.l.b16 %v4160
    %v4227 = vunpack.c.l.b16 %v4161
    %v4228 = vunpack.c.l.b16 %v4162
    %v4229 = vunpack.c.l.b16 %v4163
    %v4230 = vunpack.c.l.b16 %v4164
    %v4231 = vunpack.c.l.b16 %v4165
    %v4232 = vunpack.c.l.b16 %v4166
    %v4233 = vunpack.c.l.b16 %v4167
    %v4234 = vunpack.c.l.b16 %v4168
    %v4235 = vunpack.c.l.b16 %v4169
    %v4236 = vunpack.c.l.b16 %v4170
    %v4237 = vunpack.c.l.b16 %v4171
    %v4238 = vunpack.c.l.b16 %v4172
    %v4239 = vunpack.c.l.b16 %v4173
    %v4240 = vunpack.c.l.b16 %v4174
    %v4241 = vpack.c.b16 %v4210, %v4209
    %v4242 = vpack.c.b16 %v4212, %v4211
    %v4243 = vpack.c.b16 %v4214, %v4213
    %v4244 = vpack.c.b16 %v4216, %v4215
    %v4245 = vpack.c.b16 %v4218, %v4217
    %v4246 = vpack.c.b16 %v4220, %v4219
    %v4247 = vpack.c.b16 %v4222, %v4221
    %v4248 = vpack.c.b16 %v4224, %v4223
    %v4249 = vpack.c.b16 %v4226, %v4225
    %v4250 = vpack.c.b16 %v4228, %v4227
    %v4251 = vpack.c.b16 %v4230, %v4229
    %v4252 = vpack.c.b16 %v4232, %v4231
    %v4253 = vpack.c.b16 %v4234, %v4233
    %v4254 = vpack.c.b16 %v4236, %v4235
    %v4255 = vpack.c.b16 %v4238, %v4237
    %v4256 = vpack.c.b16 %v4240, %v4239
    %4273 = vmatpush.bf16.msra.mxu0 %v4248
    %4274 = vmatpush.bf16.msra.mxu0 %v4247
    %4275 = vmatpush.bf16.msra.mxu0 %v4246
    %4276 = vmatpush.bf16.msra.mxu0 %v4245
    %4277 = vmatpush.bf16.msra.mxu0 %v4244
    %4278 = vmatpush.bf16.msra.mxu0 %v4243
    %4279 = vmatpush.bf16.msra.mxu0 %v4242
    %4280 = vmatpush.bf16.msra.mxu0 %v4241
    %4281 = vmatmul.bf16.gmra.mxu0 %v4175
    %v4282 = vpop.f32.mrf.mxu0
    %v4283 = vadd.f32 0.0, %v4282
    %v4284 = vpop.f32.mrf.mxu0
    %v4285 = vadd.f32 0.0, %v4284
    %4286 = vdwg.mxu0
    %4287 = vmatpush.bf16.msra.mxu0 %v4256
    %4288 = vmatpush.bf16.msra.mxu0 %v4255
    %4289 = vmatpush.bf16.msra.mxu0 %v4254
    %4290 = vmatpush.bf16.msra.mxu0 %v4253
    %4291 = vmatpush.bf16.msra.mxu0 %v4252
    %4292 = vmatpush.bf16.msra.mxu0 %v4251
    %4293 = vmatpush.bf16.msra.mxu0 %v4250
    %4294 = vmatpush.bf16.msra.mxu0 %v4249
    %4295 = vmatmul.bf16.gmra.mxu0 %v4176
    %v4296 = vpop.f32.mrf.mxu0
    %v4297 = vadd.f32 %v4283, %v4296
    %v4298 = vpop.f32.mrf.mxu0
    %v4299 = vadd.f32 %v4285, %v4298
    %4300 = vdwg.mxu0
    %v4301 = vrot.slane %v4297, 4
    %v4302 = vadd.f32 %v4297, %v4301
    %v4303 = vrot.slane %v4302, 2
    %v4304 = vadd.f32 %v4302, %v4303
    %v4305 = vrot.slane %v4304, 1
    %v4306 = vadd.f32 %v4304, %v4305
    %v4307 = vrot.slane %v4299, 4
    %v4308 = vadd.f32 %v4299, %v4307
    %v4309 = vrot.slane %v4308, 2
    %v4310 = vadd.f32 %v4308, %v4309
    %v4311 = vrot.slane %v4310, 1
    %v4312 = vadd.f32 %v4310, %v4311
    %v4313 = vmul.f32 %v4306, %v536
    %v4314 = vmul.f32 %v4312, %v536
    %v4315 = vmul.f32 %v4297, %v4297
    %v4316 = vmul.f32 %v4299, %v4299
    %v4317 = vrot.slane %v4315, 4
    %v4318 = vadd.f32 %v4315, %v4317
    %v4319 = vrot.slane %v4318, 2
    %v4320 = vadd.f32 %v4318, %v4319
    %v4321 = vrot.slane %v4320, 1
    %v4322 = vadd.f32 %v4320, %v4321
    %v4323 = vrot.slane %v4316, 4
    %v4324 = vadd.f32 %v4316, %v4323
    %v4325 = vrot.slane %v4324, 2
    %v4326 = vadd.f32 %v4324, %v4325
    %v4327 = vrot.slane %v4326, 1
    %v4328 = vadd.f32 %v4326, %v4327
    %v4329 = vmul.f32 %v4322, %v536
    %v4330 = vmul.f32 %v4328, %v536
    %v4331 = vmul.f32 %v4313, %v4313
    %v4332 = vmul.f32 %v4314, %v4314
    %v4333 = vsub.f32 %v4329, %v4331
    %v4334 = vsub.f32 %v4330, %v4332
    %v4335 = vld [vmem:[#allocation11 + $0x6] ss:$0 sm:$0xff]
    %v4336 = vld [vmem:[#allocation11 + $0x7] ss:$0 sm:$0xff]
    %v4337 = vadd.f32 %v4333, 1e-05
    %v4338 = vadd.f32 %v4334, 1e-05
    %v4339 = vrsqrt.pop %v4337
    %v4340 = vmul.f32 %v4339, %v4337
    %v4341 = vmul.f32 %v4340, %v4339
    %v4342 = vmul.f32 0.5, %v4341
    %v4343 = vsub.f32 1.5, %v4342
    %v4344 = vmul.f32 %v4339, %v4343
    %vm4345 = vweird.f32 %v4337
    %vm4346 = vweird.f32 %v4339
    %vm4347 = vmor %vm4345, %vm4346
    %v4348 = vsel %vm4347, %v4339, %v4344
    %v4349 = vrsqrt.pop %v4338
    %v4350 = vmul.f32 %v4349, %v4338
    %v4351 = vmul.f32 %v4350, %v4349
    %v4352 = vmul.f32 0.5, %v4351
    %v4353 = vsub.f32 1.5, %v4352
    %v4354 = vmul.f32 %v4349, %v4353
    %vm4355 = vweird.f32 %v4338
    %vm4356 = vweird.f32 %v4349
    %vm4357 = vmor %vm4355, %vm4356
    %v4358 = vsel %vm4357, %v4349, %v4354
    %v4359 = vmul.f32 %v4335, %v4348
    %v4360 = vmul.f32 %v4335, %v4358
    %v4361 = vmul.f32 %v4313, %v4359
    %v4362 = vmul.f32 %v4314, %v4360
    %v4363 = vsub.f32 %v4336, %v4361
    %v4364 = vsub.f32 %v4336, %v4362
    %v4365 = vmul.f32 %v4297, %v4359
    %v4366 = vmul.f32 %v4299, %v4360
    %v4367 = vadd.f32 %v4365, %v4363
    %v4368 = vadd.f32 %v4366, %v4364
    %v4369 = vmax.f32 %v4367, 0.0
    %v4370 = vmax.f32 %v4368, 0.0
    %v4371 = vld [vmem:[#allocation10 + $0x80] sm:$0xf]
    %v4372 = vld [vmem:[#allocation10 + $0x84] sm:$0xf]
    %v4373 = vld [vmem:[#allocation10 + $0x88] sm:$0xf]
    %v4374 = vld [vmem:[#allocation10 + $0x8c] sm:$0xf]
    %v4375 = vld [vmem:[#allocation10 + $0x90] sm:$0xf]
    %v4376 = vld [vmem:[#allocation10 + $0x94] sm:$0xf]
    %v4377 = vld [vmem:[#allocation10 + $0x98] sm:$0xf]
    %v4378 = vld [vmem:[#allocation10 + $0x9c] sm:$0xf]
    %v4379 = vld [vmem:[#allocation10 + $0xa0] sm:$0xf]
    %v4380 = vld [vmem:[#allocation10 + $0xa4] sm:$0xf]
    %v4381 = vld [vmem:[#allocation10 + $0xa8] sm:$0xf]
    %v4382 = vld [vmem:[#allocation10 + $0xac] sm:$0xf]
    %v4383 = vld [vmem:[#allocation10 + $0xb0] sm:$0xf]
    %v4384 = vld [vmem:[#allocation10 + $0xb4] sm:$0xf]
    %v4385 = vld [vmem:[#allocation10 + $0xb8] sm:$0xf]
    %v4386 = vld [vmem:[#allocation10 + $0xbc] sm:$0xf]
    %v4387 = vpack.c.bf16 %v4370, %v4369
    %v4388 = vld [vmem:[#allocation11 + $0x40] ss:$0 sm:$0xff]
    %v4405 = vunpack.c.l.b16 %v4371
    %v4406 = vunpack.c.l.b16 %v4372
    %v4407 = vunpack.c.l.b16 %v4373
    %v4408 = vunpack.c.l.b16 %v4374
    %v4409 = vunpack.c.l.b16 %v4375
    %v4410 = vunpack.c.l.b16 %v4376
    %v4411 = vunpack.c.l.b16 %v4377
    %v4412 = vunpack.c.l.b16 %v4378
    %v4413 = vunpack.c.l.b16 %v4379
    %v4414 = vunpack.c.l.b16 %v4380
    %v4415 = vunpack.c.l.b16 %v4381
    %v4416 = vunpack.c.l.b16 %v4382
    %v4417 = vunpack.c.l.b16 %v4383
    %v4418 = vunpack.c.l.b16 %v4384
    %v4419 = vunpack.c.l.b16 %v4385
    %v4420 = vunpack.c.l.b16 %v4386
    %v4421 = vpack.c.b16 %v4406, %v4405
    %v4422 = vpack.c.b16 %v4408, %v4407
    %v4423 = vpack.c.b16 %v4410, %v4409
    %v4424 = vpack.c.b16 %v4412, %v4411
    %v4425 = vpack.c.b16 %v4414, %v4413
    %v4426 = vpack.c.b16 %v4416, %v4415
    %v4427 = vpack.c.b16 %v4418, %v4417
    %v4428 = vpack.c.b16 %v4420, %v4419
    %4437 = vmatpush.bf16.msra.mxu0 %v4428
    %4438 = vmatpush.bf16.msra.mxu0 %v4427
    %4439 = vmatpush.bf16.msra.mxu0 %v4426
    %4440 = vmatpush.bf16.msra.mxu0 %v4425
    %4441 = vmatpush.bf16.msra.mxu0 %v4424
    %4442 = vmatpush.bf16.msra.mxu0 %v4423
    %4443 = vmatpush.bf16.msra.mxu0 %v4422
    %4444 = vmatpush.bf16.msra.mxu0 %v4421
    %4445 = vmatmul.bf16.gmra.mxu0 %v4387
    %v4446 = vpop.f32.mrf.mxu0
    %v4447 = vadd.f32 %v4388, %v4446
    %v4448 = vpop.f32.mrf.mxu0
    %v4449 = vadd.f32 %v4388, %v4448
    %4450 = vdwg.mxu0
    %v4451 = vld [vmem:[#allocation10 + $0xc0] sm:$0xf]
    %v4452 = vld [vmem:[#allocation10 + $0xc4] sm:$0xf]
    %v4453 = vld [vmem:[#allocation10 + $0xc8] sm:$0xf]
    %v4454 = vld [vmem:[#allocation10 + $0xcc] sm:$0xf]
    %v4455 = vld [vmem:[#allocation10 + $0xd0] sm:$0xf]
    %v4456 = vld [vmem:[#allocation10 + $0xd4] sm:$0xf]
    %v4457 = vld [vmem:[#allocation10 + $0xd8] sm:$0xf]
    %v4458 = vld [vmem:[#allocation10 + $0xdc] sm:$0xf]
    %v4459 = vld [vmem:[#allocation10 + $0xe0] sm:$0xf]
    %v4460 = vld [vmem:[#allocation10 + $0xe4] sm:$0xf]
    %v4461 = vld [vmem:[#allocation10 + $0xe8] sm:$0xf]
    %v4462 = vld [vmem:[#allocation10 + $0xec] sm:$0xf]
    %v4463 = vld [vmem:[#allocation10 + $0xf0] sm:$0xf]
    %v4464 = vld [vmem:[#allocation10 + $0xf4] sm:$0xf]
    %v4465 = vld [vmem:[#allocation10 + $0xf8] sm:$0xf]
    %v4466 = vld [vmem:[#allocation10 + $0xfc] sm:$0xf]
    %v4467 = vpack.c.bf16 %v4449, %v4447
    %v4484 = vunpack.c.l.b16 %v4451
    %v4485 = vunpack.c.l.b16 %v4452
    %v4486 = vunpack.c.l.b16 %v4453
    %v4487 = vunpack.c.l.b16 %v4454
    %v4488 = vunpack.c.l.b16 %v4455
    %v4489 = vunpack.c.l.b16 %v4456
    %v4490 = vunpack.c.l.b16 %v4457
    %v4491 = vunpack.c.l.b16 %v4458
    %v4492 = vunpack.c.l.b16 %v4459
    %v4493 = vunpack.c.l.b16 %v4460
    %v4494 = vunpack.c.l.b16 %v4461
    %v4495 = vunpack.c.l.b16 %v4462
    %v4496 = vunpack.c.l.b16 %v4463
    %v4497 = vunpack.c.l.b16 %v4464
    %v4498 = vunpack.c.l.b16 %v4465
    %v4499 = vunpack.c.l.b16 %v4466
    %v4500 = vpack.c.b16 %v4485, %v4484
    %v4501 = vpack.c.b16 %v4487, %v4486
    %v4502 = vpack.c.b16 %v4489, %v4488
    %v4503 = vpack.c.b16 %v4491, %v4490
    %v4504 = vpack.c.b16 %v4493, %v4492
    %v4505 = vpack.c.b16 %v4495, %v4494
    %v4506 = vpack.c.b16 %v4497, %v4496
    %v4507 = vpack.c.b16 %v4499, %v4498
    %4516 = vmatpush.bf16.msra.mxu0 %v4507
    %4517 = vmatpush.bf16.msra.mxu0 %v4506
    %4518 = vmatpush.bf16.msra.mxu0 %v4505
    %4519 = vmatpush.bf16.msra.mxu0 %v4504
    %4520 = vmatpush.bf16.msra.mxu0 %v4503
    %4521 = vmatpush.bf16.msra.mxu0 %v4502
    %4522 = vmatpush.bf16.msra.mxu0 %v4501
    %4523 = vmatpush.bf16.msra.mxu0 %v4500
    %4524 = vmatmul.bf16.gmra.mxu0 %v4467
    %v4525 = vpop.f32.mrf.mxu0
    %v4526 = vadd.f32 0.0, %v4525
    %v4527 = vpop.f32.mrf.mxu0
    %v4528 = vadd.f32 0.0, %v4527
    %4529 = vdwg.mxu0
    %v4530 = vrot.slane %v4526, 4
    %v4531 = vadd.f32 %v4526, %v4530
    %v4532 = vrot.slane %v4531, 2
    %v4533 = vadd.f32 %v4531, %v4532
    %v4534 = vrot.slane %v4533, 1
    %v4535 = vadd.f32 %v4533, %v4534
    %v4536 = vrot.slane %v4528, 4
    %v4537 = vadd.f32 %v4528, %v4536
    %v4538 = vrot.slane %v4537, 2
    %v4539 = vadd.f32 %v4537, %v4538
    %v4540 = vrot.slane %v4539, 1
    %v4541 = vadd.f32 %v4539, %v4540
    %v4542 = vmul.f32 %v4535, %v536
    %v4543 = vmul.f32 %v4541, %v536
    %v4544 = vmul.f32 %v4526, %v4526
    %v4545 = vmul.f32 %v4528, %v4528
    %v4546 = vrot.slane %v4544, 4
    %v4547 = vadd.f32 %v4544, %v4546
    %v4548 = vrot.slane %v4547, 2
    %v4549 = vadd.f32 %v4547, %v4548
    %v4550 = vrot.slane %v4549, 1
    %v4551 = vadd.f32 %v4549, %v4550
    %v4552 = vrot.slane %v4545, 4
    %v4553 = vadd.f32 %v4545, %v4552
    %v4554 = vrot.slane %v4553, 2
    %v4555 = vadd.f32 %v4553, %v4554
    %v4556 = vrot.slane %v4555, 1
    %v4557 = vadd.f32 %v4555, %v4556
    %v4558 = vmul.f32 %v4551, %v536
    %v4559 = vmul.f32 %v4557, %v536
    %v4560 = vmul.f32 %v4542, %v4542
    %v4561 = vmul.f32 %v4543, %v4543
    %v4562 = vsub.f32 %v4558, %v4560
    %v4563 = vsub.f32 %v4559, %v4561
    %v4564 = vld [vmem:[#allocation11 + $0x41] ss:$0 sm:$0xff]
    %v4565 = vld [vmem:[#allocation11 + $0x42] ss:$0 sm:$0xff]
    %v4566 = vadd.f32 %v4562, 1e-05
    %v4567 = vadd.f32 %v4563, 1e-05
    %v4568 = vrsqrt.pop %v4566
    %v4569 = vmul.f32 %v4568, %v4566
    %v4570 = vmul.f32 %v4569, %v4568
    %v4571 = vmul.f32 0.5, %v4570
    %v4572 = vsub.f32 1.5, %v4571
    %v4573 = vmul.f32 %v4568, %v4572
    %vm4574 = vweird.f32 %v4566
    %vm4575 = vweird.f32 %v4568
    %vm4576 = vmor %vm4574, %vm4575
    %v4577 = vsel %vm4576, %v4568, %v4573
    %v4578 = vrsqrt.pop %v4567
    %v4579 = vmul.f32 %v4578, %v4567
    %v4580 = vmul.f32 %v4579, %v4578
    %v4581 = vmul.f32 0.5, %v4580
    %v4582 = vsub.f32 1.5, %v4581
    %v4583 = vmul.f32 %v4578, %v4582
    %vm4584 = vweird.f32 %v4567
    %vm4585 = vweird.f32 %v4578
    %vm4586 = vmor %vm4584, %vm4585
    %v4587 = vsel %vm4586, %v4578, %v4583
    %v4588 = vmul.f32 %v4564, %v4577
    %v4589 = vmul.f32 %v4564, %v4587
    %v4590 = vmul.f32 %v4542, %v4588
    %v4591 = vmul.f32 %v4543, %v4589
    %v4592 = vsub.f32 %v4565, %v4590
    %v4593 = vsub.f32 %v4565, %v4591
    %v4594 = vmul.f32 %v4526, %v4588
    %v4595 = vmul.f32 %v4528, %v4589
    %v4596 = vadd.f32 %v4594, %v4592
    %v4597 = vadd.f32 %v4595, %v4593
    %v4598 = vmax.f32 %v4596, 0.0
    %v4599 = vmax.f32 %v4597, 0.0
    %v4600 = vld [vmem:[#allocation10 + $0x100] sm:$0xf]
    %v4601 = vld [vmem:[#allocation10 + $0x104] sm:$0xf]
    %v4602 = vld [vmem:[#allocation10 + $0x108] sm:$0xf]
    %v4603 = vld [vmem:[#allocation10 + $0x10c] sm:$0xf]
    %v4604 = vld [vmem:[#allocation10 + $0x110] sm:$0xf]
    %v4605 = vld [vmem:[#allocation10 + $0x114] sm:$0xf]
    %v4606 = vld [vmem:[#allocation10 + $0x118] sm:$0xf]
    %v4607 = vld [vmem:[#allocation10 + $0x11c] sm:$0xf]
    %v4608 = vld [vmem:[#allocation10 + $0x120] sm:$0xf]
    %v4609 = vld [vmem:[#allocation10 + $0x124] sm:$0xf]
    %v4610 = vld [vmem:[#allocation10 + $0x128] sm:$0xf]
    %v4611 = vld [vmem:[#allocation10 + $0x12c] sm:$0xf]
    %v4612 = vld [vmem:[#allocation10 + $0x130] sm:$0xf]
    %v4613 = vld [vmem:[#allocation10 + $0x134] sm:$0xf]
    %v4614 = vld [vmem:[#allocation10 + $0x138] sm:$0xf]
    %v4615 = vld [vmem:[#allocation10 + $0x13c] sm:$0xf]
    %v4616 = vpack.c.bf16 %v4599, %v4598
    %v4617 = vld [vmem:[#allocation11 + $0x43] ss:$0 sm:$0xff]
    %v4634 = vunpack.c.l.b16 %v4600
    %v4635 = vunpack.c.l.b16 %v4601
    %v4636 = vunpack.c.l.b16 %v4602
    %v4637 = vunpack.c.l.b16 %v4603
    %v4638 = vunpack.c.l.b16 %v4604
    %v4639 = vunpack.c.l.b16 %v4605
    %v4640 = vunpack.c.l.b16 %v4606
    %v4641 = vunpack.c.l.b16 %v4607
    %v4642 = vunpack.c.l.b16 %v4608
    %v4643 = vunpack.c.l.b16 %v4609
    %v4644 = vunpack.c.l.b16 %v4610
    %v4645 = vunpack.c.l.b16 %v4611
    %v4646 = vunpack.c.l.b16 %v4612
    %v4647 = vunpack.c.l.b16 %v4613
    %v4648 = vunpack.c.l.b16 %v4614
    %v4649 = vunpack.c.l.b16 %v4615
    %v4650 = vpack.c.b16 %v4635, %v4634
    %v4651 = vpack.c.b16 %v4637, %v4636
    %v4652 = vpack.c.b16 %v4639, %v4638
    %v4653 = vpack.c.b16 %v4641, %v4640
    %v4654 = vpack.c.b16 %v4643, %v4642
    %v4655 = vpack.c.b16 %v4645, %v4644
    %v4656 = vpack.c.b16 %v4647, %v4646
    %v4657 = vpack.c.b16 %v4649, %v4648
    %4666 = vmatpush.bf16.msra.mxu0 %v4657
    %4667 = vmatpush.bf16.msra.mxu0 %v4656
    %4668 = vmatpush.bf16.msra.mxu0 %v4655
    %4669 = vmatpush.bf16.msra.mxu0 %v4654
    %4670 = vmatpush.bf16.msra.mxu0 %v4653
    %4671 = vmatpush.bf16.msra.mxu0 %v4652
    %4672 = vmatpush.bf16.msra.mxu0 %v4651
    %4673 = vmatpush.bf16.msra.mxu0 %v4650
    %4674 = vmatmul.bf16.gmra.mxu0 %v4616
    %v4675 = vpop.f32.mrf.mxu0
    %v4676 = vadd.f32 %v4617, %v4675
    %v4677 = vpop.f32.mrf.mxu0
    %v4678 = vadd.f32 %v4617, %v4677
    %4679 = vdwg.mxu0
    %4680 = vst [vmem:[#allocation13] sm:$0xff] %v4676
    %4681 = vst [vmem:[#allocation13 + $0x8] sm:$0xff] %v4678
    // Predicated region
    $region50: #{tpu_custom_call.1} parent=1 // pred_check
      _
    $region51: #{tpu_custom_call.1} parent=1 // pred_check_branch
      %4683 = sbr.rel (0) target = $region53
    $region52: #{tpu_custom_call.1} parent=1 // pred_region
      %4685 = vsyncadd [#allocation4], 0
      %s4686 = sshll.u32 [#allocation13], 4
      %s4687 = int_to_ptr.vmem [resolvable:$true] %s4686
      %s4688 = sshll.u32 %s6, 4
      %s4689 = int_to_ptr.hbm [resolvable:$true] %s4688
      %4694 = dma.vmem_to_hbm [thread:$0]  %s4687, 256, %s4689, [#allocation4], 128, 128, 8
    $region53: #{tpu_custom_call.1} parent=1 // pred_fallthru
      _
    // Predicated region
    $region54: #{tpu_custom_call.1} parent=1 // pred_check
      _
    $region55: #{tpu_custom_call.1} parent=1 // pred_check_branch
      %4696 = sbr.rel (0) target = $region57
    $region56: #{tpu_custom_call.1} parent=1 // pred_region
      %4698 = dma.done [#allocation4], 256
    $region57: #{tpu_custom_call.1} parent=1 // pred_fallthru
      _
    %4699 = vsyncpa [#allocation3], 1
    %4700 = vsyncpa [#allocation6], 1
    %4701 = vsyncpa [#allocation9], 1
    %4702 = vsyncpa [#allocation12], 1
    %4703 = vsyncpa [#allocation4], 1

</llo_original>
